<compile_context>
chip_gen: v6e
topology: v6e:2x2x1
jax: 0.10.0
libtpu: 0.0.40
codegen_flags: <defaults>
</compile_context>

<pallas_src>
import functools
import math

import jax
import jax.numpy as jnp
from jax import lax
from jax.experimental import pallas as pl
from jax.experimental.pallas import tpu as pltpu


PER_LAYER_REFS = 18  # number of weight refs passed per decoder layer


def _row_tile(x2, n):
    """Tile a 2-D (R, C) value n times along rows via broadcast+reshape.

    Rows come in multiples of 8 here, so this is a tile-aligned relabel,
    not an XLU concat chain.
    """
    if n == 1:
        return x2
    r, c = x2.shape
    return jnp.broadcast_to(x2[None], (n, r, c)).reshape(n * r, c)


# ----------------------------------------------------------------------------
# The single fused kernel
# ----------------------------------------------------------------------------
def fused_decoder_kernel(*refs, batch, seq, embed_dim, num_layers,
                         n_heads_sa, n_heads_tb):
    (x_ref, enc_ref, mask_ref, ww_ref, wb_ref, pe_ref, fcw_ref, fcb_ref,
     hm_sa_ref, hm_tb_ref) = refs[:10]
    layer_refs = refs[10:10 + num_layers * PER_LAYER_REFS]
    out_ref = refs[-1]

    B, S, E = batch, seq, embed_dim
    f32 = jnp.float32

    enc = enc_ref[...]                                   # (B*S, E)
    head_mask_sa = hm_sa_ref[...]                        # (Hs*S, E) 0/1
    head_mask_tb = hm_tb_ref[...]                        # (Ht*S, E) 0/1
    # Hoisted: per-head tiled decoder-mask comparison, shared by every layer.
    mask_sa = _row_tile(mask_ref[...], n_heads_sa) == 0.0    # (Hs*S, S) bool

    # ---- word_embedding Linear(1,E), * sqrt(E), + positional embedding ----
    # One broadcast multiply + one add over the whole (B*S, E) slab.
    sqrt_e = math.sqrt(E)
    w_row = ww_ref[...] * sqrt_e                         # (1, E)
    pe_bias = pe_ref[...] + wb_ref[...] * sqrt_e         # (S, E)
    h = x_ref[...] * w_row + _row_tile(pe_bias, B)       # (B*S,1)*(1,E)+(B*S,E)

    def layernorm(v, g, beta):
        mu = jnp.mean(v, axis=-1, keepdims=True)
        var = jnp.mean((v - mu) ** 2, axis=-1, keepdims=True)
        return (v - mu) * lax.rsqrt(var + 1e-5) * g + beta

    def mha(q, k, v, wq, wk, wv, wo, bo, n_heads, head_mask, neg_mask):
        """Multi-head attention on the flat (B*S, E) slab, batched over B."""
        hd = E // n_heads
        scale = 1.0 / math.sqrt(hd)
        qp = jnp.dot(q, wq, preferred_element_type=f32)  # (B*S, E)
        kp = jnp.dot(k, wk, preferred_element_type=f32)
        vp = jnp.dot(v, wv, preferred_element_type=f32)
        qb = qp.reshape(B, S, E)
        kb = kp.reshape(B, S, E)
        vb = vp.reshape(B, S, E)
        # Stack all heads along rows (broadcast, no concat) and zero non-head
        # columns, so contracting over the full E equals per-head QK^T / PV.
        q_rep = (jnp.broadcast_to(qb[:, None], (B, n_heads, S, E))
                 .reshape(B, n_heads * S, E) * head_mask)            # (B,H*S,E)
        # ONE batched QK^T for all batches & heads.
        scores = lax.dot_general(q_rep, kb, (((2,), (2,)), ((0,), (0,))),
                                 preferred_element_type=f32)         # (B,H*S,S)
        if neg_mask is not None:
            # masked_fill BEFORE the 1/sqrt(hd) scaling, matching the torch code
            scores = jnp.where(neg_mask, -1e20, scores)
        scores = scores * scale
        # ONE stacked softmax over all batches & heads (dim=-1 per row).
        m = jnp.max(scores, axis=-1, keepdims=True)
        p = jnp.exp(scores - m)
        p = p * pl.reciprocal(jnp.sum(p, axis=-1, keepdims=True), approx=True)
        # ONE batched PV matmul; head_mask keeps each head's own column block.
        y = lax.dot_general(p, vb, (((2,), (1,)), ((0,), (0,))),
                            preferred_element_type=f32) * head_mask  # (B,H*S,E)
        # Head "concat": heads occupy disjoint column blocks, so summing the H
        # row blocks reproduces the (B, S, E) concat (tile-aligned slab adds).
        ctx = y[:, 0:S]
        for hh in range(1, n_heads):
            ctx = ctx + y[:, hh * S:(hh + 1) * S]
        ctx_flat = ctx.reshape(B * S, E)
        # Single output projection for all heads / all batch rows.
        return jnp.dot(ctx_flat, wo, preferred_element_type=f32) + bo

    for li in range(num_layers):
        lr = layer_refs[li * PER_LAYER_REFS:(li + 1) * PER_LAYER_REFS]
        (sa_wq, sa_wk, sa_wv, sa_wo, sa_bo, n_g, n_b,
         tb_wq, tb_wk, tb_wv, tb_wo, tb_bo, n1_g, n1_b,
         w1, b1, w2, b2) = [r[...] for r in lr]

        # DecoderBlock: masked self-attention over enc_out (n_heads=8).
        attn = mha(enc, enc, enc, sa_wq, sa_wk, sa_wv, sa_wo, sa_bo,
                   n_heads_sa, head_mask_sa, mask_sa)
        value = layernorm(attn + enc, n_g, n_b)          # dropout = identity

        # TransformerBlock: attention(key=enc, query=h, value=value), no mask.
        attn2 = mha(h, enc, value, tb_wq, tb_wk, tb_wv, tb_wo, tb_bo,
                    n_heads_tb, head_mask_tb, None)
        norm1 = layernorm(attn2 + value, n1_g, n1_b)
        ff_h = jnp.maximum(
            jnp.dot(norm1, w1, preferred_element_type=f32) + b1, 0.0)
        ff_o = jnp.dot(ff_h, w2, preferred_element_type=f32) + b2
        h = layernorm(ff_o + norm1, n1_g, n1_b)          # module reuses norm1

    # fc_out (columns zero-padded to 128 lanes) + legacy F.softmax(no dim),
    # which on a 3-D tensor is softmax over dim 0 (the batch dimension).
    logits = jnp.dot(h, fcw_ref[...], preferred_element_type=f32) + fcb_ref[...]
    vp_dim = logits.shape[-1]
    l3 = logits.reshape(B, S, vp_dim)
    m = l3[0]
    for b in range(1, B):
        m = jnp.maximum(m, l3[b])
    e = jnp.exp(l3 - m)
    den = e[0]
    for b in range(1, B):
        den = den + e[b]
    # Single lane-dense store of the whole output slab.
    out_ref[...] = e * pl.reciprocal(den, approx=True)


# ----------------------------------------------------------------------------
# Wrapper: one pallas_call for the whole forward
# ----------------------------------------------------------------------------
def make_head_mask(n_heads, seq, embed_dim):
    """0/1 mask of shape (n_heads*seq, embed_dim): row-block h keeps head h's
    column slice [h*hd, (h+1)*hd)."""
    hd = embed_dim // n_heads
    cols = jnp.arange(embed_dim)[None, :]
    head_of_row = jnp.repeat(jnp.arange(n_heads), seq)[:, None]
    return ((cols // hd) == head_of_row).astype(jnp.float32)


def transformer_decoder_forward(params, x, enc_out, mask):
    B, S = x.shape
    E = params["embed_dim"]
    V = params["fc_w_t"].shape[1]
    Vp = max(128, ((V + 127) // 128) * 128)   # lane-dense output width
    layers = params["layers"]
    num_layers = len(layers)
    n_heads_sa = layers[0]["self_attn"]["n_heads"]
    n_heads_tb = layers[0]["tb_attn"]["n_heads"]

    # Zero-pad fc_out columns to a full lane width; sliced off after the call.
    fcw = jnp.pad(params["fc_w_t"], ((0, 0), (0, Vp - V)))
    fcb = jnp.pad(params["fc_b"], ((0, 0), (0, Vp - V)))

    inputs = [
        x.astype(jnp.float32).reshape(B * S, 1),        # column, broadcast in-kernel
        enc_out.astype(jnp.float32).reshape(B * S, E),  # (B*S, E)
        mask.astype(jnp.float32),                       # (S, S)
        params["word_w_t"], params["word_b"], params["pe"],
        fcw, fcb,
        make_head_mask(n_heads_sa, S, E),
        make_head_mask(n_heads_tb, S, E),
    ]
    for lp in layers:
        sa, tb, ff = lp["self_attn"], lp["tb_attn"], lp["ff"]
        inputs += [sa["wq"], sa["wk"], sa["wv"], sa["wo_t"], sa["bo"],
                   lp["norm_g"], lp["norm_b"],
                   tb["wq"], tb["wk"], tb["wv"], tb["wo_t"], tb["bo"],
                   lp["tb_norm1_g"], lp["tb_norm1_b"],
                   ff["w1_t"], ff["b1"], ff["w2_t"], ff["b2"]]

    kern = functools.partial(
        fused_decoder_kernel, batch=B, seq=S, embed_dim=E,
        num_layers=num_layers, n_heads_sa=n_heads_sa, n_heads_tb=n_heads_tb)

    in_specs = [pl.BlockSpec(memory_space=pltpu.MemorySpace.VMEM)] * len(inputs)

    out = pl.pallas_call(
        kern,
        out_shape=jax.ShapeDtypeStruct((B, S, Vp), jnp.float32),
        in_specs=in_specs,
        out_specs=pl.BlockSpec(memory_space=pltpu.MemorySpace.VMEM),
        # Resident set is tiny here; 32 MiB is <= the default scoped limit on
        # v6e/v7x and safely raises v5e's. If E/V/num_layers grow past VMEM,
        # switch to a grid over layers with per-layer weight BlockSpecs.
        compiler_params=pltpu.CompilerParams(vmem_limit_bytes=32 * 1024 * 1024),
    )(*inputs)
    return out[..., :V]


# ----------------------------------------------------------------------------
# Parameter initialization (deterministic, PyTorch-default-like uniform)
# ----------------------------------------------------------------------------
def _uniform(key, shape, bound):
    return jax.random.uniform(key, shape, jnp.float32, -bound, bound)


def init_linear(key, fan_in, fan_out, bias=True):
    kw, kb = jax.random.split(key)
    bound = 1.0 / math.sqrt(fan_in)
    w = _uniform(kw, (fan_out, fan_in), bound)
    b = _uniform(kb, (fan_out,), bound) if bias else None
    return w, b


def init_mha(key, embed_dim, n_heads):
    dh = embed_dim // n_heads
    kq, kk, kv, ko = jax.random.split(key, 4)
    wq, _ = init_linear(kq, dh, dh, bias=False)
    wk, _ = init_linear(kk, dh, dh, bias=False)
    wv, _ = init_linear(kv, dh, dh, bias=False)
    wo, bo = init_linear(ko, embed_dim, embed_dim)
    eye = jnp.eye(n_heads, dtype=jnp.float32)
    return {
        "wq": jnp.kron(eye, wq.T),    # block-diag expansion of shared head proj
        "wk": jnp.kron(eye, wk.T),
        "wv": jnp.kron(eye, wv.T),
        "wo_t": wo.T,
        "bo": bo.reshape(1, embed_dim),
        "n_heads": n_heads,
        "head_dim": dh,
    }


def init_decoder_block(key, embed_dim, expansion_factor):
    ks = jax.random.split(key, 4)
    hidden = expansion_factor * embed_dim
    w1, b1 = init_linear(ks[2], embed_dim, hidden)
    w2, b2 = init_linear(ks[3], hidden, embed_dim)
    return {
        "self_attn": init_mha(ks[0], embed_dim, 8),   # DecoderBlock: n_heads=8
        "norm_g": jnp.ones((1, embed_dim), jnp.float32),
        "norm_b": jnp.zeros((1, embed_dim), jnp.float32),
        "tb_attn": init_mha(ks[1], embed_dim, 4),     # TransformerBlock: n_heads=4
        "tb_norm1_g": jnp.ones((1, embed_dim), jnp.float32),
        "tb_norm1_b": jnp.zeros((1, embed_dim), jnp.float32),
        "ff": {"w1_t": w1.T, "b1": b1.reshape(1, hidden),
               "w2_t": w2.T, "b2": b2.reshape(1, embed_dim)},
    }


def make_positional_embedding(max_seq_len, embed_dim):
    rows = []
    for pos in range(max_seq_len):
        row = [0.0] * embed_dim
        for i in range(0, embed_dim, 2):
            row[i] = math.sin(pos / 10000 ** (2 * i / embed_dim))
            row[i + 1] = math.cos(pos / 10000 ** (2 * (i + 1) / embed_dim))
        rows.append(row)
    return jnp.array(rows, dtype=jnp.float32)


def init_decoder(key, vocab_size, embed_dim, seq_len, num_layers,
                 expansion_factor):
    ks = jax.random.split(key, num_layers + 2)
    we, be = init_linear(ks[0], 1, embed_dim)
    wf, bf = init_linear(ks[1], embed_dim, vocab_size)
    return {
        "word_w_t": we.T,                     # (1, E)
        "word_b": be.reshape(1, embed_dim),
        "pe": make_positional_embedding(seq_len, embed_dim),
        "layers": [init_decoder_block(ks[2 + i], embed_dim, expansion_factor)
                   for i in range(num_layers)],
        "fc_w_t": wf.T,                       # (E, V)
        "fc_b": bf.reshape(1, vocab_size),
        "embed_dim": embed_dim,
    }


if __name__ == "__main__":
    B, S, E, V = 2, 8, 32, 16
    num_layers = 2
    key = jax.random.PRNGKey(0)
    kp, kx, ke = jax.random.split(key, 3)
    params = init_decoder(kp, V, E, S, num_layers, expansion_factor=2)
    x = jax.random.normal(kx, (B, S), jnp.float32)           # target "vector"
    enc_out = jax.random.normal(ke, (B, S, E), jnp.float32)  # encoder output
    mask = jnp.tril(jnp.ones((S, S), jnp.float32))            # decoder self-attn mask
    out = transformer_decoder_forward(params, x, enc_out, mask)
    jax.block_until_ready(out)
    assert out.shape == (B, S, V) and out.dtype == jnp.float32
    print("KERNEL_OK")
</pallas_src>

<mosaic_0001>
module attributes {stable_mosaic.version = 11 : i64} {
  func.func @fused_decoder_kernel(%arg0: memref<16x1xf32, #tpu.memory_space<vmem>>, %arg1: memref<16x32xf32, #tpu.memory_space<vmem>>, %arg2: memref<8x8xf32, #tpu.memory_space<vmem>>, %arg3: memref<1x32xf32, #tpu.memory_space<vmem>>, %arg4: memref<1x32xf32, #tpu.memory_space<vmem>>, %arg5: memref<8x32xf32, #tpu.memory_space<vmem>>, %arg6: memref<32x128xf32, #tpu.memory_space<vmem>>, %arg7: memref<1x128xf32, #tpu.memory_space<vmem>>, %arg8: memref<64x32xf32, #tpu.memory_space<vmem>>, %arg9: memref<32x32xf32, #tpu.memory_space<vmem>>, %arg10: memref<32x32xf32, #tpu.memory_space<vmem>>, %arg11: memref<32x32xf32, #tpu.memory_space<vmem>>, %arg12: memref<32x32xf32, #tpu.memory_space<vmem>>, %arg13: memref<32x32xf32, #tpu.memory_space<vmem>>, %arg14: memref<1x32xf32, #tpu.memory_space<vmem>>, %arg15: memref<1x32xf32, #tpu.memory_space<vmem>>, %arg16: memref<1x32xf32, #tpu.memory_space<vmem>>, %arg17: memref<32x32xf32, #tpu.memory_space<vmem>>, %arg18: memref<32x32xf32, #tpu.memory_space<vmem>>, %arg19: memref<32x32xf32, #tpu.memory_space<vmem>>, %arg20: memref<32x32xf32, #tpu.memory_space<vmem>>, %arg21: memref<1x32xf32, #tpu.memory_space<vmem>>, %arg22: memref<1x32xf32, #tpu.memory_space<vmem>>, %arg23: memref<1x32xf32, #tpu.memory_space<vmem>>, %arg24: memref<32x64xf32, #tpu.memory_space<vmem>>, %arg25: memref<1x64xf32, #tpu.memory_space<vmem>>, %arg26: memref<64x32xf32, #tpu.memory_space<vmem>>, %arg27: memref<1x32xf32, #tpu.memory_space<vmem>>, %arg28: memref<32x32xf32, #tpu.memory_space<vmem>>, %arg29: memref<32x32xf32, #tpu.memory_space<vmem>>, %arg30: memref<32x32xf32, #tpu.memory_space<vmem>>, %arg31: memref<32x32xf32, #tpu.memory_space<vmem>>, %arg32: memref<1x32xf32, #tpu.memory_space<vmem>>, %arg33: memref<1x32xf32, #tpu.memory_space<vmem>>, %arg34: memref<1x32xf32, #tpu.memory_space<vmem>>, %arg35: memref<32x32xf32, #tpu.memory_space<vmem>>, %arg36: memref<32x32xf32, #tpu.memory_space<vmem>>, %arg37: memref<32x32xf32, #tpu.memory_space<vmem>>, %arg38: memref<32x32xf32, #tpu.memory_space<vmem>>, %arg39: memref<1x32xf32, #tpu.memory_space<vmem>>, %arg40: memref<1x32xf32, #tpu.memory_space<vmem>>, %arg41: memref<1x32xf32, #tpu.memory_space<vmem>>, %arg42: memref<32x64xf32, #tpu.memory_space<vmem>>, %arg43: memref<1x64xf32, #tpu.memory_space<vmem>>, %arg44: memref<64x32xf32, #tpu.memory_space<vmem>>, %arg45: memref<1x32xf32, #tpu.memory_space<vmem>>, %arg46: memref<2x8x128xf32, #tpu.memory_space<vmem>>) attributes {dimension_semantics = [], scalar_prefetch = 0 : i64, scratch_operands = 0 : i64, tpu.core_type = #tpu.core_type<tc>} {
    %c0 = arith.constant 0 : index
    %c0_0 = arith.constant 0 : index
    %0 = vector.load %arg1[%c0, %c0_0] : memref<16x32xf32, #tpu.memory_space<vmem>>, vector<16x32xf32>
    %c0_1 = arith.constant 0 : index
    %c0_2 = arith.constant 0 : index
    %1 = vector.load %arg8[%c0_1, %c0_2] : memref<64x32xf32, #tpu.memory_space<vmem>>, vector<64x32xf32>
    %c0_3 = arith.constant 0 : index
    %c0_4 = arith.constant 0 : index
    %2 = vector.load %arg9[%c0_3, %c0_4] : memref<32x32xf32, #tpu.memory_space<vmem>>, vector<32x32xf32>
    %c0_5 = arith.constant 0 : index
    %c0_6 = arith.constant 0 : index
    %3 = vector.load %arg2[%c0_5, %c0_6] : memref<8x8xf32, #tpu.memory_space<vmem>>, vector<8x8xf32>
    %4 = vector.shape_cast %3 : vector<8x8xf32> to vector<1x8x8xf32>
    %5 = vector.shape_cast %4 : vector<1x8x8xf32> to vector<1x8x8xf32>
    %6 = vector.broadcast %5 : vector<1x8x8xf32> to vector<8x8x8xf32>
    %7 = vector.shape_cast %6 : vector<8x8x8xf32> to vector<64x8xf32>
    %cst = arith.constant 0.000000e+00 : f32
    %8 = vector.broadcast %cst : f32 to vector<64x8xf32>
    %9 = arith.cmpf oeq, %7, %8 : vector<64x8xf32>
    %c0_7 = arith.constant 0 : index
    %c0_8 = arith.constant 0 : index
    %10 = vector.load %arg3[%c0_7, %c0_8] : memref<1x32xf32, #tpu.memory_space<vmem>>, vector<1x32xf32>
    %cst_9 = arith.constant 5.65685415 : f32
    %11 = vector.broadcast %cst_9 : f32 to vector<1x32xf32>
    %12 = arith.mulf %10, %11 : vector<1x32xf32>
    %c0_10 = arith.constant 0 : index
    %c0_11 = arith.constant 0 : index
    %13 = vector.load %arg5[%c0_10, %c0_11] : memref<8x32xf32, #tpu.memory_space<vmem>>, vector<8x32xf32>
    %c0_12 = arith.constant 0 : index
    %c0_13 = arith.constant 0 : index
    %14 = vector.load %arg4[%c0_12, %c0_13] : memref<1x32xf32, #tpu.memory_space<vmem>>, vector<1x32xf32>
    %cst_14 = arith.constant 5.65685415 : f32
    %15 = vector.broadcast %cst_14 : f32 to vector<1x32xf32>
    %16 = arith.mulf %14, %15 : vector<1x32xf32>
    %17 = vector.broadcast %16 : vector<1x32xf32> to vector<8x32xf32>
    %18 = arith.addf %13, %17 : vector<8x32xf32>
    %c0_15 = arith.constant 0 : index
    %c0_16 = arith.constant 0 : index
    %19 = vector.load %arg0[%c0_15, %c0_16] : memref<16x1xf32, #tpu.memory_space<vmem>>, vector<16x1xf32>
    %20 = vector.broadcast %19 : vector<16x1xf32> to vector<16x32xf32>
    %21 = vector.broadcast %12 : vector<1x32xf32> to vector<16x32xf32>
    %22 = arith.mulf %20, %21 : vector<16x32xf32>
    %23 = vector.shape_cast %18 : vector<8x32xf32> to vector<1x8x32xf32>
    %24 = vector.shape_cast %23 : vector<1x8x32xf32> to vector<1x8x32xf32>
    %25 = vector.broadcast %24 : vector<1x8x32xf32> to vector<2x8x32xf32>
    %26 = vector.shape_cast %25 : vector<2x8x32xf32> to vector<16x32xf32>
    %27 = arith.addf %22, %26 : vector<16x32xf32>
    %c0_17 = arith.constant 0 : index
    %c0_18 = arith.constant 0 : index
    %28 = vector.load %arg10[%c0_17, %c0_18] : memref<32x32xf32, #tpu.memory_space<vmem>>, vector<32x32xf32>
    %c0_19 = arith.constant 0 : index
    %c0_20 = arith.constant 0 : index
    %29 = vector.load %arg11[%c0_19, %c0_20] : memref<32x32xf32, #tpu.memory_space<vmem>>, vector<32x32xf32>
    %c0_21 = arith.constant 0 : index
    %c0_22 = arith.constant 0 : index
    %30 = vector.load %arg12[%c0_21, %c0_22] : memref<32x32xf32, #tpu.memory_space<vmem>>, vector<32x32xf32>
    %c0_23 = arith.constant 0 : index
    %c0_24 = arith.constant 0 : index
    %31 = vector.load %arg13[%c0_23, %c0_24] : memref<32x32xf32, #tpu.memory_space<vmem>>, vector<32x32xf32>
    %c0_25 = arith.constant 0 : index
    %c0_26 = arith.constant 0 : index
    %32 = vector.load %arg14[%c0_25, %c0_26] : memref<1x32xf32, #tpu.memory_space<vmem>>, vector<1x32xf32>
    %c0_27 = arith.constant 0 : index
    %c0_28 = arith.constant 0 : index
    %33 = vector.load %arg15[%c0_27, %c0_28] : memref<1x32xf32, #tpu.memory_space<vmem>>, vector<1x32xf32>
    %c0_29 = arith.constant 0 : index
    %c0_30 = arith.constant 0 : index
    %34 = vector.load %arg16[%c0_29, %c0_30] : memref<1x32xf32, #tpu.memory_space<vmem>>, vector<1x32xf32>
    %c0_31 = arith.constant 0 : index
    %c0_32 = arith.constant 0 : index
    %35 = vector.load %arg17[%c0_31, %c0_32] : memref<32x32xf32, #tpu.memory_space<vmem>>, vector<32x32xf32>
    %c0_33 = arith.constant 0 : index
    %c0_34 = arith.constant 0 : index
    %36 = vector.load %arg18[%c0_33, %c0_34] : memref<32x32xf32, #tpu.memory_space<vmem>>, vector<32x32xf32>
    %c0_35 = arith.constant 0 : index
    %c0_36 = arith.constant 0 : index
    %37 = vector.load %arg19[%c0_35, %c0_36] : memref<32x32xf32, #tpu.memory_space<vmem>>, vector<32x32xf32>
    %c0_37 = arith.constant 0 : index
    %c0_38 = arith.constant 0 : index
    %38 = vector.load %arg20[%c0_37, %c0_38] : memref<32x32xf32, #tpu.memory_space<vmem>>, vector<32x32xf32>
    %c0_39 = arith.constant 0 : index
    %c0_40 = arith.constant 0 : index
    %39 = vector.load %arg21[%c0_39, %c0_40] : memref<1x32xf32, #tpu.memory_space<vmem>>, vector<1x32xf32>
    %c0_41 = arith.constant 0 : index
    %c0_42 = arith.constant 0 : index
    %40 = vector.load %arg22[%c0_41, %c0_42] : memref<1x32xf32, #tpu.memory_space<vmem>>, vector<1x32xf32>
    %c0_43 = arith.constant 0 : index
    %c0_44 = arith.constant 0 : index
    %41 = vector.load %arg23[%c0_43, %c0_44] : memref<1x32xf32, #tpu.memory_space<vmem>>, vector<1x32xf32>
    %c0_45 = arith.constant 0 : index
    %c0_46 = arith.constant 0 : index
    %42 = vector.load %arg24[%c0_45, %c0_46] : memref<32x64xf32, #tpu.memory_space<vmem>>, vector<32x64xf32>
    %c0_47 = arith.constant 0 : index
    %c0_48 = arith.constant 0 : index
    %43 = vector.load %arg25[%c0_47, %c0_48] : memref<1x64xf32, #tpu.memory_space<vmem>>, vector<1x64xf32>
    %c0_49 = arith.constant 0 : index
    %c0_50 = arith.constant 0 : index
    %44 = vector.load %arg26[%c0_49, %c0_50] : memref<64x32xf32, #tpu.memory_space<vmem>>, vector<64x32xf32>
    %c0_51 = arith.constant 0 : index
    %c0_52 = arith.constant 0 : index
    %45 = vector.load %arg27[%c0_51, %c0_52] : memref<1x32xf32, #tpu.memory_space<vmem>>, vector<1x32xf32>
    %cst_53 = arith.constant dense<0.000000e+00> : vector<16x32xf32>
    %46 = tpu.matmul %0, %28, %cst_53 {dimension_numbers = #tpu.dot_dimension_numbers<[1], [0], [0], [1], [0, 0, 1, 1], [], []>} : vector<16x32xf32>, vector<32x32xf32>, vector<16x32xf32> -> vector<16x32xf32>
    %cst_54 = arith.constant dense<0.000000e+00> : vector<16x32xf32>
    %47 = tpu.matmul %0, %29, %cst_54 {dimension_numbers = #tpu.dot_dimension_numbers<[1], [0], [0], [1], [0, 0, 1, 1], [], []>} : vector<16x32xf32>, vector<32x32xf32>, vector<16x32xf32> -> vector<16x32xf32>
    %cst_55 = arith.constant dense<0.000000e+00> : vector<16x32xf32>
    %48 = tpu.matmul %0, %30, %cst_55 {dimension_numbers = #tpu.dot_dimension_numbers<[1], [0], [0], [1], [0, 0, 1, 1], [], []>} : vector<16x32xf32>, vector<32x32xf32>, vector<16x32xf32> -> vector<16x32xf32>
    %49 = vector.shape_cast %46 : vector<16x32xf32> to vector<2x8x32xf32>
    %50 = vector.shape_cast %47 : vector<16x32xf32> to vector<2x8x32xf32>
    %51 = vector.shape_cast %48 : vector<16x32xf32> to vector<2x8x32xf32>
    %52 = vector.shape_cast %49 : vector<2x8x32xf32> to vector<2x1x8x32xf32>
    %53 = vector.shape_cast %52 : vector<2x1x8x32xf32> to vector<2x1x8x32xf32>
    %54 = vector.broadcast %53 : vector<2x1x8x32xf32> to vector<2x8x8x32xf32>
    %55 = vector.shape_cast %54 : vector<2x8x8x32xf32> to vector<2x64x32xf32>
    %56 = vector.shape_cast %1 : vector<64x32xf32> to vector<1x64x32xf32>
    %57 = vector.broadcast %56 : vector<1x64x32xf32> to vector<2x64x32xf32>
    %58 = arith.mulf %55, %57 : vector<2x64x32xf32>
    %cst_56 = arith.constant dense<0.000000e+00> : vector<2x64x8xf32>
    %59 = tpu.matmul %58, %50, %cst_56 {dimension_numbers = #tpu.dot_dimension_numbers<[2], [2], [1], [1], [0, 0, 0, 1, 1, 1], [0], [0]>} : vector<2x64x32xf32>, vector<2x8x32xf32>, vector<2x64x8xf32> -> vector<2x64x8xf32>
    %cst_57 = arith.constant -1.000000e+20 : f32
    %60 = vector.shape_cast %9 : vector<64x8xi1> to vector<1x64x8xi1>
    %61 = vector.broadcast %60 : vector<1x64x8xi1> to vector<2x64x8xi1>
    %62 = vector.broadcast %cst_57 : f32 to vector<2x64x8xf32>
    %63 = arith.select %61, %62, %59 : vector<2x64x8xi1>, vector<2x64x8xf32>
    %cst_58 = arith.constant 5.000000e-01 : f32
    %64 = vector.broadcast %cst_58 : f32 to vector<2x64x8xf32>
    %65 = arith.mulf %63, %64 : vector<2x64x8xf32>
    %cst_59 = arith.constant dense<0xFF800000> : vector<2x64xf32>
    %66 = vector.multi_reduction <maximumf>, %65, %cst_59 [2] : vector<2x64x8xf32> to vector<2x64xf32>
    %67 = vector.shape_cast %66 : vector<2x64xf32> to vector<2x64x1xf32>
    %68 = vector.broadcast %67 : vector<2x64x1xf32> to vector<2x64x8xf32>
    %69 = arith.subf %65, %68 : vector<2x64x8xf32>
    %70 = math.exp %69 : vector<2x64x8xf32>
    %cst_60 = arith.constant dense<0.000000e+00> : vector<2x64xf32>
    %71 = vector.multi_reduction <add>, %70, %cst_60 [2] : vector<2x64x8xf32> to vector<2x64xf32>
    %72 = vector.shape_cast %71 : vector<2x64xf32> to vector<2x64x1xf32>
    %73 = tpu.reciprocal %72 {approx = true} : vector<2x64x1xf32> -> vector<2x64x1xf32>
    %74 = vector.broadcast %73 : vector<2x64x1xf32> to vector<2x64x8xf32>
    %75 = arith.mulf %70, %74 : vector<2x64x8xf32>
    %cst_61 = arith.constant dense<0.000000e+00> : vector<2x64x32xf32>
    %76 = tpu.matmul %75, %51, %cst_61 {dimension_numbers = #tpu.dot_dimension_numbers<[2], [1], [1], [2], [0, 0, 0, 1, 1, 2], [0], [0]>} : vector<2x64x8xf32>, vector<2x8x32xf32>, vector<2x64x32xf32> -> vector<2x64x32xf32>
    %77 = vector.shape_cast %1 : vector<64x32xf32> to vector<1x64x32xf32>
    %78 = vector.broadcast %77 : vector<1x64x32xf32> to vector<2x64x32xf32>
    %79 = arith.mulf %76, %78 : vector<2x64x32xf32>
    %80 = vector.extract_strided_slice %79 {offsets = [0, 0, 0], sizes = [2, 8, 32], strides = [1, 1, 1]} : vector<2x64x32xf32> to vector<2x8x32xf32>
    %81 = vector.extract_strided_slice %79 {offsets = [0, 8, 0], sizes = [2, 8, 32], strides = [1, 1, 1]} : vector<2x64x32xf32> to vector<2x8x32xf32>
    %82 = arith.addf %80, %81 : vector<2x8x32xf32>
    %83 = vector.extract_strided_slice %79 {offsets = [0, 16, 0], sizes = [2, 8, 32], strides = [1, 1, 1]} : vector<2x64x32xf32> to vector<2x8x32xf32>
    %84 = arith.addf %82, %83 : vector<2x8x32xf32>
    %85 = vector.extract_strided_slice %79 {offsets = [0, 24, 0], sizes = [2, 8, 32], strides = [1, 1, 1]} : vector<2x64x32xf32> to vector<2x8x32xf32>
    %86 = arith.addf %84, %85 : vector<2x8x32xf32>
    %87 = vector.extract_strided_slice %79 {offsets = [0, 32, 0], sizes = [2, 8, 32], strides = [1, 1, 1]} : vector<2x64x32xf32> to vector<2x8x32xf32>
    %88 = arith.addf %86, %87 : vector<2x8x32xf32>
    %89 = vector.extract_strided_slice %79 {offsets = [0, 40, 0], sizes = [2, 8, 32], strides = [1, 1, 1]} : vector<2x64x32xf32> to vector<2x8x32xf32>
    %90 = arith.addf %88, %89 : vector<2x8x32xf32>
    %91 = vector.extract_strided_slice %79 {offsets = [0, 48, 0], sizes = [2, 8, 32], strides = [1, 1, 1]} : vector<2x64x32xf32> to vector<2x8x32xf32>
    %92 = arith.addf %90, %91 : vector<2x8x32xf32>
    %93 = vector.extract_strided_slice %79 {offsets = [0, 56, 0], sizes = [2, 8, 32], strides = [1, 1, 1]} : vector<2x64x32xf32> to vector<2x8x32xf32>
    %94 = arith.addf %92, %93 : vector<2x8x32xf32>
    %95 = vector.shape_cast %94 : vector<2x8x32xf32> to vector<16x32xf32>
    %cst_62 = arith.constant dense<0.000000e+00> : vector<16x32xf32>
    %96 = tpu.matmul %95, %31, %cst_62 {dimension_numbers = #tpu.dot_dimension_numbers<[1], [0], [0], [1], [0, 0, 1, 1], [], []>} : vector<16x32xf32>, vector<32x32xf32>, vector<16x32xf32> -> vector<16x32xf32>
    %97 = vector.broadcast %32 : vector<1x32xf32> to vector<16x32xf32>
    %98 = arith.addf %96, %97 : vector<16x32xf32>
    %99 = arith.addf %98, %0 : vector<16x32xf32>
    %cst_63 = arith.constant dense<0.000000e+00> : vector<16xf32>
    %100 = vector.multi_reduction <add>, %99, %cst_63 [1] : vector<16x32xf32> to vector<16xf32>
    %101 = vector.shape_cast %100 : vector<16xf32> to vector<16x1xf32>
    %cst_64 = arith.constant 3.200000e+01 : f32
    %102 = vector.broadcast %cst_64 : f32 to vector<16x1xf32>
    %103 = arith.divf %101, %102 : vector<16x1xf32>
    %104 = vector.broadcast %103 : vector<16x1xf32> to vector<16x32xf32>
    %105 = arith.subf %99, %104 : vector<16x32xf32>
    %106 = arith.mulf %105, %105 : vector<16x32xf32>
    %cst_65 = arith.constant dense<0.000000e+00> : vector<16xf32>
    %107 = vector.multi_reduction <add>, %106, %cst_65 [1] : vector<16x32xf32> to vector<16xf32>
    %108 = vector.shape_cast %107 : vector<16xf32> to vector<16x1xf32>
    %cst_66 = arith.constant 3.200000e+01 : f32
    %109 = vector.broadcast %cst_66 : f32 to vector<16x1xf32>
    %110 = arith.divf %108, %109 : vector<16x1xf32>
    %111 = vector.broadcast %103 : vector<16x1xf32> to vector<16x32xf32>
    %112 = arith.subf %99, %111 : vector<16x32xf32>
    %cst_67 = arith.constant 9.99999974E-6 : f32
    %113 = vector.broadcast %cst_67 : f32 to vector<16x1xf32>
    %114 = arith.addf %110, %113 : vector<16x1xf32>
    %115 = math.rsqrt %114 : vector<16x1xf32>
    %116 = vector.broadcast %115 : vector<16x1xf32> to vector<16x32xf32>
    %117 = arith.mulf %112, %116 : vector<16x32xf32>
    %118 = vector.broadcast %33 : vector<1x32xf32> to vector<16x32xf32>
    %119 = arith.mulf %117, %118 : vector<16x32xf32>
    %120 = vector.broadcast %34 : vector<1x32xf32> to vector<16x32xf32>
    %121 = arith.addf %119, %120 : vector<16x32xf32>
    %cst_68 = arith.constant dense<0.000000e+00> : vector<16x32xf32>
    %122 = tpu.matmul %27, %35, %cst_68 {dimension_numbers = #tpu.dot_dimension_numbers<[1], [0], [0], [1], [0, 0, 1, 1], [], []>} : vector<16x32xf32>, vector<32x32xf32>, vector<16x32xf32> -> vector<16x32xf32>
    %cst_69 = arith.constant dense<0.000000e+00> : vector<16x32xf32>
    %123 = tpu.matmul %0, %36, %cst_69 {dimension_numbers = #tpu.dot_dimension_numbers<[1], [0], [0], [1], [0, 0, 1, 1], [], []>} : vector<16x32xf32>, vector<32x32xf32>, vector<16x32xf32> -> vector<16x32xf32>
    %cst_70 = arith.constant dense<0.000000e+00> : vector<16x32xf32>
    %124 = tpu.matmul %121, %37, %cst_70 {dimension_numbers = #tpu.dot_dimension_numbers<[1], [0], [0], [1], [0, 0, 1, 1], [], []>} : vector<16x32xf32>, vector<32x32xf32>, vector<16x32xf32> -> vector<16x32xf32>
    %125 = vector.shape_cast %122 : vector<16x32xf32> to vector<2x8x32xf32>
    %126 = vector.shape_cast %123 : vector<16x32xf32> to vector<2x8x32xf32>
    %127 = vector.shape_cast %124 : vector<16x32xf32> to vector<2x8x32xf32>
    %128 = vector.shape_cast %125 : vector<2x8x32xf32> to vector<2x1x8x32xf32>
    %129 = vector.shape_cast %128 : vector<2x1x8x32xf32> to vector<2x1x8x32xf32>
    %130 = vector.broadcast %129 : vector<2x1x8x32xf32> to vector<2x4x8x32xf32>
    %131 = vector.shape_cast %130 : vector<2x4x8x32xf32> to vector<2x32x32xf32>
    %132 = vector.shape_cast %2 : vector<32x32xf32> to vector<1x32x32xf32>
    %133 = vector.broadcast %132 : vector<1x32x32xf32> to vector<2x32x32xf32>
    %134 = arith.mulf %131, %133 : vector<2x32x32xf32>
    %cst_71 = arith.constant dense<0.000000e+00> : vector<2x32x8xf32>
    %135 = tpu.matmul %134, %126, %cst_71 {dimension_numbers = #tpu.dot_dimension_numbers<[2], [2], [1], [1], [0, 0, 0, 1, 1, 1], [0], [0]>} : vector<2x32x32xf32>, vector<2x8x32xf32>, vector<2x32x8xf32> -> vector<2x32x8xf32>
    %cst_72 = arith.constant 0.353553385 : f32
    %136 = vector.broadcast %cst_72 : f32 to vector<2x32x8xf32>
    %137 = arith.mulf %135, %136 : vector<2x32x8xf32>
    %cst_73 = arith.constant dense<0xFF800000> : vector<2x32xf32>
    %138 = vector.multi_reduction <maximumf>, %137, %cst_73 [2] : vector<2x32x8xf32> to vector<2x32xf32>
    %139 = vector.shape_cast %138 : vector<2x32xf32> to vector<2x32x1xf32>
    %140 = vector.broadcast %139 : vector<2x32x1xf32> to vector<2x32x8xf32>
    %141 = arith.subf %137, %140 : vector<2x32x8xf32>
    %142 = math.exp %141 : vector<2x32x8xf32>
    %cst_74 = arith.constant dense<0.000000e+00> : vector<2x32xf32>
    %143 = vector.multi_reduction <add>, %142, %cst_74 [2] : vector<2x32x8xf32> to vector<2x32xf32>
    %144 = vector.shape_cast %143 : vector<2x32xf32> to vector<2x32x1xf32>
    %145 = tpu.reciprocal %144 {approx = true} : vector<2x32x1xf32> -> vector<2x32x1xf32>
    %146 = vector.broadcast %145 : vector<2x32x1xf32> to vector<2x32x8xf32>
    %147 = arith.mulf %142, %146 : vector<2x32x8xf32>
    %cst_75 = arith.constant dense<0.000000e+00> : vector<2x32x32xf32>
    %148 = tpu.matmul %147, %127, %cst_75 {dimension_numbers = #tpu.dot_dimension_numbers<[2], [1], [1], [2], [0, 0, 0, 1, 1, 2], [0], [0]>} : vector<2x32x8xf32>, vector<2x8x32xf32>, vector<2x32x32xf32> -> vector<2x32x32xf32>
    %149 = vector.shape_cast %2 : vector<32x32xf32> to vector<1x32x32xf32>
    %150 = vector.broadcast %149 : vector<1x32x32xf32> to vector<2x32x32xf32>
    %151 = arith.mulf %148, %150 : vector<2x32x32xf32>
    %152 = vector.extract_strided_slice %151 {offsets = [0, 0, 0], sizes = [2, 8, 32], strides = [1, 1, 1]} : vector<2x32x32xf32> to vector<2x8x32xf32>
    %153 = vector.extract_strided_slice %151 {offsets = [0, 8, 0], sizes = [2, 8, 32], strides = [1, 1, 1]} : vector<2x32x32xf32> to vector<2x8x32xf32>
    %154 = arith.addf %152, %153 : vector<2x8x32xf32>
    %155 = vector.extract_strided_slice %151 {offsets = [0, 16, 0], sizes = [2, 8, 32], strides = [1, 1, 1]} : vector<2x32x32xf32> to vector<2x8x32xf32>
    %156 = arith.addf %154, %155 : vector<2x8x32xf32>
    %157 = vector.extract_strided_slice %151 {offsets = [0, 24, 0], sizes = [2, 8, 32], strides = [1, 1, 1]} : vector<2x32x32xf32> to vector<2x8x32xf32>
    %158 = arith.addf %156, %157 : vector<2x8x32xf32>
    %159 = vector.shape_cast %158 : vector<2x8x32xf32> to vector<16x32xf32>
    %cst_76 = arith.constant dense<0.000000e+00> : vector<16x32xf32>
    %160 = tpu.matmul %159, %38, %cst_76 {dimension_numbers = #tpu.dot_dimension_numbers<[1], [0], [0], [1], [0, 0, 1, 1], [], []>} : vector<16x32xf32>, vector<32x32xf32>, vector<16x32xf32> -> vector<16x32xf32>
    %161 = vector.broadcast %39 : vector<1x32xf32> to vector<16x32xf32>
    %162 = arith.addf %160, %161 : vector<16x32xf32>
    %163 = arith.addf %162, %121 : vector<16x32xf32>
    %cst_77 = arith.constant dense<0.000000e+00> : vector<16xf32>
    %164 = vector.multi_reduction <add>, %163, %cst_77 [1] : vector<16x32xf32> to vector<16xf32>
    %165 = vector.shape_cast %164 : vector<16xf32> to vector<16x1xf32>
    %cst_78 = arith.constant 3.200000e+01 : f32
    %166 = vector.broadcast %cst_78 : f32 to vector<16x1xf32>
    %167 = arith.divf %165, %166 : vector<16x1xf32>
    %168 = vector.broadcast %167 : vector<16x1xf32> to vector<16x32xf32>
    %169 = arith.subf %163, %168 : vector<16x32xf32>
    %170 = arith.mulf %169, %169 : vector<16x32xf32>
    %cst_79 = arith.constant dense<0.000000e+00> : vector<16xf32>
    %171 = vector.multi_reduction <add>, %170, %cst_79 [1] : vector<16x32xf32> to vector<16xf32>
    %172 = vector.shape_cast %171 : vector<16xf32> to vector<16x1xf32>
    %cst_80 = arith.constant 3.200000e+01 : f32
    %173 = vector.broadcast %cst_80 : f32 to vector<16x1xf32>
    %174 = arith.divf %172, %173 : vector<16x1xf32>
    %175 = vector.broadcast %167 : vector<16x1xf32> to vector<16x32xf32>
    %176 = arith.subf %163, %175 : vector<16x32xf32>
    %cst_81 = arith.constant 9.99999974E-6 : f32
    %177 = vector.broadcast %cst_81 : f32 to vector<16x1xf32>
    %178 = arith.addf %174, %177 : vector<16x1xf32>
    %179 = math.rsqrt %178 : vector<16x1xf32>
    %180 = vector.broadcast %179 : vector<16x1xf32> to vector<16x32xf32>
    %181 = arith.mulf %176, %180 : vector<16x32xf32>
    %182 = vector.broadcast %40 : vector<1x32xf32> to vector<16x32xf32>
    %183 = arith.mulf %181, %182 : vector<16x32xf32>
    %184 = vector.broadcast %41 : vector<1x32xf32> to vector<16x32xf32>
    %185 = arith.addf %183, %184 : vector<16x32xf32>
    %cst_82 = arith.constant dense<0.000000e+00> : vector<16x64xf32>
    %186 = tpu.matmul %185, %42, %cst_82 {dimension_numbers = #tpu.dot_dimension_numbers<[1], [0], [0], [1], [0, 0, 1, 1], [], []>} : vector<16x32xf32>, vector<32x64xf32>, vector<16x64xf32> -> vector<16x64xf32>
    %187 = vector.broadcast %43 : vector<1x64xf32> to vector<16x64xf32>
    %188 = arith.addf %186, %187 : vector<16x64xf32>
    %cst_83 = arith.constant 0.000000e+00 : f32
    %189 = vector.broadcast %cst_83 : f32 to vector<16x64xf32>
    %190 = arith.maximumf %188, %189 : vector<16x64xf32>
    %cst_84 = arith.constant dense<0.000000e+00> : vector<16x32xf32>
    %191 = tpu.matmul %190, %44, %cst_84 {dimension_numbers = #tpu.dot_dimension_numbers<[1], [0], [0], [1], [0, 0, 1, 1], [], []>} : vector<16x64xf32>, vector<64x32xf32>, vector<16x32xf32> -> vector<16x32xf32>
    %192 = vector.broadcast %45 : vector<1x32xf32> to vector<16x32xf32>
    %193 = arith.addf %191, %192 : vector<16x32xf32>
    %194 = arith.addf %193, %185 : vector<16x32xf32>
    %cst_85 = arith.constant dense<0.000000e+00> : vector<16xf32>
    %195 = vector.multi_reduction <add>, %194, %cst_85 [1] : vector<16x32xf32> to vector<16xf32>
    %196 = vector.shape_cast %195 : vector<16xf32> to vector<16x1xf32>
    %cst_86 = arith.constant 3.200000e+01 : f32
    %197 = vector.broadcast %cst_86 : f32 to vector<16x1xf32>
    %198 = arith.divf %196, %197 : vector<16x1xf32>
    %199 = vector.broadcast %198 : vector<16x1xf32> to vector<16x32xf32>
    %200 = arith.subf %194, %199 : vector<16x32xf32>
    %201 = arith.mulf %200, %200 : vector<16x32xf32>
    %cst_87 = arith.constant dense<0.000000e+00> : vector<16xf32>
    %202 = vector.multi_reduction <add>, %201, %cst_87 [1] : vector<16x32xf32> to vector<16xf32>
    %203 = vector.shape_cast %202 : vector<16xf32> to vector<16x1xf32>
    %cst_88 = arith.constant 3.200000e+01 : f32
    %204 = vector.broadcast %cst_88 : f32 to vector<16x1xf32>
    %205 = arith.divf %203, %204 : vector<16x1xf32>
    %206 = vector.broadcast %198 : vector<16x1xf32> to vector<16x32xf32>
    %207 = arith.subf %194, %206 : vector<16x32xf32>
    %cst_89 = arith.constant 9.99999974E-6 : f32
    %208 = vector.broadcast %cst_89 : f32 to vector<16x1xf32>
    %209 = arith.addf %205, %208 : vector<16x1xf32>
    %210 = math.rsqrt %209 : vector<16x1xf32>
    %211 = vector.broadcast %210 : vector<16x1xf32> to vector<16x32xf32>
    %212 = arith.mulf %207, %211 : vector<16x32xf32>
    %213 = vector.broadcast %40 : vector<1x32xf32> to vector<16x32xf32>
    %214 = arith.mulf %212, %213 : vector<16x32xf32>
    %215 = vector.broadcast %41 : vector<1x32xf32> to vector<16x32xf32>
    %216 = arith.addf %214, %215 : vector<16x32xf32>
    %c0_90 = arith.constant 0 : index
    %c0_91 = arith.constant 0 : index
    %217 = vector.load %arg28[%c0_90, %c0_91] : memref<32x32xf32, #tpu.memory_space<vmem>>, vector<32x32xf32>
    %c0_92 = arith.constant 0 : index
    %c0_93 = arith.constant 0 : index
    %218 = vector.load %arg29[%c0_92, %c0_93] : memref<32x32xf32, #tpu.memory_space<vmem>>, vector<32x32xf32>
    %c0_94 = arith.constant 0 : index
    %c0_95 = arith.constant 0 : index
    %219 = vector.load %arg30[%c0_94, %c0_95] : memref<32x32xf32, #tpu.memory_space<vmem>>, vector<32x32xf32>
    %c0_96 = arith.constant 0 : index
    %c0_97 = arith.constant 0 : index
    %220 = vector.load %arg31[%c0_96, %c0_97] : memref<32x32xf32, #tpu.memory_space<vmem>>, vector<32x32xf32>
    %c0_98 = arith.constant 0 : index
    %c0_99 = arith.constant 0 : index
    %221 = vector.load %arg32[%c0_98, %c0_99] : memref<1x32xf32, #tpu.memory_space<vmem>>, vector<1x32xf32>
    %c0_100 = arith.constant 0 : index
    %c0_101 = arith.constant 0 : index
    %222 = vector.load %arg33[%c0_100, %c0_101] : memref<1x32xf32, #tpu.memory_space<vmem>>, vector<1x32xf32>
    %c0_102 = arith.constant 0 : index
    %c0_103 = arith.constant 0 : index
    %223 = vector.load %arg34[%c0_102, %c0_103] : memref<1x32xf32, #tpu.memory_space<vmem>>, vector<1x32xf32>
    %c0_104 = arith.constant 0 : index
    %c0_105 = arith.constant 0 : index
    %224 = vector.load %arg35[%c0_104, %c0_105] : memref<32x32xf32, #tpu.memory_space<vmem>>, vector<32x32xf32>
    %c0_106 = arith.constant 0 : index
    %c0_107 = arith.constant 0 : index
    %225 = vector.load %arg36[%c0_106, %c0_107] : memref<32x32xf32, #tpu.memory_space<vmem>>, vector<32x32xf32>
    %c0_108 = arith.constant 0 : index
    %c0_109 = arith.constant 0 : index
    %226 = vector.load %arg37[%c0_108, %c0_109] : memref<32x32xf32, #tpu.memory_space<vmem>>, vector<32x32xf32>
    %c0_110 = arith.constant 0 : index
    %c0_111 = arith.constant 0 : index
    %227 = vector.load %arg38[%c0_110, %c0_111] : memref<32x32xf32, #tpu.memory_space<vmem>>, vector<32x32xf32>
    %c0_112 = arith.constant 0 : index
    %c0_113 = arith.constant 0 : index
    %228 = vector.load %arg39[%c0_112, %c0_113] : memref<1x32xf32, #tpu.memory_space<vmem>>, vector<1x32xf32>
    %c0_114 = arith.constant 0 : index
    %c0_115 = arith.constant 0 : index
    %229 = vector.load %arg40[%c0_114, %c0_115] : memref<1x32xf32, #tpu.memory_space<vmem>>, vector<1x32xf32>
    %c0_116 = arith.constant 0 : index
    %c0_117 = arith.constant 0 : index
    %230 = vector.load %arg41[%c0_116, %c0_117] : memref<1x32xf32, #tpu.memory_space<vmem>>, vector<1x32xf32>
    %c0_118 = arith.constant 0 : index
    %c0_119 = arith.constant 0 : index
    %231 = vector.load %arg42[%c0_118, %c0_119] : memref<32x64xf32, #tpu.memory_space<vmem>>, vector<32x64xf32>
    %c0_120 = arith.constant 0 : index
    %c0_121 = arith.constant 0 : index
    %232 = vector.load %arg43[%c0_120, %c0_121] : memref<1x64xf32, #tpu.memory_space<vmem>>, vector<1x64xf32>
    %c0_122 = arith.constant 0 : index
    %c0_123 = arith.constant 0 : index
    %233 = vector.load %arg44[%c0_122, %c0_123] : memref<64x32xf32, #tpu.memory_space<vmem>>, vector<64x32xf32>
    %c0_124 = arith.constant 0 : index
    %c0_125 = arith.constant 0 : index
    %234 = vector.load %arg45[%c0_124, %c0_125] : memref<1x32xf32, #tpu.memory_space<vmem>>, vector<1x32xf32>
    %cst_126 = arith.constant dense<0.000000e+00> : vector<16x32xf32>
    %235 = tpu.matmul %0, %217, %cst_126 {dimension_numbers = #tpu.dot_dimension_numbers<[1], [0], [0], [1], [0, 0, 1, 1], [], []>} : vector<16x32xf32>, vector<32x32xf32>, vector<16x32xf32> -> vector<16x32xf32>
    %cst_127 = arith.constant dense<0.000000e+00> : vector<16x32xf32>
    %236 = tpu.matmul %0, %218, %cst_127 {dimension_numbers = #tpu.dot_dimension_numbers<[1], [0], [0], [1], [0, 0, 1, 1], [], []>} : vector<16x32xf32>, vector<32x32xf32>, vector<16x32xf32> -> vector<16x32xf32>
    %cst_128 = arith.constant dense<0.000000e+00> : vector<16x32xf32>
    %237 = tpu.matmul %0, %219, %cst_128 {dimension_numbers = #tpu.dot_dimension_numbers<[1], [0], [0], [1], [0, 0, 1, 1], [], []>} : vector<16x32xf32>, vector<32x32xf32>, vector<16x32xf32> -> vector<16x32xf32>
    %238 = vector.shape_cast %235 : vector<16x32xf32> to vector<2x8x32xf32>
    %239 = vector.shape_cast %236 : vector<16x32xf32> to vector<2x8x32xf32>
    %240 = vector.shape_cast %237 : vector<16x32xf32> to vector<2x8x32xf32>
    %241 = vector.shape_cast %238 : vector<2x8x32xf32> to vector<2x1x8x32xf32>
    %242 = vector.shape_cast %241 : vector<2x1x8x32xf32> to vector<2x1x8x32xf32>
    %243 = vector.broadcast %242 : vector<2x1x8x32xf32> to vector<2x8x8x32xf32>
    %244 = vector.shape_cast %243 : vector<2x8x8x32xf32> to vector<2x64x32xf32>
    %245 = vector.shape_cast %1 : vector<64x32xf32> to vector<1x64x32xf32>
    %246 = vector.broadcast %245 : vector<1x64x32xf32> to vector<2x64x32xf32>
    %247 = arith.mulf %244, %246 : vector<2x64x32xf32>
    %cst_129 = arith.constant dense<0.000000e+00> : vector<2x64x8xf32>
    %248 = tpu.matmul %247, %239, %cst_129 {dimension_numbers = #tpu.dot_dimension_numbers<[2], [2], [1], [1], [0, 0, 0, 1, 1, 1], [0], [0]>} : vector<2x64x32xf32>, vector<2x8x32xf32>, vector<2x64x8xf32> -> vector<2x64x8xf32>
    %cst_130 = arith.constant -1.000000e+20 : f32
    %249 = vector.shape_cast %9 : vector<64x8xi1> to vector<1x64x8xi1>
    %250 = vector.broadcast %249 : vector<1x64x8xi1> to vector<2x64x8xi1>
    %251 = vector.broadcast %cst_130 : f32 to vector<2x64x8xf32>
    %252 = arith.select %250, %251, %248 : vector<2x64x8xi1>, vector<2x64x8xf32>
    %cst_131 = arith.constant 5.000000e-01 : f32
    %253 = vector.broadcast %cst_131 : f32 to vector<2x64x8xf32>
    %254 = arith.mulf %252, %253 : vector<2x64x8xf32>
    %cst_132 = arith.constant dense<0xFF800000> : vector<2x64xf32>
    %255 = vector.multi_reduction <maximumf>, %254, %cst_132 [2] : vector<2x64x8xf32> to vector<2x64xf32>
    %256 = vector.shape_cast %255 : vector<2x64xf32> to vector<2x64x1xf32>
    %257 = vector.broadcast %256 : vector<2x64x1xf32> to vector<2x64x8xf32>
    %258 = arith.subf %254, %257 : vector<2x64x8xf32>
    %259 = math.exp %258 : vector<2x64x8xf32>
    %cst_133 = arith.constant dense<0.000000e+00> : vector<2x64xf32>
    %260 = vector.multi_reduction <add>, %259, %cst_133 [2] : vector<2x64x8xf32> to vector<2x64xf32>
    %261 = vector.shape_cast %260 : vector<2x64xf32> to vector<2x64x1xf32>
    %262 = tpu.reciprocal %261 {approx = true} : vector<2x64x1xf32> -> vector<2x64x1xf32>
    %263 = vector.broadcast %262 : vector<2x64x1xf32> to vector<2x64x8xf32>
    %264 = arith.mulf %259, %263 : vector<2x64x8xf32>
    %cst_134 = arith.constant dense<0.000000e+00> : vector<2x64x32xf32>
    %265 = tpu.matmul %264, %240, %cst_134 {dimension_numbers = #tpu.dot_dimension_numbers<[2], [1], [1], [2], [0, 0, 0, 1, 1, 2], [0], [0]>} : vector<2x64x8xf32>, vector<2x8x32xf32>, vector<2x64x32xf32> -> vector<2x64x32xf32>
    %266 = vector.shape_cast %1 : vector<64x32xf32> to vector<1x64x32xf32>
    %267 = vector.broadcast %266 : vector<1x64x32xf32> to vector<2x64x32xf32>
    %268 = arith.mulf %265, %267 : vector<2x64x32xf32>
    %269 = vector.extract_strided_slice %268 {offsets = [0, 0, 0], sizes = [2, 8, 32], strides = [1, 1, 1]} : vector<2x64x32xf32> to vector<2x8x32xf32>
    %270 = vector.extract_strided_slice %268 {offsets = [0, 8, 0], sizes = [2, 8, 32], strides = [1, 1, 1]} : vector<2x64x32xf32> to vector<2x8x32xf32>
    %271 = arith.addf %269, %270 : vector<2x8x32xf32>
    %272 = vector.extract_strided_slice %268 {offsets = [0, 16, 0], sizes = [2, 8, 32], strides = [1, 1, 1]} : vector<2x64x32xf32> to vector<2x8x32xf32>
    %273 = arith.addf %271, %272 : vector<2x8x32xf32>
    %274 = vector.extract_strided_slice %268 {offsets = [0, 24, 0], sizes = [2, 8, 32], strides = [1, 1, 1]} : vector<2x64x32xf32> to vector<2x8x32xf32>
    %275 = arith.addf %273, %274 : vector<2x8x32xf32>
    %276 = vector.extract_strided_slice %268 {offsets = [0, 32, 0], sizes = [2, 8, 32], strides = [1, 1, 1]} : vector<2x64x32xf32> to vector<2x8x32xf32>
    %277 = arith.addf %275, %276 : vector<2x8x32xf32>
    %278 = vector.extract_strided_slice %268 {offsets = [0, 40, 0], sizes = [2, 8, 32], strides = [1, 1, 1]} : vector<2x64x32xf32> to vector<2x8x32xf32>
    %279 = arith.addf %277, %278 : vector<2x8x32xf32>
    %280 = vector.extract_strided_slice %268 {offsets = [0, 48, 0], sizes = [2, 8, 32], strides = [1, 1, 1]} : vector<2x64x32xf32> to vector<2x8x32xf32>
    %281 = arith.addf %279, %280 : vector<2x8x32xf32>
    %282 = vector.extract_strided_slice %268 {offsets = [0, 56, 0], sizes = [2, 8, 32], strides = [1, 1, 1]} : vector<2x64x32xf32> to vector<2x8x32xf32>
    %283 = arith.addf %281, %282 : vector<2x8x32xf32>
    %284 = vector.shape_cast %283 : vector<2x8x32xf32> to vector<16x32xf32>
    %cst_135 = arith.constant dense<0.000000e+00> : vector<16x32xf32>
    %285 = tpu.matmul %284, %220, %cst_135 {dimension_numbers = #tpu.dot_dimension_numbers<[1], [0], [0], [1], [0, 0, 1, 1], [], []>} : vector<16x32xf32>, vector<32x32xf32>, vector<16x32xf32> -> vector<16x32xf32>
    %286 = vector.broadcast %221 : vector<1x32xf32> to vector<16x32xf32>
    %287 = arith.addf %285, %286 : vector<16x32xf32>
    %288 = arith.addf %287, %0 : vector<16x32xf32>
    %cst_136 = arith.constant dense<0.000000e+00> : vector<16xf32>
    %289 = vector.multi_reduction <add>, %288, %cst_136 [1] : vector<16x32xf32> to vector<16xf32>
    %290 = vector.shape_cast %289 : vector<16xf32> to vector<16x1xf32>
    %cst_137 = arith.constant 3.200000e+01 : f32
    %291 = vector.broadcast %cst_137 : f32 to vector<16x1xf32>
    %292 = arith.divf %290, %291 : vector<16x1xf32>
    %293 = vector.broadcast %292 : vector<16x1xf32> to vector<16x32xf32>
    %294 = arith.subf %288, %293 : vector<16x32xf32>
    %295 = arith.mulf %294, %294 : vector<16x32xf32>
    %cst_138 = arith.constant dense<0.000000e+00> : vector<16xf32>
    %296 = vector.multi_reduction <add>, %295, %cst_138 [1] : vector<16x32xf32> to vector<16xf32>
    %297 = vector.shape_cast %296 : vector<16xf32> to vector<16x1xf32>
    %cst_139 = arith.constant 3.200000e+01 : f32
    %298 = vector.broadcast %cst_139 : f32 to vector<16x1xf32>
    %299 = arith.divf %297, %298 : vector<16x1xf32>
    %300 = vector.broadcast %292 : vector<16x1xf32> to vector<16x32xf32>
    %301 = arith.subf %288, %300 : vector<16x32xf32>
    %cst_140 = arith.constant 9.99999974E-6 : f32
    %302 = vector.broadcast %cst_140 : f32 to vector<16x1xf32>
    %303 = arith.addf %299, %302 : vector<16x1xf32>
    %304 = math.rsqrt %303 : vector<16x1xf32>
    %305 = vector.broadcast %304 : vector<16x1xf32> to vector<16x32xf32>
    %306 = arith.mulf %301, %305 : vector<16x32xf32>
    %307 = vector.broadcast %222 : vector<1x32xf32> to vector<16x32xf32>
    %308 = arith.mulf %306, %307 : vector<16x32xf32>
    %309 = vector.broadcast %223 : vector<1x32xf32> to vector<16x32xf32>
    %310 = arith.addf %308, %309 : vector<16x32xf32>
    %cst_141 = arith.constant dense<0.000000e+00> : vector<16x32xf32>
    %311 = tpu.matmul %216, %224, %cst_141 {dimension_numbers = #tpu.dot_dimension_numbers<[1], [0], [0], [1], [0, 0, 1, 1], [], []>} : vector<16x32xf32>, vector<32x32xf32>, vector<16x32xf32> -> vector<16x32xf32>
    %cst_142 = arith.constant dense<0.000000e+00> : vector<16x32xf32>
    %312 = tpu.matmul %0, %225, %cst_142 {dimension_numbers = #tpu.dot_dimension_numbers<[1], [0], [0], [1], [0, 0, 1, 1], [], []>} : vector<16x32xf32>, vector<32x32xf32>, vector<16x32xf32> -> vector<16x32xf32>
    %cst_143 = arith.constant dense<0.000000e+00> : vector<16x32xf32>
    %313 = tpu.matmul %310, %226, %cst_143 {dimension_numbers = #tpu.dot_dimension_numbers<[1], [0], [0], [1], [0, 0, 1, 1], [], []>} : vector<16x32xf32>, vector<32x32xf32>, vector<16x32xf32> -> vector<16x32xf32>
    %314 = vector.shape_cast %311 : vector<16x32xf32> to vector<2x8x32xf32>
    %315 = vector.shape_cast %312 : vector<16x32xf32> to vector<2x8x32xf32>
    %316 = vector.shape_cast %313 : vector<16x32xf32> to vector<2x8x32xf32>
    %317 = vector.shape_cast %314 : vector<2x8x32xf32> to vector<2x1x8x32xf32>
    %318 = vector.shape_cast %317 : vector<2x1x8x32xf32> to vector<2x1x8x32xf32>
    %319 = vector.broadcast %318 : vector<2x1x8x32xf32> to vector<2x4x8x32xf32>
    %320 = vector.shape_cast %319 : vector<2x4x8x32xf32> to vector<2x32x32xf32>
    %321 = vector.shape_cast %2 : vector<32x32xf32> to vector<1x32x32xf32>
    %322 = vector.broadcast %321 : vector<1x32x32xf32> to vector<2x32x32xf32>
    %323 = arith.mulf %320, %322 : vector<2x32x32xf32>
    %cst_144 = arith.constant dense<0.000000e+00> : vector<2x32x8xf32>
    %324 = tpu.matmul %323, %315, %cst_144 {dimension_numbers = #tpu.dot_dimension_numbers<[2], [2], [1], [1], [0, 0, 0, 1, 1, 1], [0], [0]>} : vector<2x32x32xf32>, vector<2x8x32xf32>, vector<2x32x8xf32> -> vector<2x32x8xf32>
    %cst_145 = arith.constant 0.353553385 : f32
    %325 = vector.broadcast %cst_145 : f32 to vector<2x32x8xf32>
    %326 = arith.mulf %324, %325 : vector<2x32x8xf32>
    %cst_146 = arith.constant dense<0xFF800000> : vector<2x32xf32>
    %327 = vector.multi_reduction <maximumf>, %326, %cst_146 [2] : vector<2x32x8xf32> to vector<2x32xf32>
    %328 = vector.shape_cast %327 : vector<2x32xf32> to vector<2x32x1xf32>
    %329 = vector.broadcast %328 : vector<2x32x1xf32> to vector<2x32x8xf32>
    %330 = arith.subf %326, %329 : vector<2x32x8xf32>
    %331 = math.exp %330 : vector<2x32x8xf32>
    %cst_147 = arith.constant dense<0.000000e+00> : vector<2x32xf32>
    %332 = vector.multi_reduction <add>, %331, %cst_147 [2] : vector<2x32x8xf32> to vector<2x32xf32>
    %333 = vector.shape_cast %332 : vector<2x32xf32> to vector<2x32x1xf32>
    %334 = tpu.reciprocal %333 {approx = true} : vector<2x32x1xf32> -> vector<2x32x1xf32>
    %335 = vector.broadcast %334 : vector<2x32x1xf32> to vector<2x32x8xf32>
    %336 = arith.mulf %331, %335 : vector<2x32x8xf32>
    %cst_148 = arith.constant dense<0.000000e+00> : vector<2x32x32xf32>
    %337 = tpu.matmul %336, %316, %cst_148 {dimension_numbers = #tpu.dot_dimension_numbers<[2], [1], [1], [2], [0, 0, 0, 1, 1, 2], [0], [0]>} : vector<2x32x8xf32>, vector<2x8x32xf32>, vector<2x32x32xf32> -> vector<2x32x32xf32>
    %338 = vector.shape_cast %2 : vector<32x32xf32> to vector<1x32x32xf32>
    %339 = vector.broadcast %338 : vector<1x32x32xf32> to vector<2x32x32xf32>
    %340 = arith.mulf %337, %339 : vector<2x32x32xf32>
    %341 = vector.extract_strided_slice %340 {offsets = [0, 0, 0], sizes = [2, 8, 32], strides = [1, 1, 1]} : vector<2x32x32xf32> to vector<2x8x32xf32>
    %342 = vector.extract_strided_slice %340 {offsets = [0, 8, 0], sizes = [2, 8, 32], strides = [1, 1, 1]} : vector<2x32x32xf32> to vector<2x8x32xf32>
    %343 = arith.addf %341, %342 : vector<2x8x32xf32>
    %344 = vector.extract_strided_slice %340 {offsets = [0, 16, 0], sizes = [2, 8, 32], strides = [1, 1, 1]} : vector<2x32x32xf32> to vector<2x8x32xf32>
    %345 = arith.addf %343, %344 : vector<2x8x32xf32>
    %346 = vector.extract_strided_slice %340 {offsets = [0, 24, 0], sizes = [2, 8, 32], strides = [1, 1, 1]} : vector<2x32x32xf32> to vector<2x8x32xf32>
    %347 = arith.addf %345, %346 : vector<2x8x32xf32>
    %348 = vector.shape_cast %347 : vector<2x8x32xf32> to vector<16x32xf32>
    %cst_149 = arith.constant dense<0.000000e+00> : vector<16x32xf32>
    %349 = tpu.matmul %348, %227, %cst_149 {dimension_numbers = #tpu.dot_dimension_numbers<[1], [0], [0], [1], [0, 0, 1, 1], [], []>} : vector<16x32xf32>, vector<32x32xf32>, vector<16x32xf32> -> vector<16x32xf32>
    %350 = vector.broadcast %228 : vector<1x32xf32> to vector<16x32xf32>
    %351 = arith.addf %349, %350 : vector<16x32xf32>
    %352 = arith.addf %351, %310 : vector<16x32xf32>
    %cst_150 = arith.constant dense<0.000000e+00> : vector<16xf32>
    %353 = vector.multi_reduction <add>, %352, %cst_150 [1] : vector<16x32xf32> to vector<16xf32>
    %354 = vector.shape_cast %353 : vector<16xf32> to vector<16x1xf32>
    %cst_151 = arith.constant 3.200000e+01 : f32
    %355 = vector.broadcast %cst_151 : f32 to vector<16x1xf32>
    %356 = arith.divf %354, %355 : vector<16x1xf32>
    %357 = vector.broadcast %356 : vector<16x1xf32> to vector<16x32xf32>
    %358 = arith.subf %352, %357 : vector<16x32xf32>
    %359 = arith.mulf %358, %358 : vector<16x32xf32>
    %cst_152 = arith.constant dense<0.000000e+00> : vector<16xf32>
    %360 = vector.multi_reduction <add>, %359, %cst_152 [1] : vector<16x32xf32> to vector<16xf32>
    %361 = vector.shape_cast %360 : vector<16xf32> to vector<16x1xf32>
    %cst_153 = arith.constant 3.200000e+01 : f32
    %362 = vector.broadcast %cst_153 : f32 to vector<16x1xf32>
    %363 = arith.divf %361, %362 : vector<16x1xf32>
    %364 = vector.broadcast %356 : vector<16x1xf32> to vector<16x32xf32>
    %365 = arith.subf %352, %364 : vector<16x32xf32>
    %cst_154 = arith.constant 9.99999974E-6 : f32
    %366 = vector.broadcast %cst_154 : f32 to vector<16x1xf32>
    %367 = arith.addf %363, %366 : vector<16x1xf32>
    %368 = math.rsqrt %367 : vector<16x1xf32>
    %369 = vector.broadcast %368 : vector<16x1xf32> to vector<16x32xf32>
    %370 = arith.mulf %365, %369 : vector<16x32xf32>
    %371 = vector.broadcast %229 : vector<1x32xf32> to vector<16x32xf32>
    %372 = arith.mulf %370, %371 : vector<16x32xf32>
    %373 = vector.broadcast %230 : vector<1x32xf32> to vector<16x32xf32>
    %374 = arith.addf %372, %373 : vector<16x32xf32>
    %cst_155 = arith.constant dense<0.000000e+00> : vector<16x64xf32>
    %375 = tpu.matmul %374, %231, %cst_155 {dimension_numbers = #tpu.dot_dimension_numbers<[1], [0], [0], [1], [0, 0, 1, 1], [], []>} : vector<16x32xf32>, vector<32x64xf32>, vector<16x64xf32> -> vector<16x64xf32>
    %376 = vector.broadcast %232 : vector<1x64xf32> to vector<16x64xf32>
    %377 = arith.addf %375, %376 : vector<16x64xf32>
    %cst_156 = arith.constant 0.000000e+00 : f32
    %378 = vector.broadcast %cst_156 : f32 to vector<16x64xf32>
    %379 = arith.maximumf %377, %378 : vector<16x64xf32>
    %cst_157 = arith.constant dense<0.000000e+00> : vector<16x32xf32>
    %380 = tpu.matmul %379, %233, %cst_157 {dimension_numbers = #tpu.dot_dimension_numbers<[1], [0], [0], [1], [0, 0, 1, 1], [], []>} : vector<16x64xf32>, vector<64x32xf32>, vector<16x32xf32> -> vector<16x32xf32>
    %381 = vector.broadcast %234 : vector<1x32xf32> to vector<16x32xf32>
    %382 = arith.addf %380, %381 : vector<16x32xf32>
    %383 = arith.addf %382, %374 : vector<16x32xf32>
    %cst_158 = arith.constant dense<0.000000e+00> : vector<16xf32>
    %384 = vector.multi_reduction <add>, %383, %cst_158 [1] : vector<16x32xf32> to vector<16xf32>
    %385 = vector.shape_cast %384 : vector<16xf32> to vector<16x1xf32>
    %cst_159 = arith.constant 3.200000e+01 : f32
    %386 = vector.broadcast %cst_159 : f32 to vector<16x1xf32>
    %387 = arith.divf %385, %386 : vector<16x1xf32>
    %388 = vector.broadcast %387 : vector<16x1xf32> to vector<16x32xf32>
    %389 = arith.subf %383, %388 : vector<16x32xf32>
    %390 = arith.mulf %389, %389 : vector<16x32xf32>
    %cst_160 = arith.constant dense<0.000000e+00> : vector<16xf32>
    %391 = vector.multi_reduction <add>, %390, %cst_160 [1] : vector<16x32xf32> to vector<16xf32>
    %392 = vector.shape_cast %391 : vector<16xf32> to vector<16x1xf32>
    %cst_161 = arith.constant 3.200000e+01 : f32
    %393 = vector.broadcast %cst_161 : f32 to vector<16x1xf32>
    %394 = arith.divf %392, %393 : vector<16x1xf32>
    %395 = vector.broadcast %387 : vector<16x1xf32> to vector<16x32xf32>
    %396 = arith.subf %383, %395 : vector<16x32xf32>
    %cst_162 = arith.constant 9.99999974E-6 : f32
    %397 = vector.broadcast %cst_162 : f32 to vector<16x1xf32>
    %398 = arith.addf %394, %397 : vector<16x1xf32>
    %399 = math.rsqrt %398 : vector<16x1xf32>
    %400 = vector.broadcast %399 : vector<16x1xf32> to vector<16x32xf32>
    %401 = arith.mulf %396, %400 : vector<16x32xf32>
    %402 = vector.broadcast %229 : vector<1x32xf32> to vector<16x32xf32>
    %403 = arith.mulf %401, %402 : vector<16x32xf32>
    %404 = vector.broadcast %230 : vector<1x32xf32> to vector<16x32xf32>
    %405 = arith.addf %403, %404 : vector<16x32xf32>
    %c0_163 = arith.constant 0 : index
    %c0_164 = arith.constant 0 : index
    %406 = vector.load %arg6[%c0_163, %c0_164] : memref<32x128xf32, #tpu.memory_space<vmem>>, vector<32x128xf32>
    %cst_165 = arith.constant dense<0.000000e+00> : vector<16x128xf32>
    %407 = tpu.matmul %405, %406, %cst_165 {dimension_numbers = #tpu.dot_dimension_numbers<[1], [0], [0], [1], [0, 0, 1, 1], [], []>} : vector<16x32xf32>, vector<32x128xf32>, vector<16x128xf32> -> vector<16x128xf32>
    %c0_166 = arith.constant 0 : index
    %c0_167 = arith.constant 0 : index
    %408 = vector.load %arg7[%c0_166, %c0_167] : memref<1x128xf32, #tpu.memory_space<vmem>>, vector<1x128xf32>
    %409 = vector.broadcast %408 : vector<1x128xf32> to vector<16x128xf32>
    %410 = arith.addf %407, %409 : vector<16x128xf32>
    %411 = vector.shape_cast %410 : vector<16x128xf32> to vector<2x8x128xf32>
    %412 = vector.extract_strided_slice %411 {offsets = [0, 0, 0], sizes = [1, 8, 128], strides = [1, 1, 1]} : vector<2x8x128xf32> to vector<1x8x128xf32>
    %413 = vector.shape_cast %412 : vector<1x8x128xf32> to vector<8x128xf32>
    %414 = vector.extract_strided_slice %411 {offsets = [1, 0, 0], sizes = [1, 8, 128], strides = [1, 1, 1]} : vector<2x8x128xf32> to vector<1x8x128xf32>
    %415 = vector.shape_cast %414 : vector<1x8x128xf32> to vector<8x128xf32>
    %416 = arith.maximumf %413, %415 : vector<8x128xf32>
    %417 = vector.shape_cast %416 : vector<8x128xf32> to vector<1x8x128xf32>
    %418 = vector.broadcast %417 : vector<1x8x128xf32> to vector<2x8x128xf32>
    %419 = arith.subf %411, %418 : vector<2x8x128xf32>
    %420 = math.exp %419 : vector<2x8x128xf32>
    %421 = vector.extract_strided_slice %420 {offsets = [0, 0, 0], sizes = [1, 8, 128], strides = [1, 1, 1]} : vector<2x8x128xf32> to vector<1x8x128xf32>
    %422 = vector.shape_cast %421 : vector<1x8x128xf32> to vector<8x128xf32>
    %423 = vector.extract_strided_slice %420 {offsets = [1, 0, 0], sizes = [1, 8, 128], strides = [1, 1, 1]} : vector<2x8x128xf32> to vector<1x8x128xf32>
    %424 = vector.shape_cast %423 : vector<1x8x128xf32> to vector<8x128xf32>
    %425 = arith.addf %422, %424 : vector<8x128xf32>
    %426 = tpu.reciprocal %425 {approx = true} : vector<8x128xf32> -> vector<8x128xf32>
    %427 = vector.shape_cast %426 : vector<8x128xf32> to vector<1x8x128xf32>
    %428 = vector.broadcast %427 : vector<1x8x128xf32> to vector<2x8x128xf32>
    %429 = arith.mulf %420, %428 : vector<2x8x128xf32>
    %c0_168 = arith.constant 0 : index
    %c0_169 = arith.constant 0 : index
    %c0_170 = arith.constant 0 : index
    %430 = vector.load %arg46[%c0_168, %c0_169, %c0_170] : memref<2x8x128xf32, #tpu.memory_space<vmem>>, vector<2x8x128xf32>
    tpu.vector_store %arg46[%c0_168, %c0_169, %c0_170], %429 {strides = array<i32>} : memref<2x8x128xf32, #tpu.memory_space<vmem>>, vector<2x8x128xf32>,
    return
  }
}

</mosaic_0001>

<llo_original>
// kernel: tpu_custom_call.1
$region0: #{tpu_custom_call.1}
  #allocation0 [shape = 'u32[]', space=smem, size = 0x4, offset = 0x4, fixed_abs, tag = 'smem constant byte address 0x4 - core index']
  #allocation1 [shape = 'u32[144,128]{1,0:T(1,128)}', space=vmem, size = 0x12000, scoped, tag = 'internal scratch']
  %s0 = inlined_call_operand.smem [shape: u32[47], index: -1, kind: input, shape index: {}]
  %s1 = sld [smem:[%s0]]
  %s2 = scalar_lea.smem %s0, 1
  %s3 = sld [smem:[%s2]]
  %s4 = scalar_lea.smem %s0, 2
  %s5 = sld [smem:[%s4]]
  %s6 = scalar_lea.smem %s0, 3
  %s7 = sld [smem:[%s6]]
  %s8 = scalar_lea.smem %s0, 4
  %s9 = sld [smem:[%s8]]
  %s10 = scalar_lea.smem %s0, 5
  %s11 = sld [smem:[%s10]]
  %s12 = scalar_lea.smem %s0, 6
  %s13 = sld [smem:[%s12]]
  %s14 = scalar_lea.smem %s0, 7
  %s15 = sld [smem:[%s14]]
  %s16 = scalar_lea.smem %s0, 8
  %s17 = sld [smem:[%s16]]
  %s18 = scalar_lea.smem %s0, 9
  %s19 = sld [smem:[%s18]]
  %s20 = scalar_lea.smem %s0, 10
  %s21 = sld [smem:[%s20]]
  %s22 = scalar_lea.smem %s0, 11
  %s23 = sld [smem:[%s22]]
  %s24 = scalar_lea.smem %s0, 12
  %s25 = sld [smem:[%s24]]
  %s26 = scalar_lea.smem %s0, 13
  %s27 = sld [smem:[%s26]]
  %s28 = scalar_lea.smem %s0, 14
  %s29 = sld [smem:[%s28]]
  %s30 = scalar_lea.smem %s0, 15
  %s31 = sld [smem:[%s30]]
  %s32 = scalar_lea.smem %s0, 16
  %s33 = sld [smem:[%s32]]
  %s34 = scalar_lea.smem %s0, 17
  %s35 = sld [smem:[%s34]]
  %s36 = scalar_lea.smem %s0, 18
  %s37 = sld [smem:[%s36]]
  %s38 = scalar_lea.smem %s0, 19
  %s39 = sld [smem:[%s38]]
  %s40 = scalar_lea.smem %s0, 20
  %s41 = sld [smem:[%s40]]
  %s42 = scalar_lea.smem %s0, 21
  %s43 = sld [smem:[%s42]]
  %s44 = scalar_lea.smem %s0, 22
  %s45 = sld [smem:[%s44]]
  %s46 = scalar_lea.smem %s0, 23
  %s47 = sld [smem:[%s46]]
  %s48 = scalar_lea.smem %s0, 24
  %s49 = sld [smem:[%s48]]
  %s50 = scalar_lea.smem %s0, 25
  %s51 = sld [smem:[%s50]]
  %s52 = scalar_lea.smem %s0, 26
  %s53 = sld [smem:[%s52]]
  %s54 = scalar_lea.smem %s0, 27
  %s55 = sld [smem:[%s54]]
  %s56 = scalar_lea.smem %s0, 28
  %s57 = sld [smem:[%s56]]
  %s58 = scalar_lea.smem %s0, 29
  %s59 = sld [smem:[%s58]]
  %s60 = scalar_lea.smem %s0, 30
  %s61 = sld [smem:[%s60]]
  %s62 = scalar_lea.smem %s0, 31
  %s63 = sld [smem:[%s62]]
  %s64 = scalar_lea.smem %s0, 32
  %s65 = sld [smem:[%s64]]
  %s66 = scalar_lea.smem %s0, 33
  %s67 = sld [smem:[%s66]]
  %s68 = scalar_lea.smem %s0, 34
  %s69 = sld [smem:[%s68]]
  %s70 = scalar_lea.smem %s0, 35
  %s71 = sld [smem:[%s70]]
  %s72 = scalar_lea.smem %s0, 36
  %s73 = sld [smem:[%s72]]
  %s74 = scalar_lea.smem %s0, 37
  %s75 = sld [smem:[%s74]]
  %s76 = scalar_lea.smem %s0, 38
  %s77 = sld [smem:[%s76]]
  %s78 = scalar_lea.smem %s0, 39
  %s79 = sld [smem:[%s78]]
  %s80 = scalar_lea.smem %s0, 40
  %s81 = sld [smem:[%s80]]
  %s82 = scalar_lea.smem %s0, 41
  %s83 = sld [smem:[%s82]]
  %s84 = scalar_lea.smem %s0, 42
  %s85 = sld [smem:[%s84]]
  %s86 = scalar_lea.smem %s0, 43
  %s87 = sld [smem:[%s86]]
  %s88 = scalar_lea.smem %s0, 44
  %s89 = sld [smem:[%s88]]
  %s90 = scalar_lea.smem %s0, 45
  %s91 = sld [smem:[%s90]]
  %s92 = scalar_lea.smem %s0, 46
  %s93 = sld [smem:[%s92]]
  %s94 = sld [smem:[#allocation0]]
  $region294: #{tpu_custom_call.1} parent=0
    _
  %s96 = ssub.s32 1, %s94
  %s97 = scalar_select 0, %s96, %s94
  $region1: #{tpu_custom_call.1} parent=0
    #allocation2 [shape = 'u8[8192]{0}', space=vmem, size = 0x2000, scoped, tag = 'input window, operand 1, single buffered']
    #allocation3 [shape = 's32[1]{0}', space=sflag, size = 0x4, scoped, tag = 'scoped memory for tpu_custom_call.1']
    #allocation4 [shape = 's32[1]{0}', space=sflag, size = 0x4, scoped, tag = 'scoped memory for tpu_custom_call.1']
    #allocation5 [shape = 'u8[4096]{0}', space=vmem, size = 0x1000, scoped, tag = 'input window, operand 2, single buffered']
    #allocation6 [shape = 's32[1]{0}', space=sflag, size = 0x4, scoped, tag = 'scoped memory for tpu_custom_call.1']
    #allocation7 [shape = 'u8[512]{0}', space=vmem, size = 0x400, scoped, tag = 'input window, operand 3, single buffered']
    #allocation8 [shape = 'u8[512]{0}', space=vmem, size = 0x400, scoped, tag = 'input window, operand 4, single buffered']
    #allocation9 [shape = 's32[1]{0}', space=sflag, size = 0x4, scoped, tag = 'scoped memory for tpu_custom_call.1']
    #allocation10 [shape = 'u8[4096]{0}', space=vmem, size = 0x1000, scoped, tag = 'input window, operand 5, single buffered']
    #allocation11 [shape = 'u8[512]{0}', space=vmem, size = 0x400, scoped, tag = 'input window, operand 7, single buffered']
    #allocation12 [shape = 's32[1]{0}', space=sflag, size = 0x4, scoped, tag = 'scoped memory for tpu_custom_call.1']
    #allocation13 [shape = 'u8[512]{0}', space=vmem, size = 0x400, scoped, tag = 'input window, operand 14, single buffered']
    #allocation14 [shape = 'u8[512]{0}', space=vmem, size = 0x400, scoped, tag = 'input window, operand 15, single buffered']
    #allocation15 [shape = 's32[1]{0}', space=sflag, size = 0x4, scoped, tag = 'scoped memory for tpu_custom_call.1']
    #allocation16 [shape = 'u8[512]{0}', space=vmem, size = 0x400, scoped, tag = 'input window, operand 16, single buffered']
    #allocation17 [shape = 'u8[16384]{0}', space=vmem, size = 0x4000, scoped, tag = 'input window, operand 19, single buffered']
    #allocation18 [shape = 's32[1]{0}', space=sflag, size = 0x4, scoped, tag = 'scoped memory for tpu_custom_call.1']
    #allocation19 [shape = 'u8[16384]{0}', space=vmem, size = 0x4000, scoped, tag = 'input window, operand 20, single buffered']
    #allocation20 [shape = 'u8[512]{0}', space=vmem, size = 0x400, scoped, tag = 'input window, operand 21, single buffered']
    #allocation21 [shape = 's32[1]{0}', space=sflag, size = 0x4, scoped, tag = 'scoped memory for tpu_custom_call.1']
    #allocation22 [shape = 'u8[512]{0}', space=vmem, size = 0x400, scoped, tag = 'input window, operand 22, single buffered']
    #allocation23 [shape = 'u8[512]{0}', space=vmem, size = 0x400, scoped, tag = 'input window, operand 23, single buffered']
    #allocation24 [shape = 's32[1]{0}', space=sflag, size = 0x4, scoped, tag = 'scoped memory for tpu_custom_call.1']
    #allocation25 [shape = 'u8[16384]{0}', space=vmem, size = 0x4000, scoped, tag = 'input window, operand 24, single buffered']
    #allocation26 [shape = 'u8[512]{0}', space=vmem, size = 0x400, scoped, tag = 'input window, operand 25, single buffered']
    #allocation27 [shape = 's32[1]{0}', space=sflag, size = 0x4, scoped, tag = 'scoped memory for tpu_custom_call.1']
    #allocation28 [shape = 'u8[512]{0}', space=vmem, size = 0x400, scoped, tag = 'input window, operand 27, single buffered']
    #allocation29 [shape = 'u8[16384]{0}', space=vmem, size = 0x4000, scoped, tag = 'input window, operand 29, single buffered']
    #allocation30 [shape = 's32[1]{0}', space=sflag, size = 0x4, scoped, tag = 'scoped memory for tpu_custom_call.1']
    #allocation31 [shape = 'u8[16384]{0}', space=vmem, size = 0x4000, scoped, tag = 'input window, operand 30, single buffered']
    #allocation32 [shape = 'u8[16384]{0}', space=vmem, size = 0x4000, scoped, tag = 'input window, operand 31, single buffered']
    #allocation33 [shape = 's32[1]{0}', space=sflag, size = 0x4, scoped, tag = 'scoped memory for tpu_custom_call.1']
    #allocation34 [shape = 'u8[16384]{0}', space=vmem, size = 0x4000, scoped, tag = 'input window, operand 35, single buffered']
    #allocation35 [shape = 'u8[16384]{0}', space=vmem, size = 0x4000, scoped, tag = 'input window, operand 36, single buffered']
    #allocation36 [shape = 's32[1]{0}', space=sflag, size = 0x4, scoped, tag = 'scoped memory for tpu_custom_call.1']
    #allocation37 [shape = 'u8[16384]{0}', space=vmem, size = 0x4000, scoped, tag = 'input window, operand 37, single buffered']
    #allocation38 [shape = 'u8[16384]{0}', space=vmem, size = 0x4000, scoped, tag = 'input window, operand 38, single buffered']
    #allocation39 [shape = 's32[1]{0}', space=sflag, size = 0x4, scoped, tag = 'scoped memory for tpu_custom_call.1']
    #allocation40 [shape = 'u8[16384]{0}', space=vmem, size = 0x4000, scoped, tag = 'input window, operand 42, single buffered']
    #allocation41 [shape = 'u8[8192]{0}', space=vmem, size = 0x2000, scoped, tag = 'output window, operand 0, single buffered']
    %98 = vsyncpa [#allocation3], 0
    %99 = vsyncpa [#allocation6], 0
    %100 = vsyncpa [#allocation9], 0
    %101 = vsyncpa [#allocation12], 0
    %102 = vsyncpa [#allocation15], 0
    %103 = vsyncpa [#allocation18], 0
    %104 = vsyncpa [#allocation21], 0
    %105 = vsyncpa [#allocation24], 0
    %106 = vsyncpa [#allocation27], 0
    %107 = vsyncpa [#allocation30], 0
    %108 = vsyncpa [#allocation33], 0
    %109 = vsyncpa [#allocation36], 0
    %110 = vsyncpa [#allocation39], 0
    %111 = vsyncpa [#allocation4], 0
    // Predicated region
    $region2: #{tpu_custom_call.1} parent=1 // pred_check
      _
    $region3: #{tpu_custom_call.1} parent=1 // pred_check_branch
      %113 = sbr.rel (0) target = $region5
    $region4: #{tpu_custom_call.1} parent=1 // pred_region
      _
    $region5: #{tpu_custom_call.1} parent=1 // pred_fallthru
      _
    // Predicated region
    $region6: #{tpu_custom_call.1} parent=1 // pred_check
      _
    $region7: #{tpu_custom_call.1} parent=1 // pred_check_branch
      %115 = sbr.rel (0) target = $region9
    $region8: #{tpu_custom_call.1} parent=1 // pred_region
      %s117 = ssub.s32 256, 256
      %118 = vsyncadd [#allocation3], %s117
      %s119 = sshll.u32 [#allocation2], 4
      %s120 = int_to_ptr.vmem [resolvable:$true] %s119
      %125 = dma.hbm_to_vmem [thread:$0]  %s3, 256, %s120, [#allocation3], 128, 128, 8
    $region9: #{tpu_custom_call.1} parent=1 // pred_fallthru
      _
    // Predicated region
    $region10: #{tpu_custom_call.1} parent=1 // pred_check
      _
    $region11: #{tpu_custom_call.1} parent=1 // pred_check_branch
      %127 = sbr.rel (0) target = $region13
    $region12: #{tpu_custom_call.1} parent=1 // pred_region
      %s129 = ssub.s32 128, 128
      %130 = vsyncadd [#allocation6], %s129
      %s132 = sshll.u32 [#allocation5], 4
      %s133 = int_to_ptr.vmem [resolvable:$true] %s132
      %135 = dma.hbm_to_vmem [thread:$0]  %s5, 128, %s133, [#allocation6]
    $region13: #{tpu_custom_call.1} parent=1 // pred_fallthru
      _
    // Predicated region
    $region14: #{tpu_custom_call.1} parent=1 // pred_check
      _
    $region15: #{tpu_custom_call.1} parent=1 // pred_check_branch
      %137 = sbr.rel (0) target = $region17
    $region16: #{tpu_custom_call.1} parent=1 // pred_region
      %s139 = ssub.s32 16, 16
      %140 = vsyncadd [#allocation6], %s139
      %s142 = sshll.u32 [#allocation7], 4
      %s143 = int_to_ptr.vmem [resolvable:$true] %s142
      %145 = dma.hbm_to_vmem [thread:$0]  %s7, 16, %s143, [#allocation6]
    $region17: #{tpu_custom_call.1} parent=1 // pred_fallthru
      _
    // Predicated region
    $region18: #{tpu_custom_call.1} parent=1 // pred_check
      _
    $region19: #{tpu_custom_call.1} parent=1 // pred_check_branch
      %147 = sbr.rel (0) target = $region21
    $region20: #{tpu_custom_call.1} parent=1 // pred_region
      %s149 = ssub.s32 16, 16
      %150 = vsyncadd [#allocation9], %s149
      %s152 = sshll.u32 [#allocation8], 4
      %s153 = int_to_ptr.vmem [resolvable:$true] %s152
      %155 = dma.hbm_to_vmem [thread:$0]  %s9, 16, %s153, [#allocation9]
    $region21: #{tpu_custom_call.1} parent=1 // pred_fallthru
      _
    // Predicated region
    $region22: #{tpu_custom_call.1} parent=1 // pred_check
      _
    $region23: #{tpu_custom_call.1} parent=1 // pred_check_branch
      %157 = sbr.rel (0) target = $region25
    $region24: #{tpu_custom_call.1} parent=1 // pred_region
      %s159 = ssub.s32 128, 128
      %160 = vsyncadd [#allocation9], %s159
      %s162 = sshll.u32 [#allocation10], 4
      %s163 = int_to_ptr.vmem [resolvable:$true] %s162
      %165 = dma.hbm_to_vmem [thread:$0]  %s11, 128, %s163, [#allocation9]
    $region25: #{tpu_custom_call.1} parent=1 // pred_fallthru
      _
    // Predicated region
    $region26: #{tpu_custom_call.1} parent=1 // pred_check
      _
    $region27: #{tpu_custom_call.1} parent=1 // pred_check_branch
      %167 = sbr.rel (0) target = $region29
    $region28: #{tpu_custom_call.1} parent=1 // pred_region
      _
    $region29: #{tpu_custom_call.1} parent=1 // pred_fallthru
      _
    // Predicated region
    $region30: #{tpu_custom_call.1} parent=1 // pred_check
      _
    $region31: #{tpu_custom_call.1} parent=1 // pred_check_branch
      %169 = sbr.rel (0) target = $region33
    $region32: #{tpu_custom_call.1} parent=1 // pred_region
      %s171 = ssub.s32 16, 16
      %172 = vsyncadd [#allocation12], %s171
      %s174 = sshll.u32 [#allocation11], 4
      %s175 = int_to_ptr.vmem [resolvable:$true] %s174
      %177 = dma.hbm_to_vmem [thread:$0]  %s15, 16, %s175, [#allocation12]
    $region33: #{tpu_custom_call.1} parent=1 // pred_fallthru
      _
    // Predicated region
    $region34: #{tpu_custom_call.1} parent=1 // pred_check
      _
    $region35: #{tpu_custom_call.1} parent=1 // pred_check_branch
      %179 = sbr.rel (0) target = $region37
    $region36: #{tpu_custom_call.1} parent=1 // pred_region
      _
    $region37: #{tpu_custom_call.1} parent=1 // pred_fallthru
      _
    // Predicated region
    $region38: #{tpu_custom_call.1} parent=1 // pred_check
      _
    $region39: #{tpu_custom_call.1} parent=1 // pred_check_branch
      %181 = sbr.rel (0) target = $region41
    $region40: #{tpu_custom_call.1} parent=1 // pred_region
      _
    $region41: #{tpu_custom_call.1} parent=1 // pred_fallthru
      _
    // Predicated region
    $region42: #{tpu_custom_call.1} parent=1 // pred_check
      _
    $region43: #{tpu_custom_call.1} parent=1 // pred_check_branch
      %183 = sbr.rel (0) target = $region45
    $region44: #{tpu_custom_call.1} parent=1 // pred_region
      _
    $region45: #{tpu_custom_call.1} parent=1 // pred_fallthru
      _
    // Predicated region
    $region46: #{tpu_custom_call.1} parent=1 // pred_check
      _
    $region47: #{tpu_custom_call.1} parent=1 // pred_check_branch
      %185 = sbr.rel (0) target = $region49
    $region48: #{tpu_custom_call.1} parent=1 // pred_region
      _
    $region49: #{tpu_custom_call.1} parent=1 // pred_fallthru
      _
    // Predicated region
    $region50: #{tpu_custom_call.1} parent=1 // pred_check
      _
    $region51: #{tpu_custom_call.1} parent=1 // pred_check_branch
      %187 = sbr.rel (0) target = $region53
    $region52: #{tpu_custom_call.1} parent=1 // pred_region
      _
    $region53: #{tpu_custom_call.1} parent=1 // pred_fallthru
      _
    // Predicated region
    $region54: #{tpu_custom_call.1} parent=1 // pred_check
      _
    $region55: #{tpu_custom_call.1} parent=1 // pred_check_branch
      %189 = sbr.rel (0) target = $region57
    $region56: #{tpu_custom_call.1} parent=1 // pred_region
      _
    $region57: #{tpu_custom_call.1} parent=1 // pred_fallthru
      _
    // Predicated region
    $region58: #{tpu_custom_call.1} parent=1 // pred_check
      _
    $region59: #{tpu_custom_call.1} parent=1 // pred_check_branch
      %191 = sbr.rel (0) target = $region61
    $region60: #{tpu_custom_call.1} parent=1 // pred_region
      %s193 = ssub.s32 16, 16
      %194 = vsyncadd [#allocation12], %s193
      %s196 = sshll.u32 [#allocation13], 4
      %s197 = int_to_ptr.vmem [resolvable:$true] %s196
      %199 = dma.hbm_to_vmem [thread:$0]  %s29, 16, %s197, [#allocation12]
    $region61: #{tpu_custom_call.1} parent=1 // pred_fallthru
      _
    // Predicated region
    $region62: #{tpu_custom_call.1} parent=1 // pred_check
      _
    $region63: #{tpu_custom_call.1} parent=1 // pred_check_branch
      %201 = sbr.rel (0) target = $region65
    $region64: #{tpu_custom_call.1} parent=1 // pred_region
      %s203 = ssub.s32 16, 16
      %204 = vsyncadd [#allocation15], %s203
      %s206 = sshll.u32 [#allocation14], 4
      %s207 = int_to_ptr.vmem [resolvable:$true] %s206
      %209 = dma.hbm_to_vmem [thread:$0]  %s31, 16, %s207, [#allocation15]
    $region65: #{tpu_custom_call.1} parent=1 // pred_fallthru
      _
    // Predicated region
    $region66: #{tpu_custom_call.1} parent=1 // pred_check
      _
    $region67: #{tpu_custom_call.1} parent=1 // pred_check_branch
      %211 = sbr.rel (0) target = $region69
    $region68: #{tpu_custom_call.1} parent=1 // pred_region
      %s213 = ssub.s32 16, 16
      %214 = vsyncadd [#allocation15], %s213
      %s216 = sshll.u32 [#allocation16], 4
      %s217 = int_to_ptr.vmem [resolvable:$true] %s216
      %219 = dma.hbm_to_vmem [thread:$0]  %s33, 16, %s217, [#allocation15]
    $region69: #{tpu_custom_call.1} parent=1 // pred_fallthru
      _
    // Predicated region
    $region70: #{tpu_custom_call.1} parent=1 // pred_check
      _
    $region71: #{tpu_custom_call.1} parent=1 // pred_check_branch
      %221 = sbr.rel (0) target = $region73
    $region72: #{tpu_custom_call.1} parent=1 // pred_region
      _
    $region73: #{tpu_custom_call.1} parent=1 // pred_fallthru
      _
    // Predicated region
    $region74: #{tpu_custom_call.1} parent=1 // pred_check
      _
    $region75: #{tpu_custom_call.1} parent=1 // pred_check_branch
      %223 = sbr.rel (0) target = $region77
    $region76: #{tpu_custom_call.1} parent=1 // pred_region
      _
    $region77: #{tpu_custom_call.1} parent=1 // pred_fallthru
      _
    // Predicated region
    $region78: #{tpu_custom_call.1} parent=1 // pred_check
      _
    $region79: #{tpu_custom_call.1} parent=1 // pred_check_branch
      %225 = sbr.rel (0) target = $region81
    $region80: #{tpu_custom_call.1} parent=1 // pred_region
      %s227 = ssub.s32 512, 512
      %228 = vsyncadd [#allocation18], %s227
      %s229 = sshll.u32 [#allocation17], 4
      %s230 = int_to_ptr.vmem [resolvable:$true] %s229
      %235 = dma.hbm_to_vmem [thread:$0]  %s39, 512, %s230, [#allocation18], 128, 128, 8
    $region81: #{tpu_custom_call.1} parent=1 // pred_fallthru
      _
    // Predicated region
    $region82: #{tpu_custom_call.1} parent=1 // pred_check
      _
    $region83: #{tpu_custom_call.1} parent=1 // pred_check_branch
      %237 = sbr.rel (0) target = $region85
    $region84: #{tpu_custom_call.1} parent=1 // pred_region
      %s239 = ssub.s32 512, 512
      %240 = vsyncadd [#allocation18], %s239
      %s241 = sshll.u32 [#allocation19], 4
      %s242 = int_to_ptr.vmem [resolvable:$true] %s241
      %247 = dma.hbm_to_vmem [thread:$0]  %s41, 512, %s242, [#allocation18], 128, 128, 8
    $region85: #{tpu_custom_call.1} parent=1 // pred_fallthru
      _
    // Predicated region
    $region86: #{tpu_custom_call.1} parent=1 // pred_check
      _
    $region87: #{tpu_custom_call.1} parent=1 // pred_check_branch
      %249 = sbr.rel (0) target = $region89
    $region88: #{tpu_custom_call.1} parent=1 // pred_region
      %s251 = ssub.s32 16, 16
      %252 = vsyncadd [#allocation21], %s251
      %s254 = sshll.u32 [#allocation20], 4
      %s255 = int_to_ptr.vmem [resolvable:$true] %s254
      %257 = dma.hbm_to_vmem [thread:$0]  %s43, 16, %s255, [#allocation21]
    $region89: #{tpu_custom_call.1} parent=1 // pred_fallthru
      _
    // Predicated region
    $region90: #{tpu_custom_call.1} parent=1 // pred_check
      _
    $region91: #{tpu_custom_call.1} parent=1 // pred_check_branch
      %259 = sbr.rel (0) target = $region93
    $region92: #{tpu_custom_call.1} parent=1 // pred_region
      %s261 = ssub.s32 16, 16
      %262 = vsyncadd [#allocation21], %s261
      %s264 = sshll.u32 [#allocation22], 4
      %s265 = int_to_ptr.vmem [resolvable:$true] %s264
      %267 = dma.hbm_to_vmem [thread:$0]  %s45, 16, %s265, [#allocation21]
    $region93: #{tpu_custom_call.1} parent=1 // pred_fallthru
      _
    // Predicated region
    $region94: #{tpu_custom_call.1} parent=1 // pred_check
      _
    $region95: #{tpu_custom_call.1} parent=1 // pred_check_branch
      %269 = sbr.rel (0) target = $region97
    $region96: #{tpu_custom_call.1} parent=1 // pred_region
      %s271 = ssub.s32 16, 16
      %272 = vsyncadd [#allocation24], %s271
      %s274 = sshll.u32 [#allocation23], 4
      %s275 = int_to_ptr.vmem [resolvable:$true] %s274
      %277 = dma.hbm_to_vmem [thread:$0]  %s47, 16, %s275, [#allocation24]
    $region97: #{tpu_custom_call.1} parent=1 // pred_fallthru
      _
    // Predicated region
    $region98: #{tpu_custom_call.1} parent=1 // pred_check
      _
    $region99: #{tpu_custom_call.1} parent=1 // pred_check_branch
      %279 = sbr.rel (0) target = $region101
    $region100: #{tpu_custom_call.1} parent=1 // pred_region
      %s281 = ssub.s32 512, 512
      %282 = vsyncadd [#allocation24], %s281
      %s283 = sshll.u32 [#allocation25], 4
      %s284 = int_to_ptr.vmem [resolvable:$true] %s283
      %289 = dma.hbm_to_vmem [thread:$0]  %s49, 512, %s284, [#allocation24], 128, 128, 8
    $region101: #{tpu_custom_call.1} parent=1 // pred_fallthru
      _
    // Predicated region
    $region102: #{tpu_custom_call.1} parent=1 // pred_check
      _
    $region103: #{tpu_custom_call.1} parent=1 // pred_check_branch
      %291 = sbr.rel (0) target = $region105
    $region104: #{tpu_custom_call.1} parent=1 // pred_region
      %s293 = ssub.s32 16, 16
      %294 = vsyncadd [#allocation27], %s293
      %s296 = sshll.u32 [#allocation26], 4
      %s297 = int_to_ptr.vmem [resolvable:$true] %s296
      %299 = dma.hbm_to_vmem [thread:$0]  %s51, 16, %s297, [#allocation27]
    $region105: #{tpu_custom_call.1} parent=1 // pred_fallthru
      _
    // Predicated region
    $region106: #{tpu_custom_call.1} parent=1 // pred_check
      _
    $region107: #{tpu_custom_call.1} parent=1 // pred_check_branch
      %301 = sbr.rel (0) target = $region109
    $region108: #{tpu_custom_call.1} parent=1 // pred_region
      _
    $region109: #{tpu_custom_call.1} parent=1 // pred_fallthru
      _
    // Predicated region
    $region110: #{tpu_custom_call.1} parent=1 // pred_check
      _
    $region111: #{tpu_custom_call.1} parent=1 // pred_check_branch
      %303 = sbr.rel (0) target = $region113
    $region112: #{tpu_custom_call.1} parent=1 // pred_region
      %s305 = ssub.s32 16, 16
      %306 = vsyncadd [#allocation27], %s305
      %s308 = sshll.u32 [#allocation28], 4
      %s309 = int_to_ptr.vmem [resolvable:$true] %s308
      %311 = dma.hbm_to_vmem [thread:$0]  %s55, 16, %s309, [#allocation27]
    $region113: #{tpu_custom_call.1} parent=1 // pred_fallthru
      _
    // Predicated region
    $region114: #{tpu_custom_call.1} parent=1 // pred_check
      _
    $region115: #{tpu_custom_call.1} parent=1 // pred_check_branch
      %313 = sbr.rel (0) target = $region117
    $region116: #{tpu_custom_call.1} parent=1 // pred_region
      _
    $region117: #{tpu_custom_call.1} parent=1 // pred_fallthru
      _
    // Predicated region
    $region118: #{tpu_custom_call.1} parent=1 // pred_check
      _
    $region119: #{tpu_custom_call.1} parent=1 // pred_check_branch
      %315 = sbr.rel (0) target = $region121
    $region120: #{tpu_custom_call.1} parent=1 // pred_region
      %s317 = ssub.s32 512, 512
      %318 = vsyncadd [#allocation30], %s317
      %s319 = sshll.u32 [#allocation29], 4
      %s320 = int_to_ptr.vmem [resolvable:$true] %s319
      %325 = dma.hbm_to_vmem [thread:$0]  %s59, 512, %s320, [#allocation30], 128, 128, 8
    $region121: #{tpu_custom_call.1} parent=1 // pred_fallthru
      _
    // Predicated region
    $region122: #{tpu_custom_call.1} parent=1 // pred_check
      _
    $region123: #{tpu_custom_call.1} parent=1 // pred_check_branch
      %327 = sbr.rel (0) target = $region125
    $region124: #{tpu_custom_call.1} parent=1 // pred_region
      %s329 = ssub.s32 512, 512
      %330 = vsyncadd [#allocation30], %s329
      %s331 = sshll.u32 [#allocation31], 4
      %s332 = int_to_ptr.vmem [resolvable:$true] %s331
      %337 = dma.hbm_to_vmem [thread:$0]  %s61, 512, %s332, [#allocation30], 128, 128, 8
    $region125: #{tpu_custom_call.1} parent=1 // pred_fallthru
      _
    // Predicated region
    $region126: #{tpu_custom_call.1} parent=1 // pred_check
      _
    $region127: #{tpu_custom_call.1} parent=1 // pred_check_branch
      %339 = sbr.rel (0) target = $region129
    $region128: #{tpu_custom_call.1} parent=1 // pred_region
      %s341 = ssub.s32 512, 512
      %342 = vsyncadd [#allocation33], %s341
      %s343 = sshll.u32 [#allocation32], 4
      %s344 = int_to_ptr.vmem [resolvable:$true] %s343
      %349 = dma.hbm_to_vmem [thread:$0]  %s63, 512, %s344, [#allocation33], 128, 128, 8
    $region129: #{tpu_custom_call.1} parent=1 // pred_fallthru
      _
    // Predicated region
    $region130: #{tpu_custom_call.1} parent=1 // pred_check
      _
    $region131: #{tpu_custom_call.1} parent=1 // pred_check_branch
      %351 = sbr.rel (0) target = $region133
    $region132: #{tpu_custom_call.1} parent=1 // pred_region
      _
    $region133: #{tpu_custom_call.1} parent=1 // pred_fallthru
      _
    // Predicated region
    $region134: #{tpu_custom_call.1} parent=1 // pred_check
      _
    $region135: #{tpu_custom_call.1} parent=1 // pred_check_branch
      %353 = sbr.rel (0) target = $region137
    $region136: #{tpu_custom_call.1} parent=1 // pred_region
      _
    $region137: #{tpu_custom_call.1} parent=1 // pred_fallthru
      _
    // Predicated region
    $region138: #{tpu_custom_call.1} parent=1 // pred_check
      _
    $region139: #{tpu_custom_call.1} parent=1 // pred_check_branch
      %355 = sbr.rel (0) target = $region141
    $region140: #{tpu_custom_call.1} parent=1 // pred_region
      _
    $region141: #{tpu_custom_call.1} parent=1 // pred_fallthru
      _
    // Predicated region
    $region142: #{tpu_custom_call.1} parent=1 // pred_check
      _
    $region143: #{tpu_custom_call.1} parent=1 // pred_check_branch
      %357 = sbr.rel (0) target = $region145
    $region144: #{tpu_custom_call.1} parent=1 // pred_region
      %s359 = ssub.s32 512, 512
      %360 = vsyncadd [#allocation33], %s359
      %s361 = sshll.u32 [#allocation34], 4
      %s362 = int_to_ptr.vmem [resolvable:$true] %s361
      %367 = dma.hbm_to_vmem [thread:$0]  %s71, 512, %s362, [#allocation33], 128, 128, 8
    $region145: #{tpu_custom_call.1} parent=1 // pred_fallthru
      _
    // Predicated region
    $region146: #{tpu_custom_call.1} parent=1 // pred_check
      _
    $region147: #{tpu_custom_call.1} parent=1 // pred_check_branch
      %369 = sbr.rel (0) target = $region149
    $region148: #{tpu_custom_call.1} parent=1 // pred_region
      %s371 = ssub.s32 512, 512
      %372 = vsyncadd [#allocation36], %s371
      %s373 = sshll.u32 [#allocation35], 4
      %s374 = int_to_ptr.vmem [resolvable:$true] %s373
      %379 = dma.hbm_to_vmem [thread:$0]  %s73, 512, %s374, [#allocation36], 128, 128, 8
    $region149: #{tpu_custom_call.1} parent=1 // pred_fallthru
      _
    // Predicated region
    $region150: #{tpu_custom_call.1} parent=1 // pred_check
      _
    $region151: #{tpu_custom_call.1} parent=1 // pred_check_branch
      %381 = sbr.rel (0) target = $region153
    $region152: #{tpu_custom_call.1} parent=1 // pred_region
      %s383 = ssub.s32 512, 512
      %384 = vsyncadd [#allocation36], %s383
      %s385 = sshll.u32 [#allocation37], 4
      %s386 = int_to_ptr.vmem [resolvable:$true] %s385
      %391 = dma.hbm_to_vmem [thread:$0]  %s75, 512, %s386, [#allocation36], 128, 128, 8
    $region153: #{tpu_custom_call.1} parent=1 // pred_fallthru
      _
    // Predicated region
    $region154: #{tpu_custom_call.1} parent=1 // pred_check
      _
    $region155: #{tpu_custom_call.1} parent=1 // pred_check_branch
      %393 = sbr.rel (0) target = $region157
    $region156: #{tpu_custom_call.1} parent=1 // pred_region
      %s395 = ssub.s32 512, 512
      %396 = vsyncadd [#allocation39], %s395
      %s397 = sshll.u32 [#allocation38], 4
      %s398 = int_to_ptr.vmem [resolvable:$true] %s397
      %403 = dma.hbm_to_vmem [thread:$0]  %s77, 512, %s398, [#allocation39], 128, 128, 8
    $region157: #{tpu_custom_call.1} parent=1 // pred_fallthru
      _
    // Predicated region
    $region158: #{tpu_custom_call.1} parent=1 // pred_check
      _
    $region159: #{tpu_custom_call.1} parent=1 // pred_check_branch
      %405 = sbr.rel (0) target = $region161
    $region160: #{tpu_custom_call.1} parent=1 // pred_region
      _
    $region161: #{tpu_custom_call.1} parent=1 // pred_fallthru
      _
    // Predicated region
    $region162: #{tpu_custom_call.1} parent=1 // pred_check
      _
    $region163: #{tpu_custom_call.1} parent=1 // pred_check_branch
      %407 = sbr.rel (0) target = $region165
    $region164: #{tpu_custom_call.1} parent=1 // pred_region
      _
    $region165: #{tpu_custom_call.1} parent=1 // pred_fallthru
      _
    // Predicated region
    $region166: #{tpu_custom_call.1} parent=1 // pred_check
      _
    $region167: #{tpu_custom_call.1} parent=1 // pred_check_branch
      %409 = sbr.rel (0) target = $region169
    $region168: #{tpu_custom_call.1} parent=1 // pred_region
      _
    $region169: #{tpu_custom_call.1} parent=1 // pred_fallthru
      _
    // Predicated region
    $region170: #{tpu_custom_call.1} parent=1 // pred_check
      _
    $region171: #{tpu_custom_call.1} parent=1 // pred_check_branch
      %411 = sbr.rel (0) target = $region173
    $region172: #{tpu_custom_call.1} parent=1 // pred_region
      %s413 = ssub.s32 512, 512
      %414 = vsyncadd [#allocation39], %s413
      %s415 = sshll.u32 [#allocation40], 4
      %s416 = int_to_ptr.vmem [resolvable:$true] %s415
      %421 = dma.hbm_to_vmem [thread:$0]  %s85, 512, %s416, [#allocation39], 128, 128, 8
    $region173: #{tpu_custom_call.1} parent=1 // pred_fallthru
      _
    // Predicated region
    $region174: #{tpu_custom_call.1} parent=1 // pred_check
      _
    $region175: #{tpu_custom_call.1} parent=1 // pred_check_branch
      %423 = sbr.rel (0) target = $region177
    $region176: #{tpu_custom_call.1} parent=1 // pred_region
      _
    $region177: #{tpu_custom_call.1} parent=1 // pred_fallthru
      _
    // Predicated region
    $region178: #{tpu_custom_call.1} parent=1 // pred_check
      _
    $region179: #{tpu_custom_call.1} parent=1 // pred_check_branch
      %425 = sbr.rel (0) target = $region181
    $region180: #{tpu_custom_call.1} parent=1 // pred_region
      _
    $region181: #{tpu_custom_call.1} parent=1 // pred_fallthru
      _
    // Predicated region
    $region182: #{tpu_custom_call.1} parent=1 // pred_check
      _
    $region183: #{tpu_custom_call.1} parent=1 // pred_check_branch
      %427 = sbr.rel (0) target = $region185
    $region184: #{tpu_custom_call.1} parent=1 // pred_region
      _
    $region185: #{tpu_custom_call.1} parent=1 // pred_fallthru
      _
    // Predicated region
    $region186: #{tpu_custom_call.1} parent=1 // pred_check
      _
    $region187: #{tpu_custom_call.1} parent=1 // pred_check_branch
      %429 = sbr.rel (0) target = $region189
    $region188: #{tpu_custom_call.1} parent=1 // pred_region
      %430 = dma.done [#allocation3], 256
    $region189: #{tpu_custom_call.1} parent=1 // pred_fallthru
      _
    // Predicated region
    $region190: #{tpu_custom_call.1} parent=1 // pred_check
      _
    $region191: #{tpu_custom_call.1} parent=1 // pred_check_branch
      %432 = sbr.rel (0) target = $region193
    $region192: #{tpu_custom_call.1} parent=1 // pred_region
      %433 = dma.done [#allocation6], 128
    $region193: #{tpu_custom_call.1} parent=1 // pred_fallthru
      _
    // Predicated region
    $region194: #{tpu_custom_call.1} parent=1 // pred_check
      _
    $region195: #{tpu_custom_call.1} parent=1 // pred_check_branch
      %435 = sbr.rel (0) target = $region197
    $region196: #{tpu_custom_call.1} parent=1 // pred_region
      %436 = dma.done [#allocation6], 16
    $region197: #{tpu_custom_call.1} parent=1 // pred_fallthru
      _
    // Predicated region
    $region198: #{tpu_custom_call.1} parent=1 // pred_check
      _
    $region199: #{tpu_custom_call.1} parent=1 // pred_check_branch
      %438 = sbr.rel (0) target = $region201
    $region200: #{tpu_custom_call.1} parent=1 // pred_region
      %439 = dma.done [#allocation9], 16
    $region201: #{tpu_custom_call.1} parent=1 // pred_fallthru
      _
    // Predicated region
    $region202: #{tpu_custom_call.1} parent=1 // pred_check
      _
    $region203: #{tpu_custom_call.1} parent=1 // pred_check_branch
      %441 = sbr.rel (0) target = $region205
    $region204: #{tpu_custom_call.1} parent=1 // pred_region
      %442 = dma.done [#allocation9], 128
    $region205: #{tpu_custom_call.1} parent=1 // pred_fallthru
      _
    // Predicated region
    $region206: #{tpu_custom_call.1} parent=1 // pred_check
      _
    $region207: #{tpu_custom_call.1} parent=1 // pred_check_branch
      %444 = sbr.rel (0) target = $region209
    $region208: #{tpu_custom_call.1} parent=1 // pred_region
      %445 = dma.done [#allocation12], 16
    $region209: #{tpu_custom_call.1} parent=1 // pred_fallthru
      _
    // Predicated region
    $region210: #{tpu_custom_call.1} parent=1 // pred_check
      _
    $region211: #{tpu_custom_call.1} parent=1 // pred_check_branch
      %447 = sbr.rel (0) target = $region213
    $region212: #{tpu_custom_call.1} parent=1 // pred_region
      %448 = dma.done [#allocation12], 16
    $region213: #{tpu_custom_call.1} parent=1 // pred_fallthru
      _
    // Predicated region
    $region214: #{tpu_custom_call.1} parent=1 // pred_check
      _
    $region215: #{tpu_custom_call.1} parent=1 // pred_check_branch
      %450 = sbr.rel (0) target = $region217
    $region216: #{tpu_custom_call.1} parent=1 // pred_region
      %451 = dma.done [#allocation15], 16
    $region217: #{tpu_custom_call.1} parent=1 // pred_fallthru
      _
    // Predicated region
    $region218: #{tpu_custom_call.1} parent=1 // pred_check
      _
    $region219: #{tpu_custom_call.1} parent=1 // pred_check_branch
      %453 = sbr.rel (0) target = $region221
    $region220: #{tpu_custom_call.1} parent=1 // pred_region
      %454 = dma.done [#allocation15], 16
    $region221: #{tpu_custom_call.1} parent=1 // pred_fallthru
      _
    // Predicated region
    $region222: #{tpu_custom_call.1} parent=1 // pred_check
      _
    $region223: #{tpu_custom_call.1} parent=1 // pred_check_branch
      %456 = sbr.rel (0) target = $region225
    $region224: #{tpu_custom_call.1} parent=1 // pred_region
      %457 = dma.done [#allocation18], 512
    $region225: #{tpu_custom_call.1} parent=1 // pred_fallthru
      _
    // Predicated region
    $region226: #{tpu_custom_call.1} parent=1 // pred_check
      _
    $region227: #{tpu_custom_call.1} parent=1 // pred_check_branch
      %459 = sbr.rel (0) target = $region229
    $region228: #{tpu_custom_call.1} parent=1 // pred_region
      %460 = dma.done [#allocation18], 512
    $region229: #{tpu_custom_call.1} parent=1 // pred_fallthru
      _
    // Predicated region
    $region230: #{tpu_custom_call.1} parent=1 // pred_check
      _
    $region231: #{tpu_custom_call.1} parent=1 // pred_check_branch
      %462 = sbr.rel (0) target = $region233
    $region232: #{tpu_custom_call.1} parent=1 // pred_region
      %463 = dma.done [#allocation21], 16
    $region233: #{tpu_custom_call.1} parent=1 // pred_fallthru
      _
    // Predicated region
    $region234: #{tpu_custom_call.1} parent=1 // pred_check
      _
    $region235: #{tpu_custom_call.1} parent=1 // pred_check_branch
      %465 = sbr.rel (0) target = $region237
    $region236: #{tpu_custom_call.1} parent=1 // pred_region
      %466 = dma.done [#allocation21], 16
    $region237: #{tpu_custom_call.1} parent=1 // pred_fallthru
      _
    // Predicated region
    $region238: #{tpu_custom_call.1} parent=1 // pred_check
      _
    $region239: #{tpu_custom_call.1} parent=1 // pred_check_branch
      %468 = sbr.rel (0) target = $region241
    $region240: #{tpu_custom_call.1} parent=1 // pred_region
      %469 = dma.done [#allocation24], 16
    $region241: #{tpu_custom_call.1} parent=1 // pred_fallthru
      _
    // Predicated region
    $region242: #{tpu_custom_call.1} parent=1 // pred_check
      _
    $region243: #{tpu_custom_call.1} parent=1 // pred_check_branch
      %471 = sbr.rel (0) target = $region245
    $region244: #{tpu_custom_call.1} parent=1 // pred_region
      %472 = dma.done [#allocation24], 512
    $region245: #{tpu_custom_call.1} parent=1 // pred_fallthru
      _
    // Predicated region
    $region246: #{tpu_custom_call.1} parent=1 // pred_check
      _
    $region247: #{tpu_custom_call.1} parent=1 // pred_check_branch
      %474 = sbr.rel (0) target = $region249
    $region248: #{tpu_custom_call.1} parent=1 // pred_region
      %475 = dma.done [#allocation27], 16
    $region249: #{tpu_custom_call.1} parent=1 // pred_fallthru
      _
    // Predicated region
    $region250: #{tpu_custom_call.1} parent=1 // pred_check
      _
    $region251: #{tpu_custom_call.1} parent=1 // pred_check_branch
      %477 = sbr.rel (0) target = $region253
    $region252: #{tpu_custom_call.1} parent=1 // pred_region
      %478 = dma.done [#allocation27], 16
    $region253: #{tpu_custom_call.1} parent=1 // pred_fallthru
      _
    // Predicated region
    $region254: #{tpu_custom_call.1} parent=1 // pred_check
      _
    $region255: #{tpu_custom_call.1} parent=1 // pred_check_branch
      %480 = sbr.rel (0) target = $region257
    $region256: #{tpu_custom_call.1} parent=1 // pred_region
      %481 = dma.done [#allocation30], 512
    $region257: #{tpu_custom_call.1} parent=1 // pred_fallthru
      _
    // Predicated region
    $region258: #{tpu_custom_call.1} parent=1 // pred_check
      _
    $region259: #{tpu_custom_call.1} parent=1 // pred_check_branch
      %483 = sbr.rel (0) target = $region261
    $region260: #{tpu_custom_call.1} parent=1 // pred_region
      %484 = dma.done [#allocation30], 512
    $region261: #{tpu_custom_call.1} parent=1 // pred_fallthru
      _
    // Predicated region
    $region262: #{tpu_custom_call.1} parent=1 // pred_check
      _
    $region263: #{tpu_custom_call.1} parent=1 // pred_check_branch
      %486 = sbr.rel (0) target = $region265
    $region264: #{tpu_custom_call.1} parent=1 // pred_region
      %487 = dma.done [#allocation33], 512
    $region265: #{tpu_custom_call.1} parent=1 // pred_fallthru
      _
    // Predicated region
    $region266: #{tpu_custom_call.1} parent=1 // pred_check
      _
    $region267: #{tpu_custom_call.1} parent=1 // pred_check_branch
      %489 = sbr.rel (0) target = $region269
    $region268: #{tpu_custom_call.1} parent=1 // pred_region
      %490 = dma.done [#allocation33], 512
    $region269: #{tpu_custom_call.1} parent=1 // pred_fallthru
      _
    // Predicated region
    $region270: #{tpu_custom_call.1} parent=1 // pred_check
      _
    $region271: #{tpu_custom_call.1} parent=1 // pred_check_branch
      %492 = sbr.rel (0) target = $region273
    $region272: #{tpu_custom_call.1} parent=1 // pred_region
      %493 = dma.done [#allocation36], 512
    $region273: #{tpu_custom_call.1} parent=1 // pred_fallthru
      _
    // Predicated region
    $region274: #{tpu_custom_call.1} parent=1 // pred_check
      _
    $region275: #{tpu_custom_call.1} parent=1 // pred_check_branch
      %495 = sbr.rel (0) target = $region277
    $region276: #{tpu_custom_call.1} parent=1 // pred_region
      %496 = dma.done [#allocation36], 512
    $region277: #{tpu_custom_call.1} parent=1 // pred_fallthru
      _
    // Predicated region
    $region278: #{tpu_custom_call.1} parent=1 // pred_check
      _
    $region279: #{tpu_custom_call.1} parent=1 // pred_check_branch
      %498 = sbr.rel (0) target = $region281
    $region280: #{tpu_custom_call.1} parent=1 // pred_region
      %499 = dma.done [#allocation39], 512
    $region281: #{tpu_custom_call.1} parent=1 // pred_fallthru
      _
    // Predicated region
    $region282: #{tpu_custom_call.1} parent=1 // pred_check
      _
    $region283: #{tpu_custom_call.1} parent=1 // pred_check_branch
      %501 = sbr.rel (0) target = $region285
    $region284: #{tpu_custom_call.1} parent=1 // pred_region
      %502 = dma.done [#allocation39], 512
    $region285: #{tpu_custom_call.1} parent=1 // pred_fallthru
      _
    %v503 = vld [vmem:[#allocation2] sm:$0xff]
    %v504 = vld [vmem:[#allocation2 + $0x8] sm:$0xff]
    %v505 = vld [vmem:[%s17] sm:$0xff]
    %v506 = vld [vmem:[%s17 + $0x8] sm:$0xff]
    %v507 = vld [vmem:[%s17 + $0x10] sm:$0xff]
    %v508 = vld [vmem:[%s17 + $0x18] sm:$0xff]
    %v509 = vld [vmem:[%s17 + $0x20] sm:$0xff]
    %v510 = vld [vmem:[%s17 + $0x28] sm:$0xff]
    %v511 = vld [vmem:[%s17 + $0x30] sm:$0xff]
    %v512 = vld [vmem:[%s17 + $0x38] sm:$0xff]
    %v513 = vld [vmem:[%s19] sm:$0xff]
    %v514 = vld [vmem:[%s19 + $0x8] sm:$0xff]
    %v515 = vld [vmem:[%s19 + $0x10] sm:$0xff]
    %v516 = vld [vmem:[%s19 + $0x18] sm:$0xff]
    %v517 = vld [vmem:[#allocation5] sm:$0xff]
    %vm518 = vcmp.eq.f32.partialorder %v517, 0.0
    %v519 = vld [vmem:[#allocation7] sm:$0x1]
    %v520 = vmul.f32 %v519, 5.656854
    %v521 = vld [vmem:[#allocation10] sm:$0xff]
    %v522 = vld [vmem:[#allocation8] sm:$0x1]
    %v523 = vmul.f32 %v522, 5.656854
    %v525 = vlaneseq
    %v526 = vshrl.u32 %v525, 7
    %v527 = vsub.s32 0, %v526
    %v528 = vrot.slane %v523, %v527
    %v530 = vadd.f32 %v521, %v528
    %v531 = vld [vmem:[%s1] sm:$0xff]
    %v532 = vld [vmem:[%s1 + $0x8] sm:$0xff]
    %534 = vset.pattern.permute.xlu0 0
    %535 = vperm.xlu0 %534, %v531
    %v536 = vpop.permute.xlu0 %535
    %539 = vset.pattern.permute.xlu0 0
    %540 = vperm.xlu0 %539, %v532
    %v541 = vpop.permute.xlu0 %540
    %v544 = vlaneseq
    %v545 = vshrl.u32 %v544, 7
    %v546 = vsub.s32 0, %v545
    %v547 = vrot.slane %v520, %v546
    %v549 = vmul.f32 %v536, %v547
    %v550 = vmul.f32 %v541, %v547
    %v551 = vadd.f32 %v549, %v530
    %v552 = vadd.f32 %v550, %v530
    %v553 = vld [vmem:[%s21] sm:$0xff]
    %v554 = vld [vmem:[%s21 + $0x8] sm:$0xff]
    %v555 = vld [vmem:[%s21 + $0x10] sm:$0xff]
    %v556 = vld [vmem:[%s21 + $0x18] sm:$0xff]
    %v557 = vld [vmem:[%s23] sm:$0xff]
    %v558 = vld [vmem:[%s23 + $0x8] sm:$0xff]
    %v559 = vld [vmem:[%s23 + $0x10] sm:$0xff]
    %v560 = vld [vmem:[%s23 + $0x18] sm:$0xff]
    %v561 = vld [vmem:[%s25] sm:$0xff]
    %v562 = vld [vmem:[%s25 + $0x8] sm:$0xff]
    %v563 = vld [vmem:[%s25 + $0x10] sm:$0xff]
    %v564 = vld [vmem:[%s25 + $0x18] sm:$0xff]
    %v565 = vld [vmem:[%s27] sm:$0xff]
    %v566 = vld [vmem:[%s27 + $0x8] sm:$0xff]
    %v567 = vld [vmem:[%s27 + $0x10] sm:$0xff]
    %v568 = vld [vmem:[%s27 + $0x18] sm:$0xff]
    %v569 = vld [vmem:[#allocation13] sm:$0x1]
    %v570 = vld [vmem:[#allocation14] sm:$0x1]
    %v571 = vld [vmem:[#allocation16] sm:$0x1]
    %v572 = vld [vmem:[%s35] sm:$0xff]
    %v573 = vld [vmem:[%s35 + $0x8] sm:$0xff]
    %v574 = vld [vmem:[%s35 + $0x10] sm:$0xff]
    %v575 = vld [vmem:[%s35 + $0x18] sm:$0xff]
    %v576 = vld [vmem:[%s37] sm:$0xff]
    %v577 = vld [vmem:[%s37 + $0x8] sm:$0xff]
    %v578 = vld [vmem:[%s37 + $0x10] sm:$0xff]
    %v579 = vld [vmem:[%s37 + $0x18] sm:$0xff]
    %v580 = vld [vmem:[#allocation17] sm:$0xff]
    %v581 = vld [vmem:[#allocation17 + $0x8] sm:$0xff]
    %v582 = vld [vmem:[#allocation17 + $0x10] sm:$0xff]
    %v583 = vld [vmem:[#allocation17 + $0x18] sm:$0xff]
    %v584 = vld [vmem:[#allocation19] sm:$0xff]
    %v585 = vld [vmem:[#allocation19 + $0x8] sm:$0xff]
    %v586 = vld [vmem:[#allocation19 + $0x10] sm:$0xff]
    %v587 = vld [vmem:[#allocation19 + $0x18] sm:$0xff]
    %v588 = vld [vmem:[#allocation20] sm:$0x1]
    %v589 = vld [vmem:[#allocation22] sm:$0x1]
    %v590 = vld [vmem:[#allocation23] sm:$0x1]
    %v591 = vld [vmem:[#allocation25] sm:$0xff]
    %v592 = vld [vmem:[#allocation25 + $0x8] sm:$0xff]
    %v593 = vld [vmem:[#allocation25 + $0x10] sm:$0xff]
    %v594 = vld [vmem:[#allocation25 + $0x18] sm:$0xff]
    %v595 = vld [vmem:[#allocation26] sm:$0x1]
    %v596 = vld [vmem:[%s53] sm:$0xff]
    %v597 = vld [vmem:[%s53 + $0x8] sm:$0xff]
    %v598 = vld [vmem:[%s53 + $0x10] sm:$0xff]
    %v599 = vld [vmem:[%s53 + $0x18] sm:$0xff]
    %v600 = vld [vmem:[%s53 + $0x20] sm:$0xff]
    %v601 = vld [vmem:[%s53 + $0x28] sm:$0xff]
    %v602 = vld [vmem:[%s53 + $0x30] sm:$0xff]
    %v603 = vld [vmem:[%s53 + $0x38] sm:$0xff]
    %v604 = vld [vmem:[#allocation28] sm:$0x1]
    %vm605 = vcmask 261120
    %v607 = vsel %vm605, %v503, 0
    %v610 = vsel %vm605, %v504, 0
    %612 = vmatprep.subr.mxu0 0.0
    %613 = vmatpush1.msra.mxu0 0.0
    %614 = vmatprep.subr.mxu0 0.0
    %615 = vmatpush1.msra.mxu0 0.0
    %616 = vmatprep.subr.mxu0 0.0
    %617 = vmatpush1.msra.mxu0 0.0
    %618 = vmatprep.subr.mxu0 0.0
    %619 = vmatpush1.msra.mxu0 0.0
    %620 = vmatprep.subr.mxu0 0.0
    %621 = vmatpush1.msra.mxu0 0.0
    %622 = vmatprep.subr.mxu0 0.0
    %623 = vmatpush1.msra.mxu0 0.0
    %624 = vmatprep.subr.mxu0 0.0
    %625 = vmatpush1.msra.mxu0 0.0
    %626 = vmatprep.subr.mxu0 0.0
    %627 = vmatpush1.msra.mxu0 0.0
    %628 = vmatprep.subr.mxu0 0.0
    %629 = vmatpush1.msra.mxu0 0.0
    %630 = vmatprep.subr.mxu0 0.0
    %631 = vmatpush1.msra.mxu0 0.0
    %632 = vmatprep.subr.mxu0 0.0
    %633 = vmatpush1.msra.mxu0 0.0
    %634 = vmatprep.subr.mxu0 0.0
    %635 = vmatpush1.msra.mxu0 0.0
    %636 = vmatprep.subr.mxu0 0.0
    %637 = vmatpush1.msra.mxu0 %v556
    %638 = vmatprep.subr.mxu0 0.0
    %639 = vmatpush1.msra.mxu0 %v555
    %640 = vmatprep.subr.mxu0 0.0
    %641 = vmatpush1.msra.mxu0 %v554
    %642 = vmatprep.subr.mxu0 0.0
    %643 = vmatpush1.msra.mxu0 %v553
    %644 = vmatprep.subr.mxu0 0.0
    %645 = vmatpush2.msra.mxu0 0.0
    %646 = vmatprep.subr.mxu0 0.0
    %647 = vmatpush2.msra.mxu0 0.0
    %648 = vmatprep.subr.mxu0 0.0
    %649 = vmatpush2.msra.mxu0 0.0
    %650 = vmatprep.subr.mxu0 0.0
    %651 = vmatpush2.msra.mxu0 0.0
    %652 = vmatprep.subr.mxu0 0.0
    %653 = vmatpush2.msra.mxu0 0.0
    %654 = vmatprep.subr.mxu0 0.0
    %655 = vmatpush2.msra.mxu0 0.0
    %656 = vmatprep.subr.mxu0 0.0
    %657 = vmatpush2.msra.mxu0 0.0
    %658 = vmatprep.subr.mxu0 0.0
    %659 = vmatpush2.msra.mxu0 0.0
    %660 = vmatprep.subr.mxu0 0.0
    %661 = vmatpush2.msra.mxu0 0.0
    %662 = vmatprep.subr.mxu0 0.0
    %663 = vmatpush2.msra.mxu0 0.0
    %664 = vmatprep.subr.mxu0 0.0
    %665 = vmatpush2.msra.mxu0 0.0
    %666 = vmatprep.subr.mxu0 0.0
    %667 = vmatpush2.msra.mxu0 0.0
    %668 = vmatprep.subr.mxu0 0.0
    %669 = vmatpush2.msra.mxu0 0.0
    %670 = vmatprep.subr.mxu0 0.0
    %671 = vmatpush2.msra.mxu0 0.0
    %672 = vmatprep.subr.mxu0 0.0
    %673 = vmatpush2.msra.mxu0 0.0
    %674 = vmatprep.subr.mxu0 0.0
    %675 = vmatpush2.msra.mxu0 0.0
    %676 = vmatprep.mubr.f32.mxu0 0.0
    %677 = vmatmul.mubr.f32.gmra.mxu0 %v607
    %v678 = vpop.f32.mrf.mxu0
    %v679 = vadd.f32 0.0, %v678
    %v680 = vpop.f32.mrf.mxu0
    %681 = vmatprep.mubr.f32.mxu0 0.0
    %682 = vmatmul.mubr.f32.gmra.mxu0 %v610
    %v683 = vpop.f32.mrf.mxu0
    %v684 = vadd.f32 0.0, %v683
    %v685 = vpop.f32.mrf.mxu0
    %686 = vdwg.mxu0
    %687 = vmatprep.subr.mxu0 0.0
    %688 = vmatpush1.msra.mxu0 0.0
    %689 = vmatprep.subr.mxu0 0.0
    %690 = vmatpush1.msra.mxu0 0.0
    %691 = vmatprep.subr.mxu0 0.0
    %692 = vmatpush1.msra.mxu0 0.0
    %693 = vmatprep.subr.mxu0 0.0
    %694 = vmatpush1.msra.mxu0 0.0
    %695 = vmatprep.subr.mxu0 0.0
    %696 = vmatpush1.msra.mxu0 0.0
    %697 = vmatprep.subr.mxu0 0.0
    %698 = vmatpush1.msra.mxu0 0.0
    %699 = vmatprep.subr.mxu0 0.0
    %700 = vmatpush1.msra.mxu0 0.0
    %701 = vmatprep.subr.mxu0 0.0
    %702 = vmatpush1.msra.mxu0 0.0
    %703 = vmatprep.subr.mxu0 0.0
    %704 = vmatpush1.msra.mxu0 0.0
    %705 = vmatprep.subr.mxu0 0.0
    %706 = vmatpush1.msra.mxu0 0.0
    %707 = vmatprep.subr.mxu0 0.0
    %708 = vmatpush1.msra.mxu0 0.0
    %709 = vmatprep.subr.mxu0 0.0
    %710 = vmatpush1.msra.mxu0 0.0
    %711 = vmatprep.subr.mxu0 0.0
    %712 = vmatpush1.msra.mxu0 %v560
    %713 = vmatprep.subr.mxu0 0.0
    %714 = vmatpush1.msra.mxu0 %v559
    %715 = vmatprep.subr.mxu0 0.0
    %716 = vmatpush1.msra.mxu0 %v558
    %717 = vmatprep.subr.mxu0 0.0
    %718 = vmatpush1.msra.mxu0 %v557
    %719 = vmatprep.subr.mxu0 0.0
    %720 = vmatpush2.msra.mxu0 0.0
    %721 = vmatprep.subr.mxu0 0.0
    %722 = vmatpush2.msra.mxu0 0.0
    %723 = vmatprep.subr.mxu0 0.0
    %724 = vmatpush2.msra.mxu0 0.0
    %725 = vmatprep.subr.mxu0 0.0
    %726 = vmatpush2.msra.mxu0 0.0
    %727 = vmatprep.subr.mxu0 0.0
    %728 = vmatpush2.msra.mxu0 0.0
    %729 = vmatprep.subr.mxu0 0.0
    %730 = vmatpush2.msra.mxu0 0.0
    %731 = vmatprep.subr.mxu0 0.0
    %732 = vmatpush2.msra.mxu0 0.0
    %733 = vmatprep.subr.mxu0 0.0
    %734 = vmatpush2.msra.mxu0 0.0
    %735 = vmatprep.subr.mxu0 0.0
    %736 = vmatpush2.msra.mxu0 0.0
    %737 = vmatprep.subr.mxu0 0.0
    %738 = vmatpush2.msra.mxu0 0.0
    %739 = vmatprep.subr.mxu0 0.0
    %740 = vmatpush2.msra.mxu0 0.0
    %741 = vmatprep.subr.mxu0 0.0
    %742 = vmatpush2.msra.mxu0 0.0
    %743 = vmatprep.subr.mxu0 0.0
    %744 = vmatpush2.msra.mxu0 0.0
    %745 = vmatprep.subr.mxu0 0.0
    %746 = vmatpush2.msra.mxu0 0.0
    %747 = vmatprep.subr.mxu0 0.0
    %748 = vmatpush2.msra.mxu0 0.0
    %749 = vmatprep.subr.mxu0 0.0
    %750 = vmatpush2.msra.mxu0 0.0
    %751 = vmatprep.mubr.f32.mxu0 0.0
    %752 = vmatmul.mubr.f32.gmra.mxu0 %v607
    %v753 = vpop.f32.mrf.mxu0
    %v754 = vadd.f32 0.0, %v753
    %v755 = vpop.f32.mrf.mxu0
    %756 = vmatprep.mubr.f32.mxu0 0.0
    %757 = vmatmul.mubr.f32.gmra.mxu0 %v610
    %v758 = vpop.f32.mrf.mxu0
    %v759 = vadd.f32 0.0, %v758
    %v760 = vpop.f32.mrf.mxu0
    %761 = vdwg.mxu0
    %762 = vmatprep.subr.mxu0 0.0
    %763 = vmatpush1.msra.mxu0 0.0
    %764 = vmatprep.subr.mxu0 0.0
    %765 = vmatpush1.msra.mxu0 0.0
    %766 = vmatprep.subr.mxu0 0.0
    %767 = vmatpush1.msra.mxu0 0.0
    %768 = vmatprep.subr.mxu0 0.0
    %769 = vmatpush1.msra.mxu0 0.0
    %770 = vmatprep.subr.mxu0 0.0
    %771 = vmatpush1.msra.mxu0 0.0
    %772 = vmatprep.subr.mxu0 0.0
    %773 = vmatpush1.msra.mxu0 0.0
    %774 = vmatprep.subr.mxu0 0.0
    %775 = vmatpush1.msra.mxu0 0.0
    %776 = vmatprep.subr.mxu0 0.0
    %777 = vmatpush1.msra.mxu0 0.0
    %778 = vmatprep.subr.mxu0 0.0
    %779 = vmatpush1.msra.mxu0 0.0
    %780 = vmatprep.subr.mxu0 0.0
    %781 = vmatpush1.msra.mxu0 0.0
    %782 = vmatprep.subr.mxu0 0.0
    %783 = vmatpush1.msra.mxu0 0.0
    %784 = vmatprep.subr.mxu0 0.0
    %785 = vmatpush1.msra.mxu0 0.0
    %786 = vmatprep.subr.mxu0 0.0
    %787 = vmatpush1.msra.mxu0 %v564
    %788 = vmatprep.subr.mxu0 0.0
    %789 = vmatpush1.msra.mxu0 %v563
    %790 = vmatprep.subr.mxu0 0.0
    %791 = vmatpush1.msra.mxu0 %v562
    %792 = vmatprep.subr.mxu0 0.0
    %793 = vmatpush1.msra.mxu0 %v561
    %794 = vmatprep.subr.mxu0 0.0
    %795 = vmatpush2.msra.mxu0 0.0
    %796 = vmatprep.subr.mxu0 0.0
    %797 = vmatpush2.msra.mxu0 0.0
    %798 = vmatprep.subr.mxu0 0.0
    %799 = vmatpush2.msra.mxu0 0.0
    %800 = vmatprep.subr.mxu0 0.0
    %801 = vmatpush2.msra.mxu0 0.0
    %802 = vmatprep.subr.mxu0 0.0
    %803 = vmatpush2.msra.mxu0 0.0
    %804 = vmatprep.subr.mxu0 0.0
    %805 = vmatpush2.msra.mxu0 0.0
    %806 = vmatprep.subr.mxu0 0.0
    %807 = vmatpush2.msra.mxu0 0.0
    %808 = vmatprep.subr.mxu0 0.0
    %809 = vmatpush2.msra.mxu0 0.0
    %810 = vmatprep.subr.mxu0 0.0
    %811 = vmatpush2.msra.mxu0 0.0
    %812 = vmatprep.subr.mxu0 0.0
    %813 = vmatpush2.msra.mxu0 0.0
    %814 = vmatprep.subr.mxu0 0.0
    %815 = vmatpush2.msra.mxu0 0.0
    %816 = vmatprep.subr.mxu0 0.0
    %817 = vmatpush2.msra.mxu0 0.0
    %818 = vmatprep.subr.mxu0 0.0
    %819 = vmatpush2.msra.mxu0 0.0
    %820 = vmatprep.subr.mxu0 0.0
    %821 = vmatpush2.msra.mxu0 0.0
    %822 = vmatprep.subr.mxu0 0.0
    %823 = vmatpush2.msra.mxu0 0.0
    %824 = vmatprep.subr.mxu0 0.0
    %825 = vmatpush2.msra.mxu0 0.0
    %826 = vmatprep.mubr.f32.mxu0 0.0
    %827 = vmatmul.mubr.f32.gmra.mxu0 %v607
    %v828 = vpop.f32.mrf.mxu0
    %v829 = vadd.f32 0.0, %v828
    %v830 = vpop.f32.mrf.mxu0
    %831 = vmatprep.mubr.f32.mxu0 0.0
    %832 = vmatmul.mubr.f32.gmra.mxu0 %v610
    %v833 = vpop.f32.mrf.mxu0
    %v834 = vadd.f32 0.0, %v833
    %v835 = vpop.f32.mrf.mxu0
    %836 = vdwg.mxu0
    %v837 = vmul.f32 %v679, %v505
    %v838 = vmul.f32 %v679, %v506
    %v839 = vmul.f32 %v679, %v507
    %v840 = vmul.f32 %v679, %v508
    %v841 = vmul.f32 %v679, %v509
    %v842 = vmul.f32 %v679, %v510
    %v843 = vmul.f32 %v679, %v511
    %v844 = vmul.f32 %v679, %v512
    %v845 = vmul.f32 %v684, %v505
    %v846 = vmul.f32 %v684, %v506
    %v847 = vmul.f32 %v684, %v507
    %v848 = vmul.f32 %v684, %v508
    %v849 = vmul.f32 %v684, %v509
    %v850 = vmul.f32 %v684, %v510
    %v851 = vmul.f32 %v684, %v511
    %v852 = vmul.f32 %v684, %v512
    %v854 = vsel %vm605, %v837, 0
    %v857 = vsel %vm605, %v838, 0
    %v860 = vsel %vm605, %v839, 0
    %v863 = vsel %vm605, %v840, 0
    %v866 = vsel %vm605, %v841, 0
    %v869 = vsel %vm605, %v842, 0
    %v872 = vsel %vm605, %v843, 0
    %v875 = vsel %vm605, %v844, 0
    %v878 = vsel %vm605, %v754, 0
    %880 = vmatprep.subr.mxu0 0.0
    %881 = vmatpush1.xpose.msra.mxu0 0.0
    %882 = vmatprep.subr.mxu0 0.0
    %883 = vmatpush1.xpose.msra.mxu0 0.0
    %884 = vmatprep.subr.mxu0 0.0
    %885 = vmatpush1.xpose.msra.mxu0 0.0
    %886 = vmatprep.subr.mxu0 0.0
    %887 = vmatpush1.xpose.msra.mxu0 0.0
    %888 = vmatprep.subr.mxu0 0.0
    %889 = vmatpush1.xpose.msra.mxu0 0.0
    %890 = vmatprep.subr.mxu0 0.0
    %891 = vmatpush1.xpose.msra.mxu0 0.0
    %892 = vmatprep.subr.mxu0 0.0
    %893 = vmatpush1.xpose.msra.mxu0 0.0
    %894 = vmatprep.subr.mxu0 0.0
    %895 = vmatpush1.xpose.msra.mxu0 0.0
    %896 = vmatprep.subr.mxu0 0.0
    %897 = vmatpush1.xpose.msra.mxu0 0.0
    %898 = vmatprep.subr.mxu0 0.0
    %899 = vmatpush1.xpose.msra.mxu0 0.0
    %900 = vmatprep.subr.mxu0 0.0
    %901 = vmatpush1.xpose.msra.mxu0 0.0
    %902 = vmatprep.subr.mxu0 0.0
    %903 = vmatpush1.xpose.msra.mxu0 0.0
    %904 = vmatprep.subr.mxu0 0.0
    %905 = vmatpush1.xpose.msra.mxu0 0.0
    %906 = vmatprep.subr.mxu0 0.0
    %907 = vmatpush1.xpose.msra.mxu0 0.0
    %908 = vmatprep.subr.mxu0 0.0
    %909 = vmatpush1.xpose.msra.mxu0 0.0
    %910 = vmatprep.subr.mxu0 0.0
    %911 = vmatpush1.xpose.msra.mxu0 %v878
    %912 = vmatprep.subr.mxu0 0.0
    %913 = vmatpush2.xpose.msra.mxu0 0.0
    %914 = vmatprep.subr.mxu0 0.0
    %915 = vmatpush2.xpose.msra.mxu0 0.0
    %916 = vmatprep.subr.mxu0 0.0
    %917 = vmatpush2.xpose.msra.mxu0 0.0
    %918 = vmatprep.subr.mxu0 0.0
    %919 = vmatpush2.xpose.msra.mxu0 0.0
    %920 = vmatprep.subr.mxu0 0.0
    %921 = vmatpush2.xpose.msra.mxu0 0.0
    %922 = vmatprep.subr.mxu0 0.0
    %923 = vmatpush2.xpose.msra.mxu0 0.0
    %924 = vmatprep.subr.mxu0 0.0
    %925 = vmatpush2.xpose.msra.mxu0 0.0
    %926 = vmatprep.subr.mxu0 0.0
    %927 = vmatpush2.xpose.msra.mxu0 0.0
    %928 = vmatprep.subr.mxu0 0.0
    %929 = vmatpush2.xpose.msra.mxu0 0.0
    %930 = vmatprep.subr.mxu0 0.0
    %931 = vmatpush2.xpose.msra.mxu0 0.0
    %932 = vmatprep.subr.mxu0 0.0
    %933 = vmatpush2.xpose.msra.mxu0 0.0
    %934 = vmatprep.subr.mxu0 0.0
    %935 = vmatpush2.xpose.msra.mxu0 0.0
    %936 = vmatprep.subr.mxu0 0.0
    %937 = vmatpush2.xpose.msra.mxu0 0.0
    %938 = vmatprep.subr.mxu0 0.0
    %939 = vmatpush2.xpose.msra.mxu0 0.0
    %940 = vmatprep.subr.mxu0 0.0
    %941 = vmatpush2.xpose.msra.mxu0 0.0
    %942 = vmatprep.subr.mxu0 0.0
    %943 = vmatpush2.xpose.msra.mxu0 0.0
    %944 = vmatprep.mubr.f32.mxu0 0.0
    %945 = vmatmul.mubr.f32.gmra.mxu0 %v854
    %v946 = vpop.f32.mrf.mxu0
    %v947 = vadd.f32 0.0, %v946
    %v948 = vpop.f32.mrf.mxu0
    %949 = vmatprep.mubr.f32.mxu0 0.0
    %950 = vmatmul.mubr.f32.gmra.mxu0 %v857
    %v951 = vpop.f32.mrf.mxu0
    %v952 = vadd.f32 0.0, %v951
    %v953 = vpop.f32.mrf.mxu0
    %954 = vmatprep.mubr.f32.mxu0 0.0
    %955 = vmatmul.mubr.f32.gmra.mxu0 %v860
    %v956 = vpop.f32.mrf.mxu0
    %v957 = vadd.f32 0.0, %v956
    %v958 = vpop.f32.mrf.mxu0
    %959 = vmatprep.mubr.f32.mxu0 0.0
    %960 = vmatmul.mubr.f32.gmra.mxu0 %v863
    %v961 = vpop.f32.mrf.mxu0
    %v962 = vadd.f32 0.0, %v961
    %v963 = vpop.f32.mrf.mxu0
    %964 = vmatprep.mubr.f32.mxu0 0.0
    %965 = vmatmul.mubr.f32.gmra.mxu0 %v866
    %v966 = vpop.f32.mrf.mxu0
    %v967 = vadd.f32 0.0, %v966
    %v968 = vpop.f32.mrf.mxu0
    %969 = vmatprep.mubr.f32.mxu0 0.0
    %970 = vmatmul.mubr.f32.gmra.mxu0 %v869
    %v971 = vpop.f32.mrf.mxu0
    %v972 = vadd.f32 0.0, %v971
    %v973 = vpop.f32.mrf.mxu0
    %974 = vmatprep.mubr.f32.mxu0 0.0
    %975 = vmatmul.mubr.f32.gmra.mxu0 %v872
    %v976 = vpop.f32.mrf.mxu0
    %v977 = vadd.f32 0.0, %v976
    %v978 = vpop.f32.mrf.mxu0
    %979 = vmatprep.mubr.f32.mxu0 0.0
    %980 = vmatmul.mubr.f32.gmra.mxu0 %v875
    %v981 = vpop.f32.mrf.mxu0
    %v982 = vadd.f32 0.0, %v981
    %v983 = vpop.f32.mrf.mxu0
    %984 = vdwg.mxu0
    %v986 = vsel %vm605, %v845, 0
    %v989 = vsel %vm605, %v846, 0
    %v992 = vsel %vm605, %v847, 0
    %v995 = vsel %vm605, %v848, 0
    %v998 = vsel %vm605, %v849, 0
    %v1001 = vsel %vm605, %v850, 0
    %v1004 = vsel %vm605, %v851, 0
    %v1007 = vsel %vm605, %v852, 0
    %v1010 = vsel %vm605, %v759, 0
    %1012 = vmatprep.subr.mxu0 0.0
    %1013 = vmatpush1.xpose.msra.mxu0 0.0
    %1014 = vmatprep.subr.mxu0 0.0
    %1015 = vmatpush1.xpose.msra.mxu0 0.0
    %1016 = vmatprep.subr.mxu0 0.0
    %1017 = vmatpush1.xpose.msra.mxu0 0.0
    %1018 = vmatprep.subr.mxu0 0.0
    %1019 = vmatpush1.xpose.msra.mxu0 0.0
    %1020 = vmatprep.subr.mxu0 0.0
    %1021 = vmatpush1.xpose.msra.mxu0 0.0
    %1022 = vmatprep.subr.mxu0 0.0
    %1023 = vmatpush1.xpose.msra.mxu0 0.0
    %1024 = vmatprep.subr.mxu0 0.0
    %1025 = vmatpush1.xpose.msra.mxu0 0.0
    %1026 = vmatprep.subr.mxu0 0.0
    %1027 = vmatpush1.xpose.msra.mxu0 0.0
    %1028 = vmatprep.subr.mxu0 0.0
    %1029 = vmatpush1.xpose.msra.mxu0 0.0
    %1030 = vmatprep.subr.mxu0 0.0
    %1031 = vmatpush1.xpose.msra.mxu0 0.0
    %1032 = vmatprep.subr.mxu0 0.0
    %1033 = vmatpush1.xpose.msra.mxu0 0.0
    %1034 = vmatprep.subr.mxu0 0.0
    %1035 = vmatpush1.xpose.msra.mxu0 0.0
    %1036 = vmatprep.subr.mxu0 0.0
    %1037 = vmatpush1.xpose.msra.mxu0 0.0
    %1038 = vmatprep.subr.mxu0 0.0
    %1039 = vmatpush1.xpose.msra.mxu0 0.0
    %1040 = vmatprep.subr.mxu0 0.0
    %1041 = vmatpush1.xpose.msra.mxu0 0.0
    %1042 = vmatprep.subr.mxu0 0.0
    %1043 = vmatpush1.xpose.msra.mxu0 %v1010
    %1044 = vmatprep.subr.mxu0 0.0
    %1045 = vmatpush2.xpose.msra.mxu0 0.0
    %1046 = vmatprep.subr.mxu0 0.0
    %1047 = vmatpush2.xpose.msra.mxu0 0.0
    %1048 = vmatprep.subr.mxu0 0.0
    %1049 = vmatpush2.xpose.msra.mxu0 0.0
    %1050 = vmatprep.subr.mxu0 0.0
    %1051 = vmatpush2.xpose.msra.mxu0 0.0
    %1052 = vmatprep.subr.mxu0 0.0
    %1053 = vmatpush2.xpose.msra.mxu0 0.0
    %1054 = vmatprep.subr.mxu0 0.0
    %1055 = vmatpush2.xpose.msra.mxu0 0.0
    %1056 = vmatprep.subr.mxu0 0.0
    %1057 = vmatpush2.xpose.msra.mxu0 0.0
    %1058 = vmatprep.subr.mxu0 0.0
    %1059 = vmatpush2.xpose.msra.mxu0 0.0
    %1060 = vmatprep.subr.mxu0 0.0
    %1061 = vmatpush2.xpose.msra.mxu0 0.0
    %1062 = vmatprep.subr.mxu0 0.0
    %1063 = vmatpush2.xpose.msra.mxu0 0.0
    %1064 = vmatprep.subr.mxu0 0.0
    %1065 = vmatpush2.xpose.msra.mxu0 0.0
    %1066 = vmatprep.subr.mxu0 0.0
    %1067 = vmatpush2.xpose.msra.mxu0 0.0
    %1068 = vmatprep.subr.mxu0 0.0
    %1069 = vmatpush2.xpose.msra.mxu0 0.0
    %1070 = vmatprep.subr.mxu0 0.0
    %1071 = vmatpush2.xpose.msra.mxu0 0.0
    %1072 = vmatprep.subr.mxu0 0.0
    %1073 = vmatpush2.xpose.msra.mxu0 0.0
    %1074 = vmatprep.subr.mxu0 0.0
    %1075 = vmatpush2.xpose.msra.mxu0 0.0
    %1076 = vmatprep.mubr.f32.mxu0 0.0
    %1077 = vmatmul.mubr.f32.gmra.mxu0 %v986
    %v1078 = vpop.f32.mrf.mxu0
    %v1079 = vadd.f32 0.0, %v1078
    %v1080 = vpop.f32.mrf.mxu0
    %1081 = vmatprep.mubr.f32.mxu0 0.0
    %1082 = vmatmul.mubr.f32.gmra.mxu0 %v989
    %v1083 = vpop.f32.mrf.mxu0
    %v1084 = vadd.f32 0.0, %v1083
    %v1085 = vpop.f32.mrf.mxu0
    %1086 = vmatprep.mubr.f32.mxu0 0.0
    %1087 = vmatmul.mubr.f32.gmra.mxu0 %v992
    %v1088 = vpop.f32.mrf.mxu0
    %v1089 = vadd.f32 0.0, %v1088
    %v1090 = vpop.f32.mrf.mxu0
    %1091 = vmatprep.mubr.f32.mxu0 0.0
    %1092 = vmatmul.mubr.f32.gmra.mxu0 %v995
    %v1093 = vpop.f32.mrf.mxu0
    %v1094 = vadd.f32 0.0, %v1093
    %v1095 = vpop.f32.mrf.mxu0
    %1096 = vmatprep.mubr.f32.mxu0 0.0
    %1097 = vmatmul.mubr.f32.gmra.mxu0 %v998
    %v1098 = vpop.f32.mrf.mxu0
    %v1099 = vadd.f32 0.0, %v1098
    %v1100 = vpop.f32.mrf.mxu0
    %1101 = vmatprep.mubr.f32.mxu0 0.0
    %1102 = vmatmul.mubr.f32.gmra.mxu0 %v1001
    %v1103 = vpop.f32.mrf.mxu0
    %v1104 = vadd.f32 0.0, %v1103
    %v1105 = vpop.f32.mrf.mxu0
    %1106 = vmatprep.mubr.f32.mxu0 0.0
    %1107 = vmatmul.mubr.f32.gmra.mxu0 %v1004
    %v1108 = vpop.f32.mrf.mxu0
    %v1109 = vadd.f32 0.0, %v1108
    %v1110 = vpop.f32.mrf.mxu0
    %1111 = vmatprep.mubr.f32.mxu0 0.0
    %1112 = vmatmul.mubr.f32.gmra.mxu0 %v1007
    %v1113 = vpop.f32.mrf.mxu0
    %v1114 = vadd.f32 0.0, %v1113
    %v1115 = vpop.f32.mrf.mxu0
    %1116 = vdwg.mxu0
    %v1117 = vsel %vm518, 1, 0
    %vm1118 = vcmp.eq.s32.totalorder %v1117, 1
    %v1119 = vsel %vm1118, -1e+20, %v947
    %v1120 = vsel %vm1118, -1e+20, %v952
    %v1121 = vsel %vm1118, -1e+20, %v957
    %v1122 = vsel %vm1118, -1e+20, %v962
    %v1123 = vsel %vm1118, -1e+20, %v967
    %v1124 = vsel %vm1118, -1e+20, %v972
    %v1125 = vsel %vm1118, -1e+20, %v977
    %v1126 = vsel %vm1118, -1e+20, %v982
    %v1127 = vsel %vm1118, -1e+20, %v1079
    %v1128 = vsel %vm1118, -1e+20, %v1084
    %v1129 = vsel %vm1118, -1e+20, %v1089
    %v1130 = vsel %vm1118, -1e+20, %v1094
    %v1131 = vsel %vm1118, -1e+20, %v1099
    %v1132 = vsel %vm1118, -1e+20, %v1104
    %v1133 = vsel %vm1118, -1e+20, %v1109
    %v1134 = vsel %vm1118, -1e+20, %v1114
    %v1135 = vmul.f32 %v1119, 0.5
    %v1136 = vmul.f32 %v1120, 0.5
    %v1137 = vmul.f32 %v1121, 0.5
    %v1138 = vmul.f32 %v1122, 0.5
    %v1139 = vmul.f32 %v1123, 0.5
    %v1140 = vmul.f32 %v1124, 0.5
    %v1141 = vmul.f32 %v1125, 0.5
    %v1142 = vmul.f32 %v1126, 0.5
    %v1143 = vmul.f32 %v1127, 0.5
    %v1144 = vmul.f32 %v1128, 0.5
    %v1145 = vmul.f32 %v1129, 0.5
    %v1146 = vmul.f32 %v1130, 0.5
    %v1147 = vmul.f32 %v1131, 0.5
    %v1148 = vmul.f32 %v1132, 0.5
    %v1149 = vmul.f32 %v1133, 0.5
    %v1150 = vmul.f32 %v1134, 0.5
    %vm1151 = vcmask 64512
    %v1152 = vsel %vm1151, %v1135, -inf
    %1153 = vmax.xlane.f32.xlu0 %v1152
    %v1154 = vpop.xlane.xlu0 %1153
    %v1155 = vsel %vm1151, %v1136, -inf
    %1156 = vmax.xlane.f32.xlu0 %v1155
    %v1157 = vpop.xlane.xlu0 %1156
    %v1158 = vsel %vm1151, %v1137, -inf
    %1159 = vmax.xlane.f32.xlu0 %v1158
    %v1160 = vpop.xlane.xlu0 %1159
    %v1161 = vsel %vm1151, %v1138, -inf
    %1162 = vmax.xlane.f32.xlu0 %v1161
    %v1163 = vpop.xlane.xlu0 %1162
    %v1164 = vsel %vm1151, %v1139, -inf
    %1165 = vmax.xlane.f32.xlu0 %v1164
    %v1166 = vpop.xlane.xlu0 %1165
    %v1167 = vsel %vm1151, %v1140, -inf
    %1168 = vmax.xlane.f32.xlu0 %v1167
    %v1169 = vpop.xlane.xlu0 %1168
    %v1170 = vsel %vm1151, %v1141, -inf
    %1171 = vmax.xlane.f32.xlu0 %v1170
    %v1172 = vpop.xlane.xlu0 %1171
    %v1173 = vsel %vm1151, %v1142, -inf
    %1174 = vmax.xlane.f32.xlu0 %v1173
    %v1175 = vpop.xlane.xlu0 %1174
    %v1176 = vsel %vm1151, %v1143, -inf
    %1177 = vmax.xlane.f32.xlu0 %v1176
    %v1178 = vpop.xlane.xlu0 %1177
    %v1179 = vsel %vm1151, %v1144, -inf
    %1180 = vmax.xlane.f32.xlu0 %v1179
    %v1181 = vpop.xlane.xlu0 %1180
    %v1182 = vsel %vm1151, %v1145, -inf
    %1183 = vmax.xlane.f32.xlu0 %v1182
    %v1184 = vpop.xlane.xlu0 %1183
    %v1185 = vsel %vm1151, %v1146, -inf
    %1186 = vmax.xlane.f32.xlu0 %v1185
    %v1187 = vpop.xlane.xlu0 %1186
    %v1188 = vsel %vm1151, %v1147, -inf
    %1189 = vmax.xlane.f32.xlu0 %v1188
    %v1190 = vpop.xlane.xlu0 %1189
    %v1191 = vsel %vm1151, %v1148, -inf
    %1192 = vmax.xlane.f32.xlu0 %v1191
    %v1193 = vpop.xlane.xlu0 %1192
    %v1194 = vsel %vm1151, %v1149, -inf
    %1195 = vmax.xlane.f32.xlu0 %v1194
    %v1196 = vpop.xlane.xlu0 %1195
    %v1197 = vsel %vm1151, %v1150, -inf
    %1198 = vmax.xlane.f32.xlu0 %v1197
    %v1199 = vpop.xlane.xlu0 %1198
    %v1200 = vsub.f32 %v1135, %v1154
    %v1201 = vsub.f32 %v1136, %v1157
    %v1202 = vsub.f32 %v1137, %v1160
    %v1203 = vsub.f32 %v1138, %v1163
    %v1204 = vsub.f32 %v1139, %v1166
    %v1205 = vsub.f32 %v1140, %v1169
    %v1206 = vsub.f32 %v1141, %v1172
    %v1207 = vsub.f32 %v1142, %v1175
    %v1208 = vsub.f32 %v1143, %v1178
    %v1209 = vsub.f32 %v1144, %v1181
    %v1210 = vsub.f32 %v1145, %v1184
    %v1211 = vsub.f32 %v1146, %v1187
    %v1212 = vsub.f32 %v1147, %v1190
    %v1213 = vsub.f32 %v1148, %v1193
    %v1214 = vsub.f32 %v1149, %v1196
    %v1215 = vsub.f32 %v1150, %v1199
    %v1216 = vmul.f32 %v1200, 1.442695
    %v1217 = vpow.pop %v1216
    %v1218 = vmul.f32 %v1201, 1.442695
    %v1219 = vpow.pop %v1218
    %v1220 = vmul.f32 %v1202, 1.442695
    %v1221 = vpow.pop %v1220
    %v1222 = vmul.f32 %v1203, 1.442695
    %v1223 = vpow.pop %v1222
    %v1224 = vmul.f32 %v1204, 1.442695
    %v1225 = vpow.pop %v1224
    %v1226 = vmul.f32 %v1205, 1.442695
    %v1227 = vpow.pop %v1226
    %v1228 = vmul.f32 %v1206, 1.442695
    %v1229 = vpow.pop %v1228
    %v1230 = vmul.f32 %v1207, 1.442695
    %v1231 = vpow.pop %v1230
    %v1232 = vmul.f32 %v1208, 1.442695
    %v1233 = vpow.pop %v1232
    %v1234 = vmul.f32 %v1209, 1.442695
    %v1235 = vpow.pop %v1234
    %v1236 = vmul.f32 %v1210, 1.442695
    %v1237 = vpow.pop %v1236
    %v1238 = vmul.f32 %v1211, 1.442695
    %v1239 = vpow.pop %v1238
    %v1240 = vmul.f32 %v1212, 1.442695
    %v1241 = vpow.pop %v1240
    %v1242 = vmul.f32 %v1213, 1.442695
    %v1243 = vpow.pop %v1242
    %v1244 = vmul.f32 %v1214, 1.442695
    %v1245 = vpow.pop %v1244
    %v1246 = vmul.f32 %v1215, 1.442695
    %v1247 = vpow.pop %v1246
    %v1248 = vsel %vm1151, %v1217, 0.0
    %1249 = vadd.xlane.f32.xlu0 %v1248
    %v1250 = vpop.xlane.xlu0 %1249
    %v1251 = vsel %vm1151, %v1219, 0.0
    %1252 = vadd.xlane.f32.xlu0 %v1251
    %v1253 = vpop.xlane.xlu0 %1252
    %v1254 = vsel %vm1151, %v1221, 0.0
    %1255 = vadd.xlane.f32.xlu0 %v1254
    %v1256 = vpop.xlane.xlu0 %1255
    %v1257 = vsel %vm1151, %v1223, 0.0
    %1258 = vadd.xlane.f32.xlu0 %v1257
    %v1259 = vpop.xlane.xlu0 %1258
    %v1260 = vsel %vm1151, %v1225, 0.0
    %1261 = vadd.xlane.f32.xlu0 %v1260
    %v1262 = vpop.xlane.xlu0 %1261
    %v1263 = vsel %vm1151, %v1227, 0.0
    %1264 = vadd.xlane.f32.xlu0 %v1263
    %v1265 = vpop.xlane.xlu0 %1264
    %v1266 = vsel %vm1151, %v1229, 0.0
    %1267 = vadd.xlane.f32.xlu0 %v1266
    %v1268 = vpop.xlane.xlu0 %1267
    %v1269 = vsel %vm1151, %v1231, 0.0
    %1270 = vadd.xlane.f32.xlu0 %v1269
    %v1271 = vpop.xlane.xlu0 %1270
    %v1272 = vsel %vm1151, %v1233, 0.0
    %1273 = vadd.xlane.f32.xlu0 %v1272
    %v1274 = vpop.xlane.xlu0 %1273
    %v1275 = vsel %vm1151, %v1235, 0.0
    %1276 = vadd.xlane.f32.xlu0 %v1275
    %v1277 = vpop.xlane.xlu0 %1276
    %v1278 = vsel %vm1151, %v1237, 0.0
    %1279 = vadd.xlane.f32.xlu0 %v1278
    %v1280 = vpop.xlane.xlu0 %1279
    %v1281 = vsel %vm1151, %v1239, 0.0
    %1282 = vadd.xlane.f32.xlu0 %v1281
    %v1283 = vpop.xlane.xlu0 %1282
    %v1284 = vsel %vm1151, %v1241, 0.0
    %1285 = vadd.xlane.f32.xlu0 %v1284
    %v1286 = vpop.xlane.xlu0 %1285
    %v1287 = vsel %vm1151, %v1243, 0.0
    %1288 = vadd.xlane.f32.xlu0 %v1287
    %v1289 = vpop.xlane.xlu0 %1288
    %v1290 = vsel %vm1151, %v1245, 0.0
    %1291 = vadd.xlane.f32.xlu0 %v1290
    %v1292 = vpop.xlane.xlu0 %1291
    %v1293 = vsel %vm1151, %v1247, 0.0
    %1294 = vadd.xlane.f32.xlu0 %v1293
    %v1295 = vpop.xlane.xlu0 %1294
    %v1296 = vrcp.pop %v1250
    %v1297 = vrcp.pop %v1253
    %v1298 = vrcp.pop %v1256
    %v1299 = vrcp.pop %v1259
    %v1300 = vrcp.pop %v1262
    %v1301 = vrcp.pop %v1265
    %v1302 = vrcp.pop %v1268
    %v1303 = vrcp.pop %v1271
    %v1304 = vrcp.pop %v1274
    %v1305 = vrcp.pop %v1277
    %v1306 = vrcp.pop %v1280
    %v1307 = vrcp.pop %v1283
    %v1308 = vrcp.pop %v1286
    %v1309 = vrcp.pop %v1289
    %v1310 = vrcp.pop %v1292
    %v1311 = vrcp.pop %v1295
    %v1312 = vmul.f32 %v1217, %v1296
    %v1313 = vmul.f32 %v1219, %v1297
    %v1314 = vmul.f32 %v1221, %v1298
    %v1315 = vmul.f32 %v1223, %v1299
    %v1316 = vmul.f32 %v1225, %v1300
    %v1317 = vmul.f32 %v1227, %v1301
    %v1318 = vmul.f32 %v1229, %v1302
    %v1319 = vmul.f32 %v1231, %v1303
    %v1320 = vmul.f32 %v1233, %v1304
    %v1321 = vmul.f32 %v1235, %v1305
    %v1322 = vmul.f32 %v1237, %v1306
    %v1323 = vmul.f32 %v1239, %v1307
    %v1324 = vmul.f32 %v1241, %v1308
    %v1325 = vmul.f32 %v1243, %v1309
    %v1326 = vmul.f32 %v1245, %v1310
    %v1327 = vmul.f32 %v1247, %v1311
    %v1329 = vsel %vm1151, %v1312, 0
    %v1332 = vsel %vm1151, %v1313, 0
    %v1335 = vsel %vm1151, %v1314, 0
    %v1338 = vsel %vm1151, %v1315, 0
    %v1341 = vsel %vm1151, %v1316, 0
    %v1344 = vsel %vm1151, %v1317, 0
    %v1347 = vsel %vm1151, %v1318, 0
    %v1350 = vsel %vm1151, %v1319, 0
    %1352 = vmatprep.subr.mxu0 0.0
    %1353 = vmatpush1.msra.mxu0 0.0
    %1354 = vmatprep.subr.mxu0 0.0
    %1355 = vmatpush1.msra.mxu0 0.0
    %1356 = vmatprep.subr.mxu0 0.0
    %1357 = vmatpush1.msra.mxu0 0.0
    %1358 = vmatprep.subr.mxu0 0.0
    %1359 = vmatpush1.msra.mxu0 0.0
    %1360 = vmatprep.subr.mxu0 0.0
    %1361 = vmatpush1.msra.mxu0 0.0
    %1362 = vmatprep.subr.mxu0 0.0
    %1363 = vmatpush1.msra.mxu0 0.0
    %1364 = vmatprep.subr.mxu0 0.0
    %1365 = vmatpush1.msra.mxu0 0.0
    %1366 = vmatprep.subr.mxu0 0.0
    %1367 = vmatpush1.msra.mxu0 0.0
    %1368 = vmatprep.subr.mxu0 0.0
    %1369 = vmatpush1.msra.mxu0 0.0
    %1370 = vmatprep.subr.mxu0 0.0
    %1371 = vmatpush1.msra.mxu0 0.0
    %1372 = vmatprep.subr.mxu0 0.0
    %1373 = vmatpush1.msra.mxu0 0.0
    %1374 = vmatprep.subr.mxu0 0.0
    %1375 = vmatpush1.msra.mxu0 0.0
    %1376 = vmatprep.subr.mxu0 0.0
    %1377 = vmatpush1.msra.mxu0 0.0
    %1378 = vmatprep.subr.mxu0 0.0
    %1379 = vmatpush1.msra.mxu0 0.0
    %1380 = vmatprep.subr.mxu0 0.0
    %1381 = vmatpush1.msra.mxu0 0.0
    %1382 = vmatprep.subr.mxu0 0.0
    %1383 = vmatpush1.msra.mxu0 %v829
    %1384 = vmatprep.subr.mxu0 0.0
    %1385 = vmatpush2.msra.mxu0 0.0
    %1386 = vmatprep.subr.mxu0 0.0
    %1387 = vmatpush2.msra.mxu0 0.0
    %1388 = vmatprep.subr.mxu0 0.0
    %1389 = vmatpush2.msra.mxu0 0.0
    %1390 = vmatprep.subr.mxu0 0.0
    %1391 = vmatpush2.msra.mxu0 0.0
    %1392 = vmatprep.subr.mxu0 0.0
    %1393 = vmatpush2.msra.mxu0 0.0
    %1394 = vmatprep.subr.mxu0 0.0
    %1395 = vmatpush2.msra.mxu0 0.0
    %1396 = vmatprep.subr.mxu0 0.0
    %1397 = vmatpush2.msra.mxu0 0.0
    %1398 = vmatprep.subr.mxu0 0.0
    %1399 = vmatpush2.msra.mxu0 0.0
    %1400 = vmatprep.subr.mxu0 0.0
    %1401 = vmatpush2.msra.mxu0 0.0
    %1402 = vmatprep.subr.mxu0 0.0
    %1403 = vmatpush2.msra.mxu0 0.0
    %1404 = vmatprep.subr.mxu0 0.0
    %1405 = vmatpush2.msra.mxu0 0.0
    %1406 = vmatprep.subr.mxu0 0.0
    %1407 = vmatpush2.msra.mxu0 0.0
    %1408 = vmatprep.subr.mxu0 0.0
    %1409 = vmatpush2.msra.mxu0 0.0
    %1410 = vmatprep.subr.mxu0 0.0
    %1411 = vmatpush2.msra.mxu0 0.0
    %1412 = vmatprep.subr.mxu0 0.0
    %1413 = vmatpush2.msra.mxu0 0.0
    %1414 = vmatprep.subr.mxu0 0.0
    %1415 = vmatpush2.msra.mxu0 0.0
    %1416 = vmatprep.mubr.f32.mxu0 0.0
    %1417 = vmatmul.mubr.f32.gmra.mxu0 %v1329
    %v1418 = vpop.f32.mrf.mxu0
    %v1419 = vadd.f32 0.0, %v1418
    %v1420 = vpop.f32.mrf.mxu0
    %1421 = vmatprep.mubr.f32.mxu0 0.0
    %1422 = vmatmul.mubr.f32.gmra.mxu0 %v1332
    %v1423 = vpop.f32.mrf.mxu0
    %v1424 = vadd.f32 0.0, %v1423
    %v1425 = vpop.f32.mrf.mxu0
    %1426 = vmatprep.mubr.f32.mxu0 0.0
    %1427 = vmatmul.mubr.f32.gmra.mxu0 %v1335
    %v1428 = vpop.f32.mrf.mxu0
    %v1429 = vadd.f32 0.0, %v1428
    %v1430 = vpop.f32.mrf.mxu0
    %1431 = vmatprep.mubr.f32.mxu0 0.0
    %1432 = vmatmul.mubr.f32.gmra.mxu0 %v1338
    %v1433 = vpop.f32.mrf.mxu0
    %v1434 = vadd.f32 0.0, %v1433
    %v1435 = vpop.f32.mrf.mxu0
    %1436 = vmatprep.mubr.f32.mxu0 0.0
    %1437 = vmatmul.mubr.f32.gmra.mxu0 %v1341
    %v1438 = vpop.f32.mrf.mxu0
    %v1439 = vadd.f32 0.0, %v1438
    %v1440 = vpop.f32.mrf.mxu0
    %1441 = vmatprep.mubr.f32.mxu0 0.0
    %1442 = vmatmul.mubr.f32.gmra.mxu0 %v1344
    %v1443 = vpop.f32.mrf.mxu0
    %v1444 = vadd.f32 0.0, %v1443
    %v1445 = vpop.f32.mrf.mxu0
    %1446 = vmatprep.mubr.f32.mxu0 0.0
    %1447 = vmatmul.mubr.f32.gmra.mxu0 %v1347
    %v1448 = vpop.f32.mrf.mxu0
    %v1449 = vadd.f32 0.0, %v1448
    %v1450 = vpop.f32.mrf.mxu0
    %1451 = vmatprep.mubr.f32.mxu0 0.0
    %1452 = vmatmul.mubr.f32.gmra.mxu0 %v1350
    %v1453 = vpop.f32.mrf.mxu0
    %v1454 = vadd.f32 0.0, %v1453
    %v1455 = vpop.f32.mrf.mxu0
    %1456 = vdwg.mxu0
    %v1458 = vsel %vm1151, %v1320, 0
    %v1461 = vsel %vm1151, %v1321, 0
    %v1464 = vsel %vm1151, %v1322, 0
    %v1467 = vsel %vm1151, %v1323, 0
    %v1470 = vsel %vm1151, %v1324, 0
    %v1473 = vsel %vm1151, %v1325, 0
    %v1476 = vsel %vm1151, %v1326, 0
    %v1479 = vsel %vm1151, %v1327, 0
    %1481 = vmatprep.subr.mxu0 0.0
    %1482 = vmatpush1.msra.mxu0 0.0
    %1483 = vmatprep.subr.mxu0 0.0
    %1484 = vmatpush1.msra.mxu0 0.0
    %1485 = vmatprep.subr.mxu0 0.0
    %1486 = vmatpush1.msra.mxu0 0.0
    %1487 = vmatprep.subr.mxu0 0.0
    %1488 = vmatpush1.msra.mxu0 0.0
    %1489 = vmatprep.subr.mxu0 0.0
    %1490 = vmatpush1.msra.mxu0 0.0
    %1491 = vmatprep.subr.mxu0 0.0
    %1492 = vmatpush1.msra.mxu0 0.0
    %1493 = vmatprep.subr.mxu0 0.0
    %1494 = vmatpush1.msra.mxu0 0.0
    %1495 = vmatprep.subr.mxu0 0.0
    %1496 = vmatpush1.msra.mxu0 0.0
    %1497 = vmatprep.subr.mxu0 0.0
    %1498 = vmatpush1.msra.mxu0 0.0
    %1499 = vmatprep.subr.mxu0 0.0
    %1500 = vmatpush1.msra.mxu0 0.0
    %1501 = vmatprep.subr.mxu0 0.0
    %1502 = vmatpush1.msra.mxu0 0.0
    %1503 = vmatprep.subr.mxu0 0.0
    %1504 = vmatpush1.msra.mxu0 0.0
    %1505 = vmatprep.subr.mxu0 0.0
    %1506 = vmatpush1.msra.mxu0 0.0
    %1507 = vmatprep.subr.mxu0 0.0
    %1508 = vmatpush1.msra.mxu0 0.0
    %1509 = vmatprep.subr.mxu0 0.0
    %1510 = vmatpush1.msra.mxu0 0.0
    %1511 = vmatprep.subr.mxu0 0.0
    %1512 = vmatpush1.msra.mxu0 %v834
    %1513 = vmatprep.subr.mxu0 0.0
    %1514 = vmatpush2.msra.mxu0 0.0
    %1515 = vmatprep.subr.mxu0 0.0
    %1516 = vmatpush2.msra.mxu0 0.0
    %1517 = vmatprep.subr.mxu0 0.0
    %1518 = vmatpush2.msra.mxu0 0.0
    %1519 = vmatprep.subr.mxu0 0.0
    %1520 = vmatpush2.msra.mxu0 0.0
    %1521 = vmatprep.subr.mxu0 0.0
    %1522 = vmatpush2.msra.mxu0 0.0
    %1523 = vmatprep.subr.mxu0 0.0
    %1524 = vmatpush2.msra.mxu0 0.0
    %1525 = vmatprep.subr.mxu0 0.0
    %1526 = vmatpush2.msra.mxu0 0.0
    %1527 = vmatprep.subr.mxu0 0.0
    %1528 = vmatpush2.msra.mxu0 0.0
    %1529 = vmatprep.subr.mxu0 0.0
    %1530 = vmatpush2.msra.mxu0 0.0
    %1531 = vmatprep.subr.mxu0 0.0
    %1532 = vmatpush2.msra.mxu0 0.0
    %1533 = vmatprep.subr.mxu0 0.0
    %1534 = vmatpush2.msra.mxu0 0.0
    %1535 = vmatprep.subr.mxu0 0.0
    %1536 = vmatpush2.msra.mxu0 0.0
    %1537 = vmatprep.subr.mxu0 0.0
    %1538 = vmatpush2.msra.mxu0 0.0
    %1539 = vmatprep.subr.mxu0 0.0
    %1540 = vmatpush2.msra.mxu0 0.0
    %1541 = vmatprep.subr.mxu0 0.0
    %1542 = vmatpush2.msra.mxu0 0.0
    %1543 = vmatprep.subr.mxu0 0.0
    %1544 = vmatpush2.msra.mxu0 0.0
    %1545 = vmatprep.mubr.f32.mxu0 0.0
    %1546 = vmatmul.mubr.f32.gmra.mxu0 %v1458
    %v1547 = vpop.f32.mrf.mxu0
    %v1548 = vadd.f32 0.0, %v1547
    %v1549 = vpop.f32.mrf.mxu0
    %1550 = vmatprep.mubr.f32.mxu0 0.0
    %1551 = vmatmul.mubr.f32.gmra.mxu0 %v1461
    %v1552 = vpop.f32.mrf.mxu0
    %v1553 = vadd.f32 0.0, %v1552
    %v1554 = vpop.f32.mrf.mxu0
    %1555 = vmatprep.mubr.f32.mxu0 0.0
    %1556 = vmatmul.mubr.f32.gmra.mxu0 %v1464
    %v1557 = vpop.f32.mrf.mxu0
    %v1558 = vadd.f32 0.0, %v1557
    %v1559 = vpop.f32.mrf.mxu0
    %1560 = vmatprep.mubr.f32.mxu0 0.0
    %1561 = vmatmul.mubr.f32.gmra.mxu0 %v1467
    %v1562 = vpop.f32.mrf.mxu0
    %v1563 = vadd.f32 0.0, %v1562
    %v1564 = vpop.f32.mrf.mxu0
    %1565 = vmatprep.mubr.f32.mxu0 0.0
    %1566 = vmatmul.mubr.f32.gmra.mxu0 %v1470
    %v1567 = vpop.f32.mrf.mxu0
    %v1568 = vadd.f32 0.0, %v1567
    %v1569 = vpop.f32.mrf.mxu0
    %1570 = vmatprep.mubr.f32.mxu0 0.0
    %1571 = vmatmul.mubr.f32.gmra.mxu0 %v1473
    %v1572 = vpop.f32.mrf.mxu0
    %v1573 = vadd.f32 0.0, %v1572
    %v1574 = vpop.f32.mrf.mxu0
    %1575 = vmatprep.mubr.f32.mxu0 0.0
    %1576 = vmatmul.mubr.f32.gmra.mxu0 %v1476
    %v1577 = vpop.f32.mrf.mxu0
    %v1578 = vadd.f32 0.0, %v1577
    %v1579 = vpop.f32.mrf.mxu0
    %1580 = vmatprep.mubr.f32.mxu0 0.0
    %1581 = vmatmul.mubr.f32.gmra.mxu0 %v1479
    %v1582 = vpop.f32.mrf.mxu0
    %v1583 = vadd.f32 0.0, %v1582
    %v1584 = vpop.f32.mrf.mxu0
    %1585 = vdwg.mxu0
    %v1586 = vmul.f32 %v1419, %v505
    %v1587 = vmul.f32 %v1424, %v506
    %v1588 = vmul.f32 %v1429, %v507
    %v1589 = vmul.f32 %v1434, %v508
    %v1590 = vmul.f32 %v1439, %v509
    %v1591 = vmul.f32 %v1444, %v510
    %v1592 = vmul.f32 %v1449, %v511
    %v1593 = vmul.f32 %v1454, %v512
    %v1594 = vmul.f32 %v1548, %v505
    %v1595 = vmul.f32 %v1553, %v506
    %v1596 = vmul.f32 %v1558, %v507
    %v1597 = vmul.f32 %v1563, %v508
    %v1598 = vmul.f32 %v1568, %v509
    %v1599 = vmul.f32 %v1573, %v510
    %v1600 = vmul.f32 %v1578, %v511
    %v1601 = vmul.f32 %v1583, %v512
    %v1602 = vadd.f32 %v1586, %v1587
    %v1603 = vadd.f32 %v1594, %v1595
    %v1604 = vadd.f32 %v1602, %v1588
    %v1605 = vadd.f32 %v1603, %v1596
    %v1606 = vadd.f32 %v1604, %v1589
    %v1607 = vadd.f32 %v1605, %v1597
    %v1608 = vadd.f32 %v1606, %v1590
    %v1609 = vadd.f32 %v1607, %v1598
    %v1610 = vadd.f32 %v1608, %v1591
    %v1611 = vadd.f32 %v1609, %v1599
    %v1612 = vadd.f32 %v1610, %v1592
    %v1613 = vadd.f32 %v1611, %v1600
    %v1614 = vadd.f32 %v1612, %v1593
    %v1615 = vadd.f32 %v1613, %v1601
    %v1617 = vlaneseq
    %v1618 = vshrl.u32 %v1617, 7
    %v1619 = vsub.s32 0, %v1618
    %v1620 = vrot.slane %v569, %v1619
    %v1623 = vsel %vm605, %v1614, 0
    %v1626 = vsel %vm605, %v1615, 0
    %1628 = vmatprep.subr.mxu0 0.0
    %1629 = vmatpush1.msra.mxu0 0.0
    %1630 = vmatprep.subr.mxu0 0.0
    %1631 = vmatpush1.msra.mxu0 0.0
    %1632 = vmatprep.subr.mxu0 0.0
    %1633 = vmatpush1.msra.mxu0 0.0
    %1634 = vmatprep.subr.mxu0 0.0
    %1635 = vmatpush1.msra.mxu0 0.0
    %1636 = vmatprep.subr.mxu0 0.0
    %1637 = vmatpush1.msra.mxu0 0.0
    %1638 = vmatprep.subr.mxu0 0.0
    %1639 = vmatpush1.msra.mxu0 0.0
    %1640 = vmatprep.subr.mxu0 0.0
    %1641 = vmatpush1.msra.mxu0 0.0
    %1642 = vmatprep.subr.mxu0 0.0
    %1643 = vmatpush1.msra.mxu0 0.0
    %1644 = vmatprep.subr.mxu0 0.0
    %1645 = vmatpush1.msra.mxu0 0.0
    %1646 = vmatprep.subr.mxu0 0.0
    %1647 = vmatpush1.msra.mxu0 0.0
    %1648 = vmatprep.subr.mxu0 0.0
    %1649 = vmatpush1.msra.mxu0 0.0
    %1650 = vmatprep.subr.mxu0 0.0
    %1651 = vmatpush1.msra.mxu0 0.0
    %1652 = vmatprep.subr.mxu0 0.0
    %1653 = vmatpush1.msra.mxu0 %v568
    %1654 = vmatprep.subr.mxu0 0.0
    %1655 = vmatpush1.msra.mxu0 %v567
    %1656 = vmatprep.subr.mxu0 0.0
    %1657 = vmatpush1.msra.mxu0 %v566
    %1658 = vmatprep.subr.mxu0 0.0
    %1659 = vmatpush1.msra.mxu0 %v565
    %1660 = vmatprep.subr.mxu0 0.0
    %1661 = vmatpush2.msra.mxu0 0.0
    %1662 = vmatprep.subr.mxu0 0.0
    %1663 = vmatpush2.msra.mxu0 0.0
    %1664 = vmatprep.subr.mxu0 0.0
    %1665 = vmatpush2.msra.mxu0 0.0
    %1666 = vmatprep.subr.mxu0 0.0
    %1667 = vmatpush2.msra.mxu0 0.0
    %1668 = vmatprep.subr.mxu0 0.0
    %1669 = vmatpush2.msra.mxu0 0.0
    %1670 = vmatprep.subr.mxu0 0.0
    %1671 = vmatpush2.msra.mxu0 0.0
    %1672 = vmatprep.subr.mxu0 0.0
    %1673 = vmatpush2.msra.mxu0 0.0
    %1674 = vmatprep.subr.mxu0 0.0
    %1675 = vmatpush2.msra.mxu0 0.0
    %1676 = vmatprep.subr.mxu0 0.0
    %1677 = vmatpush2.msra.mxu0 0.0
    %1678 = vmatprep.subr.mxu0 0.0
    %1679 = vmatpush2.msra.mxu0 0.0
    %1680 = vmatprep.subr.mxu0 0.0
    %1681 = vmatpush2.msra.mxu0 0.0
    %1682 = vmatprep.subr.mxu0 0.0
    %1683 = vmatpush2.msra.mxu0 0.0
    %1684 = vmatprep.subr.mxu0 0.0
    %1685 = vmatpush2.msra.mxu0 0.0
    %1686 = vmatprep.subr.mxu0 0.0
    %1687 = vmatpush2.msra.mxu0 0.0
    %1688 = vmatprep.subr.mxu0 0.0
    %1689 = vmatpush2.msra.mxu0 0.0
    %1690 = vmatprep.subr.mxu0 0.0
    %1691 = vmatpush2.msra.mxu0 0.0
    %1692 = vmatprep.mubr.f32.mxu0 0.0
    %1693 = vmatmul.mubr.f32.gmra.mxu0 %v1623
    %v1694 = vpop.f32.mrf.mxu0
    %v1695 = vadd.f32 %v1620, %v1694
    %v1696 = vpop.f32.mrf.mxu0
    %1697 = vmatprep.mubr.f32.mxu0 0.0
    %1698 = vmatmul.mubr.f32.gmra.mxu0 %v1626
    %v1699 = vpop.f32.mrf.mxu0
    %v1700 = vadd.f32 %v1620, %v1699
    %v1701 = vpop.f32.mrf.mxu0
    %1702 = vdwg.mxu0
    %v1703 = vadd.f32 %v1695, %v503
    %v1704 = vadd.f32 %v1700, %v504
    %v1705 = vsel %vm605, %v1703, 0.0
    %1706 = vadd.xlane.f32.xlu0 %v1705
    %v1707 = vpop.xlane.xlu0 %1706
    %v1708 = vsel %vm605, %v1704, 0.0
    %1709 = vadd.xlane.f32.xlu0 %v1708
    %v1710 = vpop.xlane.xlu0 %1709
    %v1711 = vrcp.pop 32.0
    %v1712 = vmul.f32 %v1707, %v1711
    %v1713 = vmul.f32 %v1710, %v1711
    %v1714 = vsub.f32 %v1703, %v1712
    %v1715 = vsub.f32 %v1704, %v1713
    %v1716 = vmul.f32 %v1714, %v1714
    %v1717 = vmul.f32 %v1715, %v1715
    %v1718 = vsel %vm605, %v1716, 0.0
    %1719 = vadd.xlane.f32.xlu0 %v1718
    %v1720 = vpop.xlane.xlu0 %1719
    %v1721 = vsel %vm605, %v1717, 0.0
    %1722 = vadd.xlane.f32.xlu0 %v1721
    %v1723 = vpop.xlane.xlu0 %1722
    %v1724 = vmul.f32 %v1720, %v1711
    %v1725 = vmul.f32 %v1723, %v1711
    %v1726 = vadd.f32 %v1724, 1e-05
    %v1727 = vadd.f32 %v1725, 1e-05
    %v1728 = vrsqrt.pop %v1726
    %v1729 = vrsqrt.pop %v1727
    %v1730 = vmul.f32 %v1714, %v1728
    %v1731 = vmul.f32 %v1715, %v1729
    %v1733 = vlaneseq
    %v1734 = vshrl.u32 %v1733, 7
    %v1735 = vsub.s32 0, %v1734
    %v1736 = vrot.slane %v570, %v1735
    %v1738 = vmul.f32 %v1730, %v1736
    %v1739 = vmul.f32 %v1731, %v1736
    %v1741 = vlaneseq
    %v1742 = vshrl.u32 %v1741, 7
    %v1743 = vsub.s32 0, %v1742
    %v1744 = vrot.slane %v571, %v1743
    %v1746 = vadd.f32 %v1738, %v1744
    %v1747 = vadd.f32 %v1739, %v1744
    %v1749 = vsel %vm605, %v551, 0
    %v1752 = vsel %vm605, %v552, 0
    %1754 = vmatprep.subr.mxu0 0.0
    %1755 = vmatpush1.msra.mxu0 0.0
    %1756 = vmatprep.subr.mxu0 0.0
    %1757 = vmatpush1.msra.mxu0 0.0
    %1758 = vmatprep.subr.mxu0 0.0
    %1759 = vmatpush1.msra.mxu0 0.0
    %1760 = vmatprep.subr.mxu0 0.0
    %1761 = vmatpush1.msra.mxu0 0.0
    %1762 = vmatprep.subr.mxu0 0.0
    %1763 = vmatpush1.msra.mxu0 0.0
    %1764 = vmatprep.subr.mxu0 0.0
    %1765 = vmatpush1.msra.mxu0 0.0
    %1766 = vmatprep.subr.mxu0 0.0
    %1767 = vmatpush1.msra.mxu0 0.0
    %1768 = vmatprep.subr.mxu0 0.0
    %1769 = vmatpush1.msra.mxu0 0.0
    %1770 = vmatprep.subr.mxu0 0.0
    %1771 = vmatpush1.msra.mxu0 0.0
    %1772 = vmatprep.subr.mxu0 0.0
    %1773 = vmatpush1.msra.mxu0 0.0
    %1774 = vmatprep.subr.mxu0 0.0
    %1775 = vmatpush1.msra.mxu0 0.0
    %1776 = vmatprep.subr.mxu0 0.0
    %1777 = vmatpush1.msra.mxu0 0.0
    %1778 = vmatprep.subr.mxu0 0.0
    %1779 = vmatpush1.msra.mxu0 %v575
    %1780 = vmatprep.subr.mxu0 0.0
    %1781 = vmatpush1.msra.mxu0 %v574
    %1782 = vmatprep.subr.mxu0 0.0
    %1783 = vmatpush1.msra.mxu0 %v573
    %1784 = vmatprep.subr.mxu0 0.0
    %1785 = vmatpush1.msra.mxu0 %v572
    %1786 = vmatprep.subr.mxu0 0.0
    %1787 = vmatpush2.msra.mxu0 0.0
    %1788 = vmatprep.subr.mxu0 0.0
    %1789 = vmatpush2.msra.mxu0 0.0
    %1790 = vmatprep.subr.mxu0 0.0
    %1791 = vmatpush2.msra.mxu0 0.0
    %1792 = vmatprep.subr.mxu0 0.0
    %1793 = vmatpush2.msra.mxu0 0.0
    %1794 = vmatprep.subr.mxu0 0.0
    %1795 = vmatpush2.msra.mxu0 0.0
    %1796 = vmatprep.subr.mxu0 0.0
    %1797 = vmatpush2.msra.mxu0 0.0
    %1798 = vmatprep.subr.mxu0 0.0
    %1799 = vmatpush2.msra.mxu0 0.0
    %1800 = vmatprep.subr.mxu0 0.0
    %1801 = vmatpush2.msra.mxu0 0.0
    %1802 = vmatprep.subr.mxu0 0.0
    %1803 = vmatpush2.msra.mxu0 0.0
    %1804 = vmatprep.subr.mxu0 0.0
    %1805 = vmatpush2.msra.mxu0 0.0
    %1806 = vmatprep.subr.mxu0 0.0
    %1807 = vmatpush2.msra.mxu0 0.0
    %1808 = vmatprep.subr.mxu0 0.0
    %1809 = vmatpush2.msra.mxu0 0.0
    %1810 = vmatprep.subr.mxu0 0.0
    %1811 = vmatpush2.msra.mxu0 0.0
    %1812 = vmatprep.subr.mxu0 0.0
    %1813 = vmatpush2.msra.mxu0 0.0
    %1814 = vmatprep.subr.mxu0 0.0
    %1815 = vmatpush2.msra.mxu0 0.0
    %1816 = vmatprep.subr.mxu0 0.0
    %1817 = vmatpush2.msra.mxu0 0.0
    %1818 = vmatprep.mubr.f32.mxu0 0.0
    %1819 = vmatmul.mubr.f32.gmra.mxu0 %v1749
    %v1820 = vpop.f32.mrf.mxu0
    %v1821 = vadd.f32 0.0, %v1820
    %v1822 = vpop.f32.mrf.mxu0
    %1823 = vmatprep.mubr.f32.mxu0 0.0
    %1824 = vmatmul.mubr.f32.gmra.mxu0 %v1752
    %v1825 = vpop.f32.mrf.mxu0
    %v1826 = vadd.f32 0.0, %v1825
    %v1827 = vpop.f32.mrf.mxu0
    %1828 = vdwg.mxu0
    %1829 = vmatprep.subr.mxu0 0.0
    %1830 = vmatpush1.msra.mxu0 0.0
    %1831 = vmatprep.subr.mxu0 0.0
    %1832 = vmatpush1.msra.mxu0 0.0
    %1833 = vmatprep.subr.mxu0 0.0
    %1834 = vmatpush1.msra.mxu0 0.0
    %1835 = vmatprep.subr.mxu0 0.0
    %1836 = vmatpush1.msra.mxu0 0.0
    %1837 = vmatprep.subr.mxu0 0.0
    %1838 = vmatpush1.msra.mxu0 0.0
    %1839 = vmatprep.subr.mxu0 0.0
    %1840 = vmatpush1.msra.mxu0 0.0
    %1841 = vmatprep.subr.mxu0 0.0
    %1842 = vmatpush1.msra.mxu0 0.0
    %1843 = vmatprep.subr.mxu0 0.0
    %1844 = vmatpush1.msra.mxu0 0.0
    %1845 = vmatprep.subr.mxu0 0.0
    %1846 = vmatpush1.msra.mxu0 0.0
    %1847 = vmatprep.subr.mxu0 0.0
    %1848 = vmatpush1.msra.mxu0 0.0
    %1849 = vmatprep.subr.mxu0 0.0
    %1850 = vmatpush1.msra.mxu0 0.0
    %1851 = vmatprep.subr.mxu0 0.0
    %1852 = vmatpush1.msra.mxu0 0.0
    %1853 = vmatprep.subr.mxu0 0.0
    %1854 = vmatpush1.msra.mxu0 %v579
    %1855 = vmatprep.subr.mxu0 0.0
    %1856 = vmatpush1.msra.mxu0 %v578
    %1857 = vmatprep.subr.mxu0 0.0
    %1858 = vmatpush1.msra.mxu0 %v577
    %1859 = vmatprep.subr.mxu0 0.0
    %1860 = vmatpush1.msra.mxu0 %v576
    %1861 = vmatprep.subr.mxu0 0.0
    %1862 = vmatpush2.msra.mxu0 0.0
    %1863 = vmatprep.subr.mxu0 0.0
    %1864 = vmatpush2.msra.mxu0 0.0
    %1865 = vmatprep.subr.mxu0 0.0
    %1866 = vmatpush2.msra.mxu0 0.0
    %1867 = vmatprep.subr.mxu0 0.0
    %1868 = vmatpush2.msra.mxu0 0.0
    %1869 = vmatprep.subr.mxu0 0.0
    %1870 = vmatpush2.msra.mxu0 0.0
    %1871 = vmatprep.subr.mxu0 0.0
    %1872 = vmatpush2.msra.mxu0 0.0
    %1873 = vmatprep.subr.mxu0 0.0
    %1874 = vmatpush2.msra.mxu0 0.0
    %1875 = vmatprep.subr.mxu0 0.0
    %1876 = vmatpush2.msra.mxu0 0.0
    %1877 = vmatprep.subr.mxu0 0.0
    %1878 = vmatpush2.msra.mxu0 0.0
    %1879 = vmatprep.subr.mxu0 0.0
    %1880 = vmatpush2.msra.mxu0 0.0
    %1881 = vmatprep.subr.mxu0 0.0
    %1882 = vmatpush2.msra.mxu0 0.0
    %1883 = vmatprep.subr.mxu0 0.0
    %1884 = vmatpush2.msra.mxu0 0.0
    %1885 = vmatprep.subr.mxu0 0.0
    %1886 = vmatpush2.msra.mxu0 0.0
    %1887 = vmatprep.subr.mxu0 0.0
    %1888 = vmatpush2.msra.mxu0 0.0
    %1889 = vmatprep.subr.mxu0 0.0
    %1890 = vmatpush2.msra.mxu0 0.0
    %1891 = vmatprep.subr.mxu0 0.0
    %1892 = vmatpush2.msra.mxu0 0.0
    %1893 = vmatprep.mubr.f32.mxu0 0.0
    %1894 = vmatmul.mubr.f32.gmra.mxu0 %v607
    %v1895 = vpop.f32.mrf.mxu0
    %v1896 = vadd.f32 0.0, %v1895
    %v1897 = vpop.f32.mrf.mxu0
    %1898 = vmatprep.mubr.f32.mxu0 0.0
    %1899 = vmatmul.mubr.f32.gmra.mxu0 %v610
    %v1900 = vpop.f32.mrf.mxu0
    %v1901 = vadd.f32 0.0, %v1900
    %v1902 = vpop.f32.mrf.mxu0
    %1903 = vdwg.mxu0
    %v1905 = vsel %vm605, %v1746, 0
    %v1908 = vsel %vm605, %v1747, 0
    %1910 = vmatprep.subr.mxu0 0.0
    %1911 = vmatpush1.msra.mxu0 0.0
    %1912 = vmatprep.subr.mxu0 0.0
    %1913 = vmatpush1.msra.mxu0 0.0
    %1914 = vmatprep.subr.mxu0 0.0
    %1915 = vmatpush1.msra.mxu0 0.0
    %1916 = vmatprep.subr.mxu0 0.0
    %1917 = vmatpush1.msra.mxu0 0.0
    %1918 = vmatprep.subr.mxu0 0.0
    %1919 = vmatpush1.msra.mxu0 0.0
    %1920 = vmatprep.subr.mxu0 0.0
    %1921 = vmatpush1.msra.mxu0 0.0
    %1922 = vmatprep.subr.mxu0 0.0
    %1923 = vmatpush1.msra.mxu0 0.0
    %1924 = vmatprep.subr.mxu0 0.0
    %1925 = vmatpush1.msra.mxu0 0.0
    %1926 = vmatprep.subr.mxu0 0.0
    %1927 = vmatpush1.msra.mxu0 0.0
    %1928 = vmatprep.subr.mxu0 0.0
    %1929 = vmatpush1.msra.mxu0 0.0
    %1930 = vmatprep.subr.mxu0 0.0
    %1931 = vmatpush1.msra.mxu0 0.0
    %1932 = vmatprep.subr.mxu0 0.0
    %1933 = vmatpush1.msra.mxu0 0.0
    %1934 = vmatprep.subr.mxu0 0.0
    %1935 = vmatpush1.msra.mxu0 %v583
    %1936 = vmatprep.subr.mxu0 0.0
    %1937 = vmatpush1.msra.mxu0 %v582
    %1938 = vmatprep.subr.mxu0 0.0
    %1939 = vmatpush1.msra.mxu0 %v581
    %1940 = vmatprep.subr.mxu0 0.0
    %1941 = vmatpush1.msra.mxu0 %v580
    %1942 = vmatprep.subr.mxu0 0.0
    %1943 = vmatpush2.msra.mxu0 0.0
    %1944 = vmatprep.subr.mxu0 0.0
    %1945 = vmatpush2.msra.mxu0 0.0
    %1946 = vmatprep.subr.mxu0 0.0
    %1947 = vmatpush2.msra.mxu0 0.0
    %1948 = vmatprep.subr.mxu0 0.0
    %1949 = vmatpush2.msra.mxu0 0.0
    %1950 = vmatprep.subr.mxu0 0.0
    %1951 = vmatpush2.msra.mxu0 0.0
    %1952 = vmatprep.subr.mxu0 0.0
    %1953 = vmatpush2.msra.mxu0 0.0
    %1954 = vmatprep.subr.mxu0 0.0
    %1955 = vmatpush2.msra.mxu0 0.0
    %1956 = vmatprep.subr.mxu0 0.0
    %1957 = vmatpush2.msra.mxu0 0.0
    %1958 = vmatprep.subr.mxu0 0.0
    %1959 = vmatpush2.msra.mxu0 0.0
    %1960 = vmatprep.subr.mxu0 0.0
    %1961 = vmatpush2.msra.mxu0 0.0
    %1962 = vmatprep.subr.mxu0 0.0
    %1963 = vmatpush2.msra.mxu0 0.0
    %1964 = vmatprep.subr.mxu0 0.0
    %1965 = vmatpush2.msra.mxu0 0.0
    %1966 = vmatprep.subr.mxu0 0.0
    %1967 = vmatpush2.msra.mxu0 0.0
    %1968 = vmatprep.subr.mxu0 0.0
    %1969 = vmatpush2.msra.mxu0 0.0
    %1970 = vmatprep.subr.mxu0 0.0
    %1971 = vmatpush2.msra.mxu0 0.0
    %1972 = vmatprep.subr.mxu0 0.0
    %1973 = vmatpush2.msra.mxu0 0.0
    %1974 = vmatprep.mubr.f32.mxu0 0.0
    %1975 = vmatmul.mubr.f32.gmra.mxu0 %v1905
    %v1976 = vpop.f32.mrf.mxu0
    %v1977 = vadd.f32 0.0, %v1976
    %v1978 = vpop.f32.mrf.mxu0
    %1979 = vmatprep.mubr.f32.mxu0 0.0
    %1980 = vmatmul.mubr.f32.gmra.mxu0 %v1908
    %v1981 = vpop.f32.mrf.mxu0
    %v1982 = vadd.f32 0.0, %v1981
    %v1983 = vpop.f32.mrf.mxu0
    %1984 = vdwg.mxu0
    %v1985 = vmul.f32 %v1821, %v513
    %v1986 = vmul.f32 %v1821, %v514
    %v1987 = vmul.f32 %v1821, %v515
    %v1988 = vmul.f32 %v1821, %v516
    %v1989 = vmul.f32 %v1826, %v513
    %v1990 = vmul.f32 %v1826, %v514
    %v1991 = vmul.f32 %v1826, %v515
    %v1992 = vmul.f32 %v1826, %v516
    %v1994 = vsel %vm605, %v1985, 0
    %v1997 = vsel %vm605, %v1986, 0
    %v2000 = vsel %vm605, %v1987, 0
    %v2003 = vsel %vm605, %v1988, 0
    %v2006 = vsel %vm605, %v1896, 0
    %2008 = vmatprep.subr.mxu0 0.0
    %2009 = vmatpush1.xpose.msra.mxu0 0.0
    %2010 = vmatprep.subr.mxu0 0.0
    %2011 = vmatpush1.xpose.msra.mxu0 0.0
    %2012 = vmatprep.subr.mxu0 0.0
    %2013 = vmatpush1.xpose.msra.mxu0 0.0
    %2014 = vmatprep.subr.mxu0 0.0
    %2015 = vmatpush1.xpose.msra.mxu0 0.0
    %2016 = vmatprep.subr.mxu0 0.0
    %2017 = vmatpush1.xpose.msra.mxu0 0.0
    %2018 = vmatprep.subr.mxu0 0.0
    %2019 = vmatpush1.xpose.msra.mxu0 0.0
    %2020 = vmatprep.subr.mxu0 0.0
    %2021 = vmatpush1.xpose.msra.mxu0 0.0
    %2022 = vmatprep.subr.mxu0 0.0
    %2023 = vmatpush1.xpose.msra.mxu0 0.0
    %2024 = vmatprep.subr.mxu0 0.0
    %2025 = vmatpush1.xpose.msra.mxu0 0.0
    %2026 = vmatprep.subr.mxu0 0.0
    %2027 = vmatpush1.xpose.msra.mxu0 0.0
    %2028 = vmatprep.subr.mxu0 0.0
    %2029 = vmatpush1.xpose.msra.mxu0 0.0
    %2030 = vmatprep.subr.mxu0 0.0
    %2031 = vmatpush1.xpose.msra.mxu0 0.0
    %2032 = vmatprep.subr.mxu0 0.0
    %2033 = vmatpush1.xpose.msra.mxu0 0.0
    %2034 = vmatprep.subr.mxu0 0.0
    %2035 = vmatpush1.xpose.msra.mxu0 0.0
    %2036 = vmatprep.subr.mxu0 0.0
    %2037 = vmatpush1.xpose.msra.mxu0 0.0
    %2038 = vmatprep.subr.mxu0 0.0
    %2039 = vmatpush1.xpose.msra.mxu0 %v2006
    %2040 = vmatprep.subr.mxu0 0.0
    %2041 = vmatpush2.xpose.msra.mxu0 0.0
    %2042 = vmatprep.subr.mxu0 0.0
    %2043 = vmatpush2.xpose.msra.mxu0 0.0
    %2044 = vmatprep.subr.mxu0 0.0
    %2045 = vmatpush2.xpose.msra.mxu0 0.0
    %2046 = vmatprep.subr.mxu0 0.0
    %2047 = vmatpush2.xpose.msra.mxu0 0.0
    %2048 = vmatprep.subr.mxu0 0.0
    %2049 = vmatpush2.xpose.msra.mxu0 0.0
    %2050 = vmatprep.subr.mxu0 0.0
    %2051 = vmatpush2.xpose.msra.mxu0 0.0
    %2052 = vmatprep.subr.mxu0 0.0
    %2053 = vmatpush2.xpose.msra.mxu0 0.0
    %2054 = vmatprep.subr.mxu0 0.0
    %2055 = vmatpush2.xpose.msra.mxu0 0.0
    %2056 = vmatprep.subr.mxu0 0.0
    %2057 = vmatpush2.xpose.msra.mxu0 0.0
    %2058 = vmatprep.subr.mxu0 0.0
    %2059 = vmatpush2.xpose.msra.mxu0 0.0
    %2060 = vmatprep.subr.mxu0 0.0
    %2061 = vmatpush2.xpose.msra.mxu0 0.0
    %2062 = vmatprep.subr.mxu0 0.0
    %2063 = vmatpush2.xpose.msra.mxu0 0.0
    %2064 = vmatprep.subr.mxu0 0.0
    %2065 = vmatpush2.xpose.msra.mxu0 0.0
    %2066 = vmatprep.subr.mxu0 0.0
    %2067 = vmatpush2.xpose.msra.mxu0 0.0
    %2068 = vmatprep.subr.mxu0 0.0
    %2069 = vmatpush2.xpose.msra.mxu0 0.0
    %2070 = vmatprep.subr.mxu0 0.0
    %2071 = vmatpush2.xpose.msra.mxu0 0.0
    %2072 = vmatprep.mubr.f32.mxu0 0.0
    %2073 = vmatmul.mubr.f32.gmra.mxu0 %v1994
    %v2074 = vpop.f32.mrf.mxu0
    %v2075 = vadd.f32 0.0, %v2074
    %v2076 = vpop.f32.mrf.mxu0
    %2077 = vmatprep.mubr.f32.mxu0 0.0
    %2078 = vmatmul.mubr.f32.gmra.mxu0 %v1997
    %v2079 = vpop.f32.mrf.mxu0
    %v2080 = vadd.f32 0.0, %v2079
    %v2081 = vpop.f32.mrf.mxu0
    %2082 = vmatprep.mubr.f32.mxu0 0.0
    %2083 = vmatmul.mubr.f32.gmra.mxu0 %v2000
    %v2084 = vpop.f32.mrf.mxu0
    %v2085 = vadd.f32 0.0, %v2084
    %v2086 = vpop.f32.mrf.mxu0
    %2087 = vmatprep.mubr.f32.mxu0 0.0
    %2088 = vmatmul.mubr.f32.gmra.mxu0 %v2003
    %v2089 = vpop.f32.mrf.mxu0
    %v2090 = vadd.f32 0.0, %v2089
    %v2091 = vpop.f32.mrf.mxu0
    %2092 = vdwg.mxu0
    %v2094 = vsel %vm605, %v1989, 0
    %v2097 = vsel %vm605, %v1990, 0
    %v2100 = vsel %vm605, %v1991, 0
    %v2103 = vsel %vm605, %v1992, 0
    %v2106 = vsel %vm605, %v1901, 0
    %2108 = vmatprep.subr.mxu0 0.0
    %2109 = vmatpush1.xpose.msra.mxu0 0.0
    %2110 = vmatprep.subr.mxu0 0.0
    %2111 = vmatpush1.xpose.msra.mxu0 0.0
    %2112 = vmatprep.subr.mxu0 0.0
    %2113 = vmatpush1.xpose.msra.mxu0 0.0
    %2114 = vmatprep.subr.mxu0 0.0
    %2115 = vmatpush1.xpose.msra.mxu0 0.0
    %2116 = vmatprep.subr.mxu0 0.0
    %2117 = vmatpush1.xpose.msra.mxu0 0.0
    %2118 = vmatprep.subr.mxu0 0.0
    %2119 = vmatpush1.xpose.msra.mxu0 0.0
    %2120 = vmatprep.subr.mxu0 0.0
    %2121 = vmatpush1.xpose.msra.mxu0 0.0
    %2122 = vmatprep.subr.mxu0 0.0
    %2123 = vmatpush1.xpose.msra.mxu0 0.0
    %2124 = vmatprep.subr.mxu0 0.0
    %2125 = vmatpush1.xpose.msra.mxu0 0.0
    %2126 = vmatprep.subr.mxu0 0.0
    %2127 = vmatpush1.xpose.msra.mxu0 0.0
    %2128 = vmatprep.subr.mxu0 0.0
    %2129 = vmatpush1.xpose.msra.mxu0 0.0
    %2130 = vmatprep.subr.mxu0 0.0
    %2131 = vmatpush1.xpose.msra.mxu0 0.0
    %2132 = vmatprep.subr.mxu0 0.0
    %2133 = vmatpush1.xpose.msra.mxu0 0.0
    %2134 = vmatprep.subr.mxu0 0.0
    %2135 = vmatpush1.xpose.msra.mxu0 0.0
    %2136 = vmatprep.subr.mxu0 0.0
    %2137 = vmatpush1.xpose.msra.mxu0 0.0
    %2138 = vmatprep.subr.mxu0 0.0
    %2139 = vmatpush1.xpose.msra.mxu0 %v2106
    %2140 = vmatprep.subr.mxu0 0.0
    %2141 = vmatpush2.xpose.msra.mxu0 0.0
    %2142 = vmatprep.subr.mxu0 0.0
    %2143 = vmatpush2.xpose.msra.mxu0 0.0
    %2144 = vmatprep.subr.mxu0 0.0
    %2145 = vmatpush2.xpose.msra.mxu0 0.0
    %2146 = vmatprep.subr.mxu0 0.0
    %2147 = vmatpush2.xpose.msra.mxu0 0.0
    %2148 = vmatprep.subr.mxu0 0.0
    %2149 = vmatpush2.xpose.msra.mxu0 0.0
    %2150 = vmatprep.subr.mxu0 0.0
    %2151 = vmatpush2.xpose.msra.mxu0 0.0
    %2152 = vmatprep.subr.mxu0 0.0
    %2153 = vmatpush2.xpose.msra.mxu0 0.0
    %2154 = vmatprep.subr.mxu0 0.0
    %2155 = vmatpush2.xpose.msra.mxu0 0.0
    %2156 = vmatprep.subr.mxu0 0.0
    %2157 = vmatpush2.xpose.msra.mxu0 0.0
    %2158 = vmatprep.subr.mxu0 0.0
    %2159 = vmatpush2.xpose.msra.mxu0 0.0
    %2160 = vmatprep.subr.mxu0 0.0
    %2161 = vmatpush2.xpose.msra.mxu0 0.0
    %2162 = vmatprep.subr.mxu0 0.0
    %2163 = vmatpush2.xpose.msra.mxu0 0.0
    %2164 = vmatprep.subr.mxu0 0.0
    %2165 = vmatpush2.xpose.msra.mxu0 0.0
    %2166 = vmatprep.subr.mxu0 0.0
    %2167 = vmatpush2.xpose.msra.mxu0 0.0
    %2168 = vmatprep.subr.mxu0 0.0
    %2169 = vmatpush2.xpose.msra.mxu0 0.0
    %2170 = vmatprep.subr.mxu0 0.0
    %2171 = vmatpush2.xpose.msra.mxu0 0.0
    %2172 = vmatprep.mubr.f32.mxu0 0.0
    %2173 = vmatmul.mubr.f32.gmra.mxu0 %v2094
    %v2174 = vpop.f32.mrf.mxu0
    %v2175 = vadd.f32 0.0, %v2174
    %v2176 = vpop.f32.mrf.mxu0
    %2177 = vmatprep.mubr.f32.mxu0 0.0
    %2178 = vmatmul.mubr.f32.gmra.mxu0 %v2097
    %v2179 = vpop.f32.mrf.mxu0
    %v2180 = vadd.f32 0.0, %v2179
    %v2181 = vpop.f32.mrf.mxu0
    %2182 = vmatprep.mubr.f32.mxu0 0.0
    %2183 = vmatmul.mubr.f32.gmra.mxu0 %v2100
    %v2184 = vpop.f32.mrf.mxu0
    %v2185 = vadd.f32 0.0, %v2184
    %v2186 = vpop.f32.mrf.mxu0
    %2187 = vmatprep.mubr.f32.mxu0 0.0
    %2188 = vmatmul.mubr.f32.gmra.mxu0 %v2103
    %v2189 = vpop.f32.mrf.mxu0
    %v2190 = vadd.f32 0.0, %v2189
    %v2191 = vpop.f32.mrf.mxu0
    %2192 = vdwg.mxu0
    %v2193 = vmul.f32 %v2075, 0.35355338
    %v2194 = vmul.f32 %v2080, 0.35355338
    %v2195 = vmul.f32 %v2085, 0.35355338
    %v2196 = vmul.f32 %v2090, 0.35355338
    %v2197 = vmul.f32 %v2175, 0.35355338
    %v2198 = vmul.f32 %v2180, 0.35355338
    %v2199 = vmul.f32 %v2185, 0.35355338
    %v2200 = vmul.f32 %v2190, 0.35355338
    %v2201 = vsel %vm1151, %v2193, -inf
    %2202 = vmax.xlane.f32.xlu0 %v2201
    %v2203 = vpop.xlane.xlu0 %2202
    %v2204 = vsel %vm1151, %v2194, -inf
    %2205 = vmax.xlane.f32.xlu0 %v2204
    %v2206 = vpop.xlane.xlu0 %2205
    %v2207 = vsel %vm1151, %v2195, -inf
    %2208 = vmax.xlane.f32.xlu0 %v2207
    %v2209 = vpop.xlane.xlu0 %2208
    %v2210 = vsel %vm1151, %v2196, -inf
    %2211 = vmax.xlane.f32.xlu0 %v2210
    %v2212 = vpop.xlane.xlu0 %2211
    %v2213 = vsel %vm1151, %v2197, -inf
    %2214 = vmax.xlane.f32.xlu0 %v2213
    %v2215 = vpop.xlane.xlu0 %2214
    %v2216 = vsel %vm1151, %v2198, -inf
    %2217 = vmax.xlane.f32.xlu0 %v2216
    %v2218 = vpop.xlane.xlu0 %2217
    %v2219 = vsel %vm1151, %v2199, -inf
    %2220 = vmax.xlane.f32.xlu0 %v2219
    %v2221 = vpop.xlane.xlu0 %2220
    %v2222 = vsel %vm1151, %v2200, -inf
    %2223 = vmax.xlane.f32.xlu0 %v2222
    %v2224 = vpop.xlane.xlu0 %2223
    %v2225 = vsub.f32 %v2193, %v2203
    %v2226 = vsub.f32 %v2194, %v2206
    %v2227 = vsub.f32 %v2195, %v2209
    %v2228 = vsub.f32 %v2196, %v2212
    %v2229 = vsub.f32 %v2197, %v2215
    %v2230 = vsub.f32 %v2198, %v2218
    %v2231 = vsub.f32 %v2199, %v2221
    %v2232 = vsub.f32 %v2200, %v2224
    %v2233 = vmul.f32 %v2225, 1.442695
    %v2234 = vpow.pop %v2233
    %v2235 = vmul.f32 %v2226, 1.442695
    %v2236 = vpow.pop %v2235
    %v2237 = vmul.f32 %v2227, 1.442695
    %v2238 = vpow.pop %v2237
    %v2239 = vmul.f32 %v2228, 1.442695
    %v2240 = vpow.pop %v2239
    %v2241 = vmul.f32 %v2229, 1.442695
    %v2242 = vpow.pop %v2241
    %v2243 = vmul.f32 %v2230, 1.442695
    %v2244 = vpow.pop %v2243
    %v2245 = vmul.f32 %v2231, 1.442695
    %v2246 = vpow.pop %v2245
    %v2247 = vmul.f32 %v2232, 1.442695
    %v2248 = vpow.pop %v2247
    %v2249 = vsel %vm1151, %v2234, 0.0
    %2250 = vadd.xlane.f32.xlu0 %v2249
    %v2251 = vpop.xlane.xlu0 %2250
    %v2252 = vsel %vm1151, %v2236, 0.0
    %2253 = vadd.xlane.f32.xlu0 %v2252
    %v2254 = vpop.xlane.xlu0 %2253
    %v2255 = vsel %vm1151, %v2238, 0.0
    %2256 = vadd.xlane.f32.xlu0 %v2255
    %v2257 = vpop.xlane.xlu0 %2256
    %v2258 = vsel %vm1151, %v2240, 0.0
    %2259 = vadd.xlane.f32.xlu0 %v2258
    %v2260 = vpop.xlane.xlu0 %2259
    %v2261 = vsel %vm1151, %v2242, 0.0
    %2262 = vadd.xlane.f32.xlu0 %v2261
    %v2263 = vpop.xlane.xlu0 %2262
    %v2264 = vsel %vm1151, %v2244, 0.0
    %2265 = vadd.xlane.f32.xlu0 %v2264
    %v2266 = vpop.xlane.xlu0 %2265
    %v2267 = vsel %vm1151, %v2246, 0.0
    %2268 = vadd.xlane.f32.xlu0 %v2267
    %v2269 = vpop.xlane.xlu0 %2268
    %v2270 = vsel %vm1151, %v2248, 0.0
    %2271 = vadd.xlane.f32.xlu0 %v2270
    %v2272 = vpop.xlane.xlu0 %2271
    %v2273 = vrcp.pop %v2251
    %v2274 = vrcp.pop %v2254
    %v2275 = vrcp.pop %v2257
    %v2276 = vrcp.pop %v2260
    %v2277 = vrcp.pop %v2263
    %v2278 = vrcp.pop %v2266
    %v2279 = vrcp.pop %v2269
    %v2280 = vrcp.pop %v2272
    %v2281 = vmul.f32 %v2234, %v2273
    %v2282 = vmul.f32 %v2236, %v2274
    %v2283 = vmul.f32 %v2238, %v2275
    %v2284 = vmul.f32 %v2240, %v2276
    %v2285 = vmul.f32 %v2242, %v2277
    %v2286 = vmul.f32 %v2244, %v2278
    %v2287 = vmul.f32 %v2246, %v2279
    %v2288 = vmul.f32 %v2248, %v2280
    %v2290 = vsel %vm1151, %v2281, 0
    %v2293 = vsel %vm1151, %v2282, 0
    %v2296 = vsel %vm1151, %v2283, 0
    %v2299 = vsel %vm1151, %v2284, 0
    %2301 = vmatprep.subr.mxu0 0.0
    %2302 = vmatpush1.msra.mxu0 0.0
    %2303 = vmatprep.subr.mxu0 0.0
    %2304 = vmatpush1.msra.mxu0 0.0
    %2305 = vmatprep.subr.mxu0 0.0
    %2306 = vmatpush1.msra.mxu0 0.0
    %2307 = vmatprep.subr.mxu0 0.0
    %2308 = vmatpush1.msra.mxu0 0.0
    %2309 = vmatprep.subr.mxu0 0.0
    %2310 = vmatpush1.msra.mxu0 0.0
    %2311 = vmatprep.subr.mxu0 0.0
    %2312 = vmatpush1.msra.mxu0 0.0
    %2313 = vmatprep.subr.mxu0 0.0
    %2314 = vmatpush1.msra.mxu0 0.0
    %2315 = vmatprep.subr.mxu0 0.0
    %2316 = vmatpush1.msra.mxu0 0.0
    %2317 = vmatprep.subr.mxu0 0.0
    %2318 = vmatpush1.msra.mxu0 0.0
    %2319 = vmatprep.subr.mxu0 0.0
    %2320 = vmatpush1.msra.mxu0 0.0
    %2321 = vmatprep.subr.mxu0 0.0
    %2322 = vmatpush1.msra.mxu0 0.0
    %2323 = vmatprep.subr.mxu0 0.0
    %2324 = vmatpush1.msra.mxu0 0.0
    %2325 = vmatprep.subr.mxu0 0.0
    %2326 = vmatpush1.msra.mxu0 0.0
    %2327 = vmatprep.subr.mxu0 0.0
    %2328 = vmatpush1.msra.mxu0 0.0
    %2329 = vmatprep.subr.mxu0 0.0
    %2330 = vmatpush1.msra.mxu0 0.0
    %2331 = vmatprep.subr.mxu0 0.0
    %2332 = vmatpush1.msra.mxu0 %v1977
    %2333 = vmatprep.subr.mxu0 0.0
    %2334 = vmatpush2.msra.mxu0 0.0
    %2335 = vmatprep.subr.mxu0 0.0
    %2336 = vmatpush2.msra.mxu0 0.0
    %2337 = vmatprep.subr.mxu0 0.0
    %2338 = vmatpush2.msra.mxu0 0.0
    %2339 = vmatprep.subr.mxu0 0.0
    %2340 = vmatpush2.msra.mxu0 0.0
    %2341 = vmatprep.subr.mxu0 0.0
    %2342 = vmatpush2.msra.mxu0 0.0
    %2343 = vmatprep.subr.mxu0 0.0
    %2344 = vmatpush2.msra.mxu0 0.0
    %2345 = vmatprep.subr.mxu0 0.0
    %2346 = vmatpush2.msra.mxu0 0.0
    %2347 = vmatprep.subr.mxu0 0.0
    %2348 = vmatpush2.msra.mxu0 0.0
    %2349 = vmatprep.subr.mxu0 0.0
    %2350 = vmatpush2.msra.mxu0 0.0
    %2351 = vmatprep.subr.mxu0 0.0
    %2352 = vmatpush2.msra.mxu0 0.0
    %2353 = vmatprep.subr.mxu0 0.0
    %2354 = vmatpush2.msra.mxu0 0.0
    %2355 = vmatprep.subr.mxu0 0.0
    %2356 = vmatpush2.msra.mxu0 0.0
    %2357 = vmatprep.subr.mxu0 0.0
    %2358 = vmatpush2.msra.mxu0 0.0
    %2359 = vmatprep.subr.mxu0 0.0
    %2360 = vmatpush2.msra.mxu0 0.0
    %2361 = vmatprep.subr.mxu0 0.0
    %2362 = vmatpush2.msra.mxu0 0.0
    %2363 = vmatprep.subr.mxu0 0.0
    %2364 = vmatpush2.msra.mxu0 0.0
    %2365 = vmatprep.mubr.f32.mxu0 0.0
    %2366 = vmatmul.mubr.f32.gmra.mxu0 %v2290
    %v2367 = vpop.f32.mrf.mxu0
    %v2368 = vadd.f32 0.0, %v2367
    %v2369 = vpop.f32.mrf.mxu0
    %2370 = vmatprep.mubr.f32.mxu0 0.0
    %2371 = vmatmul.mubr.f32.gmra.mxu0 %v2293
    %v2372 = vpop.f32.mrf.mxu0
    %v2373 = vadd.f32 0.0, %v2372
    %v2374 = vpop.f32.mrf.mxu0
    %2375 = vmatprep.mubr.f32.mxu0 0.0
    %2376 = vmatmul.mubr.f32.gmra.mxu0 %v2296
    %v2377 = vpop.f32.mrf.mxu0
    %v2378 = vadd.f32 0.0, %v2377
    %v2379 = vpop.f32.mrf.mxu0
    %2380 = vmatprep.mubr.f32.mxu0 0.0
    %2381 = vmatmul.mubr.f32.gmra.mxu0 %v2299
    %v2382 = vpop.f32.mrf.mxu0
    %v2383 = vadd.f32 0.0, %v2382
    %v2384 = vpop.f32.mrf.mxu0
    %2385 = vdwg.mxu0
    %v2387 = vsel %vm1151, %v2285, 0
    %v2390 = vsel %vm1151, %v2286, 0
    %v2393 = vsel %vm1151, %v2287, 0
    %v2396 = vsel %vm1151, %v2288, 0
    %2398 = vmatprep.subr.mxu0 0.0
    %2399 = vmatpush1.msra.mxu0 0.0
    %2400 = vmatprep.subr.mxu0 0.0
    %2401 = vmatpush1.msra.mxu0 0.0
    %2402 = vmatprep.subr.mxu0 0.0
    %2403 = vmatpush1.msra.mxu0 0.0
    %2404 = vmatprep.subr.mxu0 0.0
    %2405 = vmatpush1.msra.mxu0 0.0
    %2406 = vmatprep.subr.mxu0 0.0
    %2407 = vmatpush1.msra.mxu0 0.0
    %2408 = vmatprep.subr.mxu0 0.0
    %2409 = vmatpush1.msra.mxu0 0.0
    %2410 = vmatprep.subr.mxu0 0.0
    %2411 = vmatpush1.msra.mxu0 0.0
    %2412 = vmatprep.subr.mxu0 0.0
    %2413 = vmatpush1.msra.mxu0 0.0
    %2414 = vmatprep.subr.mxu0 0.0
    %2415 = vmatpush1.msra.mxu0 0.0
    %2416 = vmatprep.subr.mxu0 0.0
    %2417 = vmatpush1.msra.mxu0 0.0
    %2418 = vmatprep.subr.mxu0 0.0
    %2419 = vmatpush1.msra.mxu0 0.0
    %2420 = vmatprep.subr.mxu0 0.0
    %2421 = vmatpush1.msra.mxu0 0.0
    %2422 = vmatprep.subr.mxu0 0.0
    %2423 = vmatpush1.msra.mxu0 0.0
    %2424 = vmatprep.subr.mxu0 0.0
    %2425 = vmatpush1.msra.mxu0 0.0
    %2426 = vmatprep.subr.mxu0 0.0
    %2427 = vmatpush1.msra.mxu0 0.0
    %2428 = vmatprep.subr.mxu0 0.0
    %2429 = vmatpush1.msra.mxu0 %v1982
    %2430 = vmatprep.subr.mxu0 0.0
    %2431 = vmatpush2.msra.mxu0 0.0
    %2432 = vmatprep.subr.mxu0 0.0
    %2433 = vmatpush2.msra.mxu0 0.0
    %2434 = vmatprep.subr.mxu0 0.0
    %2435 = vmatpush2.msra.mxu0 0.0
    %2436 = vmatprep.subr.mxu0 0.0
    %2437 = vmatpush2.msra.mxu0 0.0
    %2438 = vmatprep.subr.mxu0 0.0
    %2439 = vmatpush2.msra.mxu0 0.0
    %2440 = vmatprep.subr.mxu0 0.0
    %2441 = vmatpush2.msra.mxu0 0.0
    %2442 = vmatprep.subr.mxu0 0.0
    %2443 = vmatpush2.msra.mxu0 0.0
    %2444 = vmatprep.subr.mxu0 0.0
    %2445 = vmatpush2.msra.mxu0 0.0
    %2446 = vmatprep.subr.mxu0 0.0
    %2447 = vmatpush2.msra.mxu0 0.0
    %2448 = vmatprep.subr.mxu0 0.0
    %2449 = vmatpush2.msra.mxu0 0.0
    %2450 = vmatprep.subr.mxu0 0.0
    %2451 = vmatpush2.msra.mxu0 0.0
    %2452 = vmatprep.subr.mxu0 0.0
    %2453 = vmatpush2.msra.mxu0 0.0
    %2454 = vmatprep.subr.mxu0 0.0
    %2455 = vmatpush2.msra.mxu0 0.0
    %2456 = vmatprep.subr.mxu0 0.0
    %2457 = vmatpush2.msra.mxu0 0.0
    %2458 = vmatprep.subr.mxu0 0.0
    %2459 = vmatpush2.msra.mxu0 0.0
    %2460 = vmatprep.subr.mxu0 0.0
    %2461 = vmatpush2.msra.mxu0 0.0
    %2462 = vmatprep.mubr.f32.mxu0 0.0
    %2463 = vmatmul.mubr.f32.gmra.mxu0 %v2387
    %v2464 = vpop.f32.mrf.mxu0
    %v2465 = vadd.f32 0.0, %v2464
    %v2466 = vpop.f32.mrf.mxu0
    %2467 = vmatprep.mubr.f32.mxu0 0.0
    %2468 = vmatmul.mubr.f32.gmra.mxu0 %v2390
    %v2469 = vpop.f32.mrf.mxu0
    %v2470 = vadd.f32 0.0, %v2469
    %v2471 = vpop.f32.mrf.mxu0
    %2472 = vmatprep.mubr.f32.mxu0 0.0
    %2473 = vmatmul.mubr.f32.gmra.mxu0 %v2393
    %v2474 = vpop.f32.mrf.mxu0
    %v2475 = vadd.f32 0.0, %v2474
    %v2476 = vpop.f32.mrf.mxu0
    %2477 = vmatprep.mubr.f32.mxu0 0.0
    %2478 = vmatmul.mubr.f32.gmra.mxu0 %v2396
    %v2479 = vpop.f32.mrf.mxu0
    %v2480 = vadd.f32 0.0, %v2479
    %v2481 = vpop.f32.mrf.mxu0
    %2482 = vdwg.mxu0
    %v2483 = vmul.f32 %v2368, %v513
    %v2484 = vmul.f32 %v2373, %v514
    %v2485 = vmul.f32 %v2378, %v515
    %v2486 = vmul.f32 %v2383, %v516
    %v2487 = vmul.f32 %v2465, %v513
    %v2488 = vmul.f32 %v2470, %v514
    %v2489 = vmul.f32 %v2475, %v515
    %v2490 = vmul.f32 %v2480, %v516
    %v2491 = vadd.f32 %v2483, %v2484
    %v2492 = vadd.f32 %v2487, %v2488
    %v2493 = vadd.f32 %v2491, %v2485
    %v2494 = vadd.f32 %v2492, %v2489
    %v2495 = vadd.f32 %v2493, %v2486
    %v2496 = vadd.f32 %v2494, %v2490
    %v2498 = vlaneseq
    %v2499 = vshrl.u32 %v2498, 7
    %v2500 = vsub.s32 0, %v2499
    %v2501 = vrot.slane %v588, %v2500
    %v2504 = vsel %vm605, %v2495, 0
    %v2507 = vsel %vm605, %v2496, 0
    %2509 = vmatprep.subr.mxu0 0.0
    %2510 = vmatpush1.msra.mxu0 0.0
    %2511 = vmatprep.subr.mxu0 0.0
    %2512 = vmatpush1.msra.mxu0 0.0
    %2513 = vmatprep.subr.mxu0 0.0
    %2514 = vmatpush1.msra.mxu0 0.0
    %2515 = vmatprep.subr.mxu0 0.0
    %2516 = vmatpush1.msra.mxu0 0.0
    %2517 = vmatprep.subr.mxu0 0.0
    %2518 = vmatpush1.msra.mxu0 0.0
    %2519 = vmatprep.subr.mxu0 0.0
    %2520 = vmatpush1.msra.mxu0 0.0
    %2521 = vmatprep.subr.mxu0 0.0
    %2522 = vmatpush1.msra.mxu0 0.0
    %2523 = vmatprep.subr.mxu0 0.0
    %2524 = vmatpush1.msra.mxu0 0.0
    %2525 = vmatprep.subr.mxu0 0.0
    %2526 = vmatpush1.msra.mxu0 0.0
    %2527 = vmatprep.subr.mxu0 0.0
    %2528 = vmatpush1.msra.mxu0 0.0
    %2529 = vmatprep.subr.mxu0 0.0
    %2530 = vmatpush1.msra.mxu0 0.0
    %2531 = vmatprep.subr.mxu0 0.0
    %2532 = vmatpush1.msra.mxu0 0.0
    %2533 = vmatprep.subr.mxu0 0.0
    %2534 = vmatpush1.msra.mxu0 %v587
    %2535 = vmatprep.subr.mxu0 0.0
    %2536 = vmatpush1.msra.mxu0 %v586
    %2537 = vmatprep.subr.mxu0 0.0
    %2538 = vmatpush1.msra.mxu0 %v585
    %2539 = vmatprep.subr.mxu0 0.0
    %2540 = vmatpush1.msra.mxu0 %v584
    %2541 = vmatprep.subr.mxu0 0.0
    %2542 = vmatpush2.msra.mxu0 0.0
    %2543 = vmatprep.subr.mxu0 0.0
    %2544 = vmatpush2.msra.mxu0 0.0
    %2545 = vmatprep.subr.mxu0 0.0
    %2546 = vmatpush2.msra.mxu0 0.0
    %2547 = vmatprep.subr.mxu0 0.0
    %2548 = vmatpush2.msra.mxu0 0.0
    %2549 = vmatprep.subr.mxu0 0.0
    %2550 = vmatpush2.msra.mxu0 0.0
    %2551 = vmatprep.subr.mxu0 0.0
    %2552 = vmatpush2.msra.mxu0 0.0
    %2553 = vmatprep.subr.mxu0 0.0
    %2554 = vmatpush2.msra.mxu0 0.0
    %2555 = vmatprep.subr.mxu0 0.0
    %2556 = vmatpush2.msra.mxu0 0.0
    %2557 = vmatprep.subr.mxu0 0.0
    %2558 = vmatpush2.msra.mxu0 0.0
    %2559 = vmatprep.subr.mxu0 0.0
    %2560 = vmatpush2.msra.mxu0 0.0
    %2561 = vmatprep.subr.mxu0 0.0
    %2562 = vmatpush2.msra.mxu0 0.0
    %2563 = vmatprep.subr.mxu0 0.0
    %2564 = vmatpush2.msra.mxu0 0.0
    %2565 = vmatprep.subr.mxu0 0.0
    %2566 = vmatpush2.msra.mxu0 0.0
    %2567 = vmatprep.subr.mxu0 0.0
    %2568 = vmatpush2.msra.mxu0 0.0
    %2569 = vmatprep.subr.mxu0 0.0
    %2570 = vmatpush2.msra.mxu0 0.0
    %2571 = vmatprep.subr.mxu0 0.0
    %2572 = vmatpush2.msra.mxu0 0.0
    %2573 = vmatprep.mubr.f32.mxu0 0.0
    %2574 = vmatmul.mubr.f32.gmra.mxu0 %v2504
    %v2575 = vpop.f32.mrf.mxu0
    %v2576 = vadd.f32 %v2501, %v2575
    %v2577 = vpop.f32.mrf.mxu0
    %2578 = vmatprep.mubr.f32.mxu0 0.0
    %2579 = vmatmul.mubr.f32.gmra.mxu0 %v2507
    %v2580 = vpop.f32.mrf.mxu0
    %v2581 = vadd.f32 %v2501, %v2580
    %v2582 = vpop.f32.mrf.mxu0
    %2583 = vdwg.mxu0
    %v2584 = vadd.f32 %v2576, %v1746
    %v2585 = vadd.f32 %v2581, %v1747
    %v2586 = vsel %vm605, %v2584, 0.0
    %2587 = vadd.xlane.f32.xlu0 %v2586
    %v2588 = vpop.xlane.xlu0 %2587
    %v2589 = vsel %vm605, %v2585, 0.0
    %2590 = vadd.xlane.f32.xlu0 %v2589
    %v2591 = vpop.xlane.xlu0 %2590
    %v2592 = vmul.f32 %v2588, %v1711
    %v2593 = vmul.f32 %v2591, %v1711
    %v2594 = vsub.f32 %v2584, %v2592
    %v2595 = vsub.f32 %v2585, %v2593
    %v2596 = vmul.f32 %v2594, %v2594
    %v2597 = vmul.f32 %v2595, %v2595
    %v2598 = vsel %vm605, %v2596, 0.0
    %2599 = vadd.xlane.f32.xlu0 %v2598
    %v2600 = vpop.xlane.xlu0 %2599
    %v2601 = vsel %vm605, %v2597, 0.0
    %2602 = vadd.xlane.f32.xlu0 %v2601
    %v2603 = vpop.xlane.xlu0 %2602
    %v2604 = vmul.f32 %v2600, %v1711
    %v2605 = vmul.f32 %v2603, %v1711
    %v2606 = vadd.f32 %v2604, 1e-05
    %v2607 = vadd.f32 %v2605, 1e-05
    %v2608 = vrsqrt.pop %v2606
    %v2609 = vrsqrt.pop %v2607
    %v2610 = vmul.f32 %v2594, %v2608
    %v2611 = vmul.f32 %v2595, %v2609
    %v2613 = vlaneseq
    %v2614 = vshrl.u32 %v2613, 7
    %v2615 = vsub.s32 0, %v2614
    %v2616 = vrot.slane %v589, %v2615
    %v2618 = vmul.f32 %v2610, %v2616
    %v2619 = vmul.f32 %v2611, %v2616
    %v2621 = vlaneseq
    %v2622 = vshrl.u32 %v2621, 7
    %v2623 = vsub.s32 0, %v2622
    %v2624 = vrot.slane %v590, %v2623
    %v2626 = vadd.f32 %v2618, %v2624
    %v2627 = vadd.f32 %v2619, %v2624
    %v2629 = vlaneseq
    %v2630 = vshrl.u32 %v2629, 7
    %v2631 = vsub.s32 0, %v2630
    %v2632 = vrot.slane %v595, %v2631
    %v2635 = vsel %vm605, %v2626, 0
    %v2638 = vsel %vm605, %v2627, 0
    %2640 = vmatprep.subr.mxu0 0.0
    %2641 = vmatpush1.msra.mxu0 0.0
    %2642 = vmatprep.subr.mxu0 0.0
    %2643 = vmatpush1.msra.mxu0 0.0
    %2644 = vmatprep.subr.mxu0 0.0
    %2645 = vmatpush1.msra.mxu0 0.0
    %2646 = vmatprep.subr.mxu0 0.0
    %2647 = vmatpush1.msra.mxu0 0.0
    %2648 = vmatprep.subr.mxu0 0.0
    %2649 = vmatpush1.msra.mxu0 0.0
    %2650 = vmatprep.subr.mxu0 0.0
    %2651 = vmatpush1.msra.mxu0 0.0
    %2652 = vmatprep.subr.mxu0 0.0
    %2653 = vmatpush1.msra.mxu0 0.0
    %2654 = vmatprep.subr.mxu0 0.0
    %2655 = vmatpush1.msra.mxu0 0.0
    %2656 = vmatprep.subr.mxu0 0.0
    %2657 = vmatpush1.msra.mxu0 0.0
    %2658 = vmatprep.subr.mxu0 0.0
    %2659 = vmatpush1.msra.mxu0 0.0
    %2660 = vmatprep.subr.mxu0 0.0
    %2661 = vmatpush1.msra.mxu0 0.0
    %2662 = vmatprep.subr.mxu0 0.0
    %2663 = vmatpush1.msra.mxu0 0.0
    %2664 = vmatprep.subr.mxu0 0.0
    %2665 = vmatpush1.msra.mxu0 %v594
    %2666 = vmatprep.subr.mxu0 0.0
    %2667 = vmatpush1.msra.mxu0 %v593
    %2668 = vmatprep.subr.mxu0 0.0
    %2669 = vmatpush1.msra.mxu0 %v592
    %2670 = vmatprep.subr.mxu0 0.0
    %2671 = vmatpush1.msra.mxu0 %v591
    %2672 = vmatprep.subr.mxu0 0.0
    %2673 = vmatpush2.msra.mxu0 0.0
    %2674 = vmatprep.subr.mxu0 0.0
    %2675 = vmatpush2.msra.mxu0 0.0
    %2676 = vmatprep.subr.mxu0 0.0
    %2677 = vmatpush2.msra.mxu0 0.0
    %2678 = vmatprep.subr.mxu0 0.0
    %2679 = vmatpush2.msra.mxu0 0.0
    %2680 = vmatprep.subr.mxu0 0.0
    %2681 = vmatpush2.msra.mxu0 0.0
    %2682 = vmatprep.subr.mxu0 0.0
    %2683 = vmatpush2.msra.mxu0 0.0
    %2684 = vmatprep.subr.mxu0 0.0
    %2685 = vmatpush2.msra.mxu0 0.0
    %2686 = vmatprep.subr.mxu0 0.0
    %2687 = vmatpush2.msra.mxu0 0.0
    %2688 = vmatprep.subr.mxu0 0.0
    %2689 = vmatpush2.msra.mxu0 0.0
    %2690 = vmatprep.subr.mxu0 0.0
    %2691 = vmatpush2.msra.mxu0 0.0
    %2692 = vmatprep.subr.mxu0 0.0
    %2693 = vmatpush2.msra.mxu0 0.0
    %2694 = vmatprep.subr.mxu0 0.0
    %2695 = vmatpush2.msra.mxu0 0.0
    %2696 = vmatprep.subr.mxu0 0.0
    %2697 = vmatpush2.msra.mxu0 0.0
    %2698 = vmatprep.subr.mxu0 0.0
    %2699 = vmatpush2.msra.mxu0 0.0
    %2700 = vmatprep.subr.mxu0 0.0
    %2701 = vmatpush2.msra.mxu0 0.0
    %2702 = vmatprep.subr.mxu0 0.0
    %2703 = vmatpush2.msra.mxu0 0.0
    %2704 = vmatprep.mubr.f32.mxu0 0.0
    %2705 = vmatmul.mubr.f32.gmra.mxu0 %v2635
    %v2706 = vpop.f32.mrf.mxu0
    %v2707 = vadd.f32 %v2632, %v2706
    %v2708 = vpop.f32.mrf.mxu0
    %2709 = vmatprep.mubr.f32.mxu0 0.0
    %2710 = vmatmul.mubr.f32.gmra.mxu0 %v2638
    %v2711 = vpop.f32.mrf.mxu0
    %v2712 = vadd.f32 %v2632, %v2711
    %v2713 = vpop.f32.mrf.mxu0
    %2714 = vdwg.mxu0
    %v2715 = vmax.f32 %v2707, 0.0
    %v2716 = vmax.f32 %v2712, 0.0
    %v2718 = vlaneseq
    %v2719 = vshrl.u32 %v2718, 7
    %v2720 = vsub.s32 0, %v2719
    %v2721 = vrot.slane %v604, %v2720
    %vm2723 = vcmask 523264
    %v2725 = vsel %vm2723, %v2715, 0
    %v2728 = vsel %vm2723, %v2716, 0
    %2730 = vmatprep.subr.mxu0 0.0
    %2731 = vmatpush1.msra.mxu0 0.0
    %2732 = vmatprep.subr.mxu0 0.0
    %2733 = vmatpush1.msra.mxu0 0.0
    %2734 = vmatprep.subr.mxu0 0.0
    %2735 = vmatpush1.msra.mxu0 0.0
    %2736 = vmatprep.subr.mxu0 0.0
    %2737 = vmatpush1.msra.mxu0 0.0
    %2738 = vmatprep.subr.mxu0 0.0
    %2739 = vmatpush1.msra.mxu0 0.0
    %2740 = vmatprep.subr.mxu0 0.0
    %2741 = vmatpush1.msra.mxu0 0.0
    %2742 = vmatprep.subr.mxu0 0.0
    %2743 = vmatpush1.msra.mxu0 0.0
    %2744 = vmatprep.subr.mxu0 0.0
    %2745 = vmatpush1.msra.mxu0 0.0
    %2746 = vmatprep.subr.mxu0 0.0
    %2747 = vmatpush1.msra.mxu0 %v603
    %2748 = vmatprep.subr.mxu0 0.0
    %2749 = vmatpush1.msra.mxu0 %v602
    %2750 = vmatprep.subr.mxu0 0.0
    %2751 = vmatpush1.msra.mxu0 %v601
    %2752 = vmatprep.subr.mxu0 0.0
    %2753 = vmatpush1.msra.mxu0 %v600
    %2754 = vmatprep.subr.mxu0 0.0
    %2755 = vmatpush1.msra.mxu0 %v599
    %2756 = vmatprep.subr.mxu0 0.0
    %2757 = vmatpush1.msra.mxu0 %v598
    %2758 = vmatprep.subr.mxu0 0.0
    %2759 = vmatpush1.msra.mxu0 %v597
    %2760 = vmatprep.subr.mxu0 0.0
    %2761 = vmatpush1.msra.mxu0 %v596
    %2762 = vmatprep.subr.mxu0 0.0
    %2763 = vmatpush2.msra.mxu0 0.0
    %2764 = vmatprep.subr.mxu0 0.0
    %2765 = vmatpush2.msra.mxu0 0.0
    %2766 = vmatprep.subr.mxu0 0.0
    %2767 = vmatpush2.msra.mxu0 0.0
    %2768 = vmatprep.subr.mxu0 0.0
    %2769 = vmatpush2.msra.mxu0 0.0
    %2770 = vmatprep.subr.mxu0 0.0
    %2771 = vmatpush2.msra.mxu0 0.0
    %2772 = vmatprep.subr.mxu0 0.0
    %2773 = vmatpush2.msra.mxu0 0.0
    %2774 = vmatprep.subr.mxu0 0.0
    %2775 = vmatpush2.msra.mxu0 0.0
    %2776 = vmatprep.subr.mxu0 0.0
    %2777 = vmatpush2.msra.mxu0 0.0
    %2778 = vmatprep.subr.mxu0 0.0
    %2779 = vmatpush2.msra.mxu0 0.0
    %2780 = vmatprep.subr.mxu0 0.0
    %2781 = vmatpush2.msra.mxu0 0.0
    %2782 = vmatprep.subr.mxu0 0.0
    %2783 = vmatpush2.msra.mxu0 0.0
    %2784 = vmatprep.subr.mxu0 0.0
    %2785 = vmatpush2.msra.mxu0 0.0
    %2786 = vmatprep.subr.mxu0 0.0
    %2787 = vmatpush2.msra.mxu0 0.0
    %2788 = vmatprep.subr.mxu0 0.0
    %2789 = vmatpush2.msra.mxu0 0.0
    %2790 = vmatprep.subr.mxu0 0.0
    %2791 = vmatpush2.msra.mxu0 0.0
    %2792 = vmatprep.subr.mxu0 0.0
    %2793 = vmatpush2.msra.mxu0 0.0
    %2794 = vmatprep.mubr.f32.mxu0 0.0
    %2795 = vmatmul.mubr.f32.gmra.mxu0 %v2725
    %v2796 = vpop.f32.mrf.mxu0
    %v2797 = vadd.f32 %v2721, %v2796
    %v2798 = vpop.f32.mrf.mxu0
    %2799 = vmatprep.mubr.f32.mxu0 0.0
    %2800 = vmatmul.mubr.f32.gmra.mxu0 %v2728
    %v2801 = vpop.f32.mrf.mxu0
    %v2802 = vadd.f32 %v2721, %v2801
    %v2803 = vpop.f32.mrf.mxu0
    %2804 = vdwg.mxu0
    %v2805 = vadd.f32 %v2797, %v2626
    %v2806 = vadd.f32 %v2802, %v2627
    %v2807 = vsel %vm605, %v2805, 0.0
    %2808 = vadd.xlane.f32.xlu0 %v2807
    %v2809 = vpop.xlane.xlu0 %2808
    %v2810 = vsel %vm605, %v2806, 0.0
    %2811 = vadd.xlane.f32.xlu0 %v2810
    %v2812 = vpop.xlane.xlu0 %2811
    %v2813 = vmul.f32 %v2809, %v1711
    %v2814 = vmul.f32 %v2812, %v1711
    %v2815 = vsub.f32 %v2805, %v2813
    %v2816 = vsub.f32 %v2806, %v2814
    %v2817 = vmul.f32 %v2815, %v2815
    %v2818 = vmul.f32 %v2816, %v2816
    %v2819 = vsel %vm605, %v2817, 0.0
    %2820 = vadd.xlane.f32.xlu0 %v2819
    %v2821 = vpop.xlane.xlu0 %2820
    %v2822 = vsel %vm605, %v2818, 0.0
    %2823 = vadd.xlane.f32.xlu0 %v2822
    %v2824 = vpop.xlane.xlu0 %2823
    %v2825 = vmul.f32 %v2821, %v1711
    %v2826 = vmul.f32 %v2824, %v1711
    %v2827 = vadd.f32 %v2825, 1e-05
    %v2828 = vadd.f32 %v2826, 1e-05
    %v2829 = vrsqrt.pop %v2827
    %v2830 = vrsqrt.pop %v2828
    %v2831 = vmul.f32 %v2815, %v2829
    %v2832 = vmul.f32 %v2816, %v2830
    %v2833 = vmul.f32 %v2831, %v2616
    %v2834 = vmul.f32 %v2832, %v2616
    %v2835 = vadd.f32 %v2833, %v2624
    %v2836 = vadd.f32 %v2834, %v2624
    %v2837 = vld [vmem:[%s57] sm:$0xff]
    %v2838 = vld [vmem:[%s57 + $0x8] sm:$0xff]
    %v2839 = vld [vmem:[%s57 + $0x10] sm:$0xff]
    %v2840 = vld [vmem:[%s57 + $0x18] sm:$0xff]
    %v2841 = vld [vmem:[#allocation29] sm:$0xff]
    %v2842 = vld [vmem:[#allocation29 + $0x8] sm:$0xff]
    %v2843 = vld [vmem:[#allocation29 + $0x10] sm:$0xff]
    %v2844 = vld [vmem:[#allocation29 + $0x18] sm:$0xff]
    %v2845 = vld [vmem:[#allocation31] sm:$0xff]
    %v2846 = vld [vmem:[#allocation31 + $0x8] sm:$0xff]
    %v2847 = vld [vmem:[#allocation31 + $0x10] sm:$0xff]
    %v2848 = vld [vmem:[#allocation31 + $0x18] sm:$0xff]
    %v2849 = vld [vmem:[#allocation32] sm:$0xff]
    %v2850 = vld [vmem:[#allocation32 + $0x8] sm:$0xff]
    %v2851 = vld [vmem:[#allocation32 + $0x10] sm:$0xff]
    %v2852 = vld [vmem:[#allocation32 + $0x18] sm:$0xff]
    %v2853 = vld [vmem:[%s65] sm:$0x1]
    %v2854 = vld [vmem:[%s67] sm:$0x1]
    %v2855 = vld [vmem:[%s69] sm:$0x1]
    %v2856 = vld [vmem:[#allocation34] sm:$0xff]
    %v2857 = vld [vmem:[#allocation34 + $0x8] sm:$0xff]
    %v2858 = vld [vmem:[#allocation34 + $0x10] sm:$0xff]
    %v2859 = vld [vmem:[#allocation34 + $0x18] sm:$0xff]
    %v2860 = vld [vmem:[#allocation35] sm:$0xff]
    %v2861 = vld [vmem:[#allocation35 + $0x8] sm:$0xff]
    %v2862 = vld [vmem:[#allocation35 + $0x10] sm:$0xff]
    %v2863 = vld [vmem:[#allocation35 + $0x18] sm:$0xff]
    %v2864 = vld [vmem:[#allocation37] sm:$0xff]
    %v2865 = vld [vmem:[#allocation37 + $0x8] sm:$0xff]
    %v2866 = vld [vmem:[#allocation37 + $0x10] sm:$0xff]
    %v2867 = vld [vmem:[#allocation37 + $0x18] sm:$0xff]
    %v2868 = vld [vmem:[#allocation38] sm:$0xff]
    %v2869 = vld [vmem:[#allocation38 + $0x8] sm:$0xff]
    %v2870 = vld [vmem:[#allocation38 + $0x10] sm:$0xff]
    %v2871 = vld [vmem:[#allocation38 + $0x18] sm:$0xff]
    %v2872 = vld [vmem:[%s79] sm:$0x1]
    %v2873 = vld [vmem:[%s81] sm:$0x1]
    %v2874 = vld [vmem:[%s83] sm:$0x1]
    %v2875 = vld [vmem:[#allocation40] sm:$0xff]
    %v2876 = vld [vmem:[#allocation40 + $0x8] sm:$0xff]
    %v2877 = vld [vmem:[#allocation40 + $0x10] sm:$0xff]
    %v2878 = vld [vmem:[#allocation40 + $0x18] sm:$0xff]
    %v2879 = vld [vmem:[%s87] sm:$0x1]
    %v2880 = vld [vmem:[%s89] sm:$0xff]
    %v2881 = vld [vmem:[%s89 + $0x8] sm:$0xff]
    %v2882 = vld [vmem:[%s89 + $0x10] sm:$0xff]
    %v2883 = vld [vmem:[%s89 + $0x18] sm:$0xff]
    %v2884 = vld [vmem:[%s89 + $0x20] sm:$0xff]
    %v2885 = vld [vmem:[%s89 + $0x28] sm:$0xff]
    %v2886 = vld [vmem:[%s89 + $0x30] sm:$0xff]
    %v2887 = vld [vmem:[%s89 + $0x38] sm:$0xff]
    %v2888 = vld [vmem:[%s91] sm:$0x1]
    %2889 = vmatprep.subr.mxu0 0.0
    %2890 = vmatpush1.msra.mxu0 0.0
    %2891 = vmatprep.subr.mxu0 0.0
    %2892 = vmatpush1.msra.mxu0 0.0
    %2893 = vmatprep.subr.mxu0 0.0
    %2894 = vmatpush1.msra.mxu0 0.0
    %2895 = vmatprep.subr.mxu0 0.0
    %2896 = vmatpush1.msra.mxu0 0.0
    %2897 = vmatprep.subr.mxu0 0.0
    %2898 = vmatpush1.msra.mxu0 0.0
    %2899 = vmatprep.subr.mxu0 0.0
    %2900 = vmatpush1.msra.mxu0 0.0
    %2901 = vmatprep.subr.mxu0 0.0
    %2902 = vmatpush1.msra.mxu0 0.0
    %2903 = vmatprep.subr.mxu0 0.0
    %2904 = vmatpush1.msra.mxu0 0.0
    %2905 = vmatprep.subr.mxu0 0.0
    %2906 = vmatpush1.msra.mxu0 0.0
    %2907 = vmatprep.subr.mxu0 0.0
    %2908 = vmatpush1.msra.mxu0 0.0
    %2909 = vmatprep.subr.mxu0 0.0
    %2910 = vmatpush1.msra.mxu0 0.0
    %2911 = vmatprep.subr.mxu0 0.0
    %2912 = vmatpush1.msra.mxu0 0.0
    %2913 = vmatprep.subr.mxu0 0.0
    %2914 = vmatpush1.msra.mxu0 %v2840
    %2915 = vmatprep.subr.mxu0 0.0
    %2916 = vmatpush1.msra.mxu0 %v2839
    %2917 = vmatprep.subr.mxu0 0.0
    %2918 = vmatpush1.msra.mxu0 %v2838
    %2919 = vmatprep.subr.mxu0 0.0
    %2920 = vmatpush1.msra.mxu0 %v2837
    %2921 = vmatprep.subr.mxu0 0.0
    %2922 = vmatpush2.msra.mxu0 0.0
    %2923 = vmatprep.subr.mxu0 0.0
    %2924 = vmatpush2.msra.mxu0 0.0
    %2925 = vmatprep.subr.mxu0 0.0
    %2926 = vmatpush2.msra.mxu0 0.0
    %2927 = vmatprep.subr.mxu0 0.0
    %2928 = vmatpush2.msra.mxu0 0.0
    %2929 = vmatprep.subr.mxu0 0.0
    %2930 = vmatpush2.msra.mxu0 0.0
    %2931 = vmatprep.subr.mxu0 0.0
    %2932 = vmatpush2.msra.mxu0 0.0
    %2933 = vmatprep.subr.mxu0 0.0
    %2934 = vmatpush2.msra.mxu0 0.0
    %2935 = vmatprep.subr.mxu0 0.0
    %2936 = vmatpush2.msra.mxu0 0.0
    %2937 = vmatprep.subr.mxu0 0.0
    %2938 = vmatpush2.msra.mxu0 0.0
    %2939 = vmatprep.subr.mxu0 0.0
    %2940 = vmatpush2.msra.mxu0 0.0
    %2941 = vmatprep.subr.mxu0 0.0
    %2942 = vmatpush2.msra.mxu0 0.0
    %2943 = vmatprep.subr.mxu0 0.0
    %2944 = vmatpush2.msra.mxu0 0.0
    %2945 = vmatprep.subr.mxu0 0.0
    %2946 = vmatpush2.msra.mxu0 0.0
    %2947 = vmatprep.subr.mxu0 0.0
    %2948 = vmatpush2.msra.mxu0 0.0
    %2949 = vmatprep.subr.mxu0 0.0
    %2950 = vmatpush2.msra.mxu0 0.0
    %2951 = vmatprep.subr.mxu0 0.0
    %2952 = vmatpush2.msra.mxu0 0.0
    %2953 = vmatprep.mubr.f32.mxu0 0.0
    %2954 = vmatmul.mubr.f32.gmra.mxu0 %v607
    %v2955 = vpop.f32.mrf.mxu0
    %v2956 = vadd.f32 0.0, %v2955
    %v2957 = vpop.f32.mrf.mxu0
    %2958 = vmatprep.mubr.f32.mxu0 0.0
    %2959 = vmatmul.mubr.f32.gmra.mxu0 %v610
    %v2960 = vpop.f32.mrf.mxu0
    %v2961 = vadd.f32 0.0, %v2960
    %v2962 = vpop.f32.mrf.mxu0
    %2963 = vdwg.mxu0
    %2964 = vmatprep.subr.mxu0 0.0
    %2965 = vmatpush1.msra.mxu0 0.0
    %2966 = vmatprep.subr.mxu0 0.0
    %2967 = vmatpush1.msra.mxu0 0.0
    %2968 = vmatprep.subr.mxu0 0.0
    %2969 = vmatpush1.msra.mxu0 0.0
    %2970 = vmatprep.subr.mxu0 0.0
    %2971 = vmatpush1.msra.mxu0 0.0
    %2972 = vmatprep.subr.mxu0 0.0
    %2973 = vmatpush1.msra.mxu0 0.0
    %2974 = vmatprep.subr.mxu0 0.0
    %2975 = vmatpush1.msra.mxu0 0.0
    %2976 = vmatprep.subr.mxu0 0.0
    %2977 = vmatpush1.msra.mxu0 0.0
    %2978 = vmatprep.subr.mxu0 0.0
    %2979 = vmatpush1.msra.mxu0 0.0
    %2980 = vmatprep.subr.mxu0 0.0
    %2981 = vmatpush1.msra.mxu0 0.0
    %2982 = vmatprep.subr.mxu0 0.0
    %2983 = vmatpush1.msra.mxu0 0.0
    %2984 = vmatprep.subr.mxu0 0.0
    %2985 = vmatpush1.msra.mxu0 0.0
    %2986 = vmatprep.subr.mxu0 0.0
    %2987 = vmatpush1.msra.mxu0 0.0
    %2988 = vmatprep.subr.mxu0 0.0
    %2989 = vmatpush1.msra.mxu0 %v2844
    %2990 = vmatprep.subr.mxu0 0.0
    %2991 = vmatpush1.msra.mxu0 %v2843
    %2992 = vmatprep.subr.mxu0 0.0
    %2993 = vmatpush1.msra.mxu0 %v2842
    %2994 = vmatprep.subr.mxu0 0.0
    %2995 = vmatpush1.msra.mxu0 %v2841
    %2996 = vmatprep.subr.mxu0 0.0
    %2997 = vmatpush2.msra.mxu0 0.0
    %2998 = vmatprep.subr.mxu0 0.0
    %2999 = vmatpush2.msra.mxu0 0.0
    %3000 = vmatprep.subr.mxu0 0.0
    %3001 = vmatpush2.msra.mxu0 0.0
    %3002 = vmatprep.subr.mxu0 0.0
    %3003 = vmatpush2.msra.mxu0 0.0
    %3004 = vmatprep.subr.mxu0 0.0
    %3005 = vmatpush2.msra.mxu0 0.0
    %3006 = vmatprep.subr.mxu0 0.0
    %3007 = vmatpush2.msra.mxu0 0.0
    %3008 = vmatprep.subr.mxu0 0.0
    %3009 = vmatpush2.msra.mxu0 0.0
    %3010 = vmatprep.subr.mxu0 0.0
    %3011 = vmatpush2.msra.mxu0 0.0
    %3012 = vmatprep.subr.mxu0 0.0
    %3013 = vmatpush2.msra.mxu0 0.0
    %3014 = vmatprep.subr.mxu0 0.0
    %3015 = vmatpush2.msra.mxu0 0.0
    %3016 = vmatprep.subr.mxu0 0.0
    %3017 = vmatpush2.msra.mxu0 0.0
    %3018 = vmatprep.subr.mxu0 0.0
    %3019 = vmatpush2.msra.mxu0 0.0
    %3020 = vmatprep.subr.mxu0 0.0
    %3021 = vmatpush2.msra.mxu0 0.0
    %3022 = vmatprep.subr.mxu0 0.0
    %3023 = vmatpush2.msra.mxu0 0.0
    %3024 = vmatprep.subr.mxu0 0.0
    %3025 = vmatpush2.msra.mxu0 0.0
    %3026 = vmatprep.subr.mxu0 0.0
    %3027 = vmatpush2.msra.mxu0 0.0
    %3028 = vmatprep.mubr.f32.mxu0 0.0
    %3029 = vmatmul.mubr.f32.gmra.mxu0 %v607
    %v3030 = vpop.f32.mrf.mxu0
    %v3031 = vadd.f32 0.0, %v3030
    %v3032 = vpop.f32.mrf.mxu0
    %3033 = vmatprep.mubr.f32.mxu0 0.0
    %3034 = vmatmul.mubr.f32.gmra.mxu0 %v610
    %v3035 = vpop.f32.mrf.mxu0
    %v3036 = vadd.f32 0.0, %v3035
    %v3037 = vpop.f32.mrf.mxu0
    %3038 = vdwg.mxu0
    %3039 = vmatprep.subr.mxu0 0.0
    %3040 = vmatpush1.msra.mxu0 0.0
    %3041 = vmatprep.subr.mxu0 0.0
    %3042 = vmatpush1.msra.mxu0 0.0
    %3043 = vmatprep.subr.mxu0 0.0
    %3044 = vmatpush1.msra.mxu0 0.0
    %3045 = vmatprep.subr.mxu0 0.0
    %3046 = vmatpush1.msra.mxu0 0.0
    %3047 = vmatprep.subr.mxu0 0.0
    %3048 = vmatpush1.msra.mxu0 0.0
    %3049 = vmatprep.subr.mxu0 0.0
    %3050 = vmatpush1.msra.mxu0 0.0
    %3051 = vmatprep.subr.mxu0 0.0
    %3052 = vmatpush1.msra.mxu0 0.0
    %3053 = vmatprep.subr.mxu0 0.0
    %3054 = vmatpush1.msra.mxu0 0.0
    %3055 = vmatprep.subr.mxu0 0.0
    %3056 = vmatpush1.msra.mxu0 0.0
    %3057 = vmatprep.subr.mxu0 0.0
    %3058 = vmatpush1.msra.mxu0 0.0
    %3059 = vmatprep.subr.mxu0 0.0
    %3060 = vmatpush1.msra.mxu0 0.0
    %3061 = vmatprep.subr.mxu0 0.0
    %3062 = vmatpush1.msra.mxu0 0.0
    %3063 = vmatprep.subr.mxu0 0.0
    %3064 = vmatpush1.msra.mxu0 %v2848
    %3065 = vmatprep.subr.mxu0 0.0
    %3066 = vmatpush1.msra.mxu0 %v2847
    %3067 = vmatprep.subr.mxu0 0.0
    %3068 = vmatpush1.msra.mxu0 %v2846
    %3069 = vmatprep.subr.mxu0 0.0
    %3070 = vmatpush1.msra.mxu0 %v2845
    %3071 = vmatprep.subr.mxu0 0.0
    %3072 = vmatpush2.msra.mxu0 0.0
    %3073 = vmatprep.subr.mxu0 0.0
    %3074 = vmatpush2.msra.mxu0 0.0
    %3075 = vmatprep.subr.mxu0 0.0
    %3076 = vmatpush2.msra.mxu0 0.0
    %3077 = vmatprep.subr.mxu0 0.0
    %3078 = vmatpush2.msra.mxu0 0.0
    %3079 = vmatprep.subr.mxu0 0.0
    %3080 = vmatpush2.msra.mxu0 0.0
    %3081 = vmatprep.subr.mxu0 0.0
    %3082 = vmatpush2.msra.mxu0 0.0
    %3083 = vmatprep.subr.mxu0 0.0
    %3084 = vmatpush2.msra.mxu0 0.0
    %3085 = vmatprep.subr.mxu0 0.0
    %3086 = vmatpush2.msra.mxu0 0.0
    %3087 = vmatprep.subr.mxu0 0.0
    %3088 = vmatpush2.msra.mxu0 0.0
    %3089 = vmatprep.subr.mxu0 0.0
    %3090 = vmatpush2.msra.mxu0 0.0
    %3091 = vmatprep.subr.mxu0 0.0
    %3092 = vmatpush2.msra.mxu0 0.0
    %3093 = vmatprep.subr.mxu0 0.0
    %3094 = vmatpush2.msra.mxu0 0.0
    %3095 = vmatprep.subr.mxu0 0.0
    %3096 = vmatpush2.msra.mxu0 0.0
    %3097 = vmatprep.subr.mxu0 0.0
    %3098 = vmatpush2.msra.mxu0 0.0
    %3099 = vmatprep.subr.mxu0 0.0
    %3100 = vmatpush2.msra.mxu0 0.0
    %3101 = vmatprep.subr.mxu0 0.0
    %3102 = vmatpush2.msra.mxu0 0.0
    %3103 = vmatprep.mubr.f32.mxu0 0.0
    %3104 = vmatmul.mubr.f32.gmra.mxu0 %v607
    %v3105 = vpop.f32.mrf.mxu0
    %v3106 = vadd.f32 0.0, %v3105
    %v3107 = vpop.f32.mrf.mxu0
    %3108 = vmatprep.mubr.f32.mxu0 0.0
    %3109 = vmatmul.mubr.f32.gmra.mxu0 %v610
    %v3110 = vpop.f32.mrf.mxu0
    %v3111 = vadd.f32 0.0, %v3110
    %v3112 = vpop.f32.mrf.mxu0
    %3113 = vdwg.mxu0
    %v3114 = vmul.f32 %v2956, %v505
    %v3115 = vmul.f32 %v2956, %v506
    %v3116 = vmul.f32 %v2956, %v507
    %v3117 = vmul.f32 %v2956, %v508
    %v3118 = vmul.f32 %v2956, %v509
    %v3119 = vmul.f32 %v2956, %v510
    %v3120 = vmul.f32 %v2956, %v511
    %v3121 = vmul.f32 %v2956, %v512
    %v3122 = vmul.f32 %v2961, %v505
    %v3123 = vmul.f32 %v2961, %v506
    %v3124 = vmul.f32 %v2961, %v507
    %v3125 = vmul.f32 %v2961, %v508
    %v3126 = vmul.f32 %v2961, %v509
    %v3127 = vmul.f32 %v2961, %v510
    %v3128 = vmul.f32 %v2961, %v511
    %v3129 = vmul.f32 %v2961, %v512
    %v3131 = vsel %vm605, %v3114, 0
    %v3134 = vsel %vm605, %v3115, 0
    %v3137 = vsel %vm605, %v3116, 0
    %v3140 = vsel %vm605, %v3117, 0
    %v3143 = vsel %vm605, %v3118, 0
    %v3146 = vsel %vm605, %v3119, 0
    %v3149 = vsel %vm605, %v3120, 0
    %v3152 = vsel %vm605, %v3121, 0
    %v3155 = vsel %vm605, %v3031, 0
    %3157 = vmatprep.subr.mxu0 0.0
    %3158 = vmatpush1.xpose.msra.mxu0 0.0
    %3159 = vmatprep.subr.mxu0 0.0
    %3160 = vmatpush1.xpose.msra.mxu0 0.0
    %3161 = vmatprep.subr.mxu0 0.0
    %3162 = vmatpush1.xpose.msra.mxu0 0.0
    %3163 = vmatprep.subr.mxu0 0.0
    %3164 = vmatpush1.xpose.msra.mxu0 0.0
    %3165 = vmatprep.subr.mxu0 0.0
    %3166 = vmatpush1.xpose.msra.mxu0 0.0
    %3167 = vmatprep.subr.mxu0 0.0
    %3168 = vmatpush1.xpose.msra.mxu0 0.0
    %3169 = vmatprep.subr.mxu0 0.0
    %3170 = vmatpush1.xpose.msra.mxu0 0.0
    %3171 = vmatprep.subr.mxu0 0.0
    %3172 = vmatpush1.xpose.msra.mxu0 0.0
    %3173 = vmatprep.subr.mxu0 0.0
    %3174 = vmatpush1.xpose.msra.mxu0 0.0
    %3175 = vmatprep.subr.mxu0 0.0
    %3176 = vmatpush1.xpose.msra.mxu0 0.0
    %3177 = vmatprep.subr.mxu0 0.0
    %3178 = vmatpush1.xpose.msra.mxu0 0.0
    %3179 = vmatprep.subr.mxu0 0.0
    %3180 = vmatpush1.xpose.msra.mxu0 0.0
    %3181 = vmatprep.subr.mxu0 0.0
    %3182 = vmatpush1.xpose.msra.mxu0 0.0
    %3183 = vmatprep.subr.mxu0 0.0
    %3184 = vmatpush1.xpose.msra.mxu0 0.0
    %3185 = vmatprep.subr.mxu0 0.0
    %3186 = vmatpush1.xpose.msra.mxu0 0.0
    %3187 = vmatprep.subr.mxu0 0.0
    %3188 = vmatpush1.xpose.msra.mxu0 %v3155
    %3189 = vmatprep.subr.mxu0 0.0
    %3190 = vmatpush2.xpose.msra.mxu0 0.0
    %3191 = vmatprep.subr.mxu0 0.0
    %3192 = vmatpush2.xpose.msra.mxu0 0.0
    %3193 = vmatprep.subr.mxu0 0.0
    %3194 = vmatpush2.xpose.msra.mxu0 0.0
    %3195 = vmatprep.subr.mxu0 0.0
    %3196 = vmatpush2.xpose.msra.mxu0 0.0
    %3197 = vmatprep.subr.mxu0 0.0
    %3198 = vmatpush2.xpose.msra.mxu0 0.0
    %3199 = vmatprep.subr.mxu0 0.0
    %3200 = vmatpush2.xpose.msra.mxu0 0.0
    %3201 = vmatprep.subr.mxu0 0.0
    %3202 = vmatpush2.xpose.msra.mxu0 0.0
    %3203 = vmatprep.subr.mxu0 0.0
    %3204 = vmatpush2.xpose.msra.mxu0 0.0
    %3205 = vmatprep.subr.mxu0 0.0
    %3206 = vmatpush2.xpose.msra.mxu0 0.0
    %3207 = vmatprep.subr.mxu0 0.0
    %3208 = vmatpush2.xpose.msra.mxu0 0.0
    %3209 = vmatprep.subr.mxu0 0.0
    %3210 = vmatpush2.xpose.msra.mxu0 0.0
    %3211 = vmatprep.subr.mxu0 0.0
    %3212 = vmatpush2.xpose.msra.mxu0 0.0
    %3213 = vmatprep.subr.mxu0 0.0
    %3214 = vmatpush2.xpose.msra.mxu0 0.0
    %3215 = vmatprep.subr.mxu0 0.0
    %3216 = vmatpush2.xpose.msra.mxu0 0.0
    %3217 = vmatprep.subr.mxu0 0.0
    %3218 = vmatpush2.xpose.msra.mxu0 0.0
    %3219 = vmatprep.subr.mxu0 0.0
    %3220 = vmatpush2.xpose.msra.mxu0 0.0
    %3221 = vmatprep.mubr.f32.mxu0 0.0
    %3222 = vmatmul.mubr.f32.gmra.mxu0 %v3131
    %v3223 = vpop.f32.mrf.mxu0
    %v3224 = vadd.f32 0.0, %v3223
    %v3225 = vpop.f32.mrf.mxu0
    %3226 = vmatprep.mubr.f32.mxu0 0.0
    %3227 = vmatmul.mubr.f32.gmra.mxu0 %v3134
    %v3228 = vpop.f32.mrf.mxu0
    %v3229 = vadd.f32 0.0, %v3228
    %v3230 = vpop.f32.mrf.mxu0
    %3231 = vmatprep.mubr.f32.mxu0 0.0
    %3232 = vmatmul.mubr.f32.gmra.mxu0 %v3137
    %v3233 = vpop.f32.mrf.mxu0
    %v3234 = vadd.f32 0.0, %v3233
    %v3235 = vpop.f32.mrf.mxu0
    %3236 = vmatprep.mubr.f32.mxu0 0.0
    %3237 = vmatmul.mubr.f32.gmra.mxu0 %v3140
    %v3238 = vpop.f32.mrf.mxu0
    %v3239 = vadd.f32 0.0, %v3238
    %v3240 = vpop.f32.mrf.mxu0
    %3241 = vmatprep.mubr.f32.mxu0 0.0
    %3242 = vmatmul.mubr.f32.gmra.mxu0 %v3143
    %v3243 = vpop.f32.mrf.mxu0
    %v3244 = vadd.f32 0.0, %v3243
    %v3245 = vpop.f32.mrf.mxu0
    %3246 = vmatprep.mubr.f32.mxu0 0.0
    %3247 = vmatmul.mubr.f32.gmra.mxu0 %v3146
    %v3248 = vpop.f32.mrf.mxu0
    %v3249 = vadd.f32 0.0, %v3248
    %v3250 = vpop.f32.mrf.mxu0
    %3251 = vmatprep.mubr.f32.mxu0 0.0
    %3252 = vmatmul.mubr.f32.gmra.mxu0 %v3149
    %v3253 = vpop.f32.mrf.mxu0
    %v3254 = vadd.f32 0.0, %v3253
    %v3255 = vpop.f32.mrf.mxu0
    %3256 = vmatprep.mubr.f32.mxu0 0.0
    %3257 = vmatmul.mubr.f32.gmra.mxu0 %v3152
    %v3258 = vpop.f32.mrf.mxu0
    %v3259 = vadd.f32 0.0, %v3258
    %v3260 = vpop.f32.mrf.mxu0
    %3261 = vdwg.mxu0
    %v3263 = vsel %vm605, %v3122, 0
    %v3266 = vsel %vm605, %v3123, 0
    %v3269 = vsel %vm605, %v3124, 0
    %v3272 = vsel %vm605, %v3125, 0
    %v3275 = vsel %vm605, %v3126, 0
    %v3278 = vsel %vm605, %v3127, 0
    %v3281 = vsel %vm605, %v3128, 0
    %v3284 = vsel %vm605, %v3129, 0
    %v3287 = vsel %vm605, %v3036, 0
    %3289 = vmatprep.subr.mxu0 0.0
    %3290 = vmatpush1.xpose.msra.mxu0 0.0
    %3291 = vmatprep.subr.mxu0 0.0
    %3292 = vmatpush1.xpose.msra.mxu0 0.0
    %3293 = vmatprep.subr.mxu0 0.0
    %3294 = vmatpush1.xpose.msra.mxu0 0.0
    %3295 = vmatprep.subr.mxu0 0.0
    %3296 = vmatpush1.xpose.msra.mxu0 0.0
    %3297 = vmatprep.subr.mxu0 0.0
    %3298 = vmatpush1.xpose.msra.mxu0 0.0
    %3299 = vmatprep.subr.mxu0 0.0
    %3300 = vmatpush1.xpose.msra.mxu0 0.0
    %3301 = vmatprep.subr.mxu0 0.0
    %3302 = vmatpush1.xpose.msra.mxu0 0.0
    %3303 = vmatprep.subr.mxu0 0.0
    %3304 = vmatpush1.xpose.msra.mxu0 0.0
    %3305 = vmatprep.subr.mxu0 0.0
    %3306 = vmatpush1.xpose.msra.mxu0 0.0
    %3307 = vmatprep.subr.mxu0 0.0
    %3308 = vmatpush1.xpose.msra.mxu0 0.0
    %3309 = vmatprep.subr.mxu0 0.0
    %3310 = vmatpush1.xpose.msra.mxu0 0.0
    %3311 = vmatprep.subr.mxu0 0.0
    %3312 = vmatpush1.xpose.msra.mxu0 0.0
    %3313 = vmatprep.subr.mxu0 0.0
    %3314 = vmatpush1.xpose.msra.mxu0 0.0
    %3315 = vmatprep.subr.mxu0 0.0
    %3316 = vmatpush1.xpose.msra.mxu0 0.0
    %3317 = vmatprep.subr.mxu0 0.0
    %3318 = vmatpush1.xpose.msra.mxu0 0.0
    %3319 = vmatprep.subr.mxu0 0.0
    %3320 = vmatpush1.xpose.msra.mxu0 %v3287
    %3321 = vmatprep.subr.mxu0 0.0
    %3322 = vmatpush2.xpose.msra.mxu0 0.0
    %3323 = vmatprep.subr.mxu0 0.0
    %3324 = vmatpush2.xpose.msra.mxu0 0.0
    %3325 = vmatprep.subr.mxu0 0.0
    %3326 = vmatpush2.xpose.msra.mxu0 0.0
    %3327 = vmatprep.subr.mxu0 0.0
    %3328 = vmatpush2.xpose.msra.mxu0 0.0
    %3329 = vmatprep.subr.mxu0 0.0
    %3330 = vmatpush2.xpose.msra.mxu0 0.0
    %3331 = vmatprep.subr.mxu0 0.0
    %3332 = vmatpush2.xpose.msra.mxu0 0.0
    %3333 = vmatprep.subr.mxu0 0.0
    %3334 = vmatpush2.xpose.msra.mxu0 0.0
    %3335 = vmatprep.subr.mxu0 0.0
    %3336 = vmatpush2.xpose.msra.mxu0 0.0
    %3337 = vmatprep.subr.mxu0 0.0
    %3338 = vmatpush2.xpose.msra.mxu0 0.0
    %3339 = vmatprep.subr.mxu0 0.0
    %3340 = vmatpush2.xpose.msra.mxu0 0.0
    %3341 = vmatprep.subr.mxu0 0.0
    %3342 = vmatpush2.xpose.msra.mxu0 0.0
    %3343 = vmatprep.subr.mxu0 0.0
    %3344 = vmatpush2.xpose.msra.mxu0 0.0
    %3345 = vmatprep.subr.mxu0 0.0
    %3346 = vmatpush2.xpose.msra.mxu0 0.0
    %3347 = vmatprep.subr.mxu0 0.0
    %3348 = vmatpush2.xpose.msra.mxu0 0.0
    %3349 = vmatprep.subr.mxu0 0.0
    %3350 = vmatpush2.xpose.msra.mxu0 0.0
    %3351 = vmatprep.subr.mxu0 0.0
    %3352 = vmatpush2.xpose.msra.mxu0 0.0
    %3353 = vmatprep.mubr.f32.mxu0 0.0
    %3354 = vmatmul.mubr.f32.gmra.mxu0 %v3263
    %v3355 = vpop.f32.mrf.mxu0
    %v3356 = vadd.f32 0.0, %v3355
    %v3357 = vpop.f32.mrf.mxu0
    %3358 = vmatprep.mubr.f32.mxu0 0.0
    %3359 = vmatmul.mubr.f32.gmra.mxu0 %v3266
    %v3360 = vpop.f32.mrf.mxu0
    %v3361 = vadd.f32 0.0, %v3360
    %v3362 = vpop.f32.mrf.mxu0
    %3363 = vmatprep.mubr.f32.mxu0 0.0
    %3364 = vmatmul.mubr.f32.gmra.mxu0 %v3269
    %v3365 = vpop.f32.mrf.mxu0
    %v3366 = vadd.f32 0.0, %v3365
    %v3367 = vpop.f32.mrf.mxu0
    %3368 = vmatprep.mubr.f32.mxu0 0.0
    %3369 = vmatmul.mubr.f32.gmra.mxu0 %v3272
    %v3370 = vpop.f32.mrf.mxu0
    %v3371 = vadd.f32 0.0, %v3370
    %v3372 = vpop.f32.mrf.mxu0
    %3373 = vmatprep.mubr.f32.mxu0 0.0
    %3374 = vmatmul.mubr.f32.gmra.mxu0 %v3275
    %v3375 = vpop.f32.mrf.mxu0
    %v3376 = vadd.f32 0.0, %v3375
    %v3377 = vpop.f32.mrf.mxu0
    %3378 = vmatprep.mubr.f32.mxu0 0.0
    %3379 = vmatmul.mubr.f32.gmra.mxu0 %v3278
    %v3380 = vpop.f32.mrf.mxu0
    %v3381 = vadd.f32 0.0, %v3380
    %v3382 = vpop.f32.mrf.mxu0
    %3383 = vmatprep.mubr.f32.mxu0 0.0
    %3384 = vmatmul.mubr.f32.gmra.mxu0 %v3281
    %v3385 = vpop.f32.mrf.mxu0
    %v3386 = vadd.f32 0.0, %v3385
    %v3387 = vpop.f32.mrf.mxu0
    %3388 = vmatprep.mubr.f32.mxu0 0.0
    %3389 = vmatmul.mubr.f32.gmra.mxu0 %v3284
    %v3390 = vpop.f32.mrf.mxu0
    %v3391 = vadd.f32 0.0, %v3390
    %v3392 = vpop.f32.mrf.mxu0
    %3393 = vdwg.mxu0
    %v3394 = vsel %vm1118, -1e+20, %v3224
    %v3395 = vsel %vm1118, -1e+20, %v3229
    %v3396 = vsel %vm1118, -1e+20, %v3234
    %v3397 = vsel %vm1118, -1e+20, %v3239
    %v3398 = vsel %vm1118, -1e+20, %v3244
    %v3399 = vsel %vm1118, -1e+20, %v3249
    %v3400 = vsel %vm1118, -1e+20, %v3254
    %v3401 = vsel %vm1118, -1e+20, %v3259
    %v3402 = vsel %vm1118, -1e+20, %v3356
    %v3403 = vsel %vm1118, -1e+20, %v3361
    %v3404 = vsel %vm1118, -1e+20, %v3366
    %v3405 = vsel %vm1118, -1e+20, %v3371
    %v3406 = vsel %vm1118, -1e+20, %v3376
    %v3407 = vsel %vm1118, -1e+20, %v3381
    %v3408 = vsel %vm1118, -1e+20, %v3386
    %v3409 = vsel %vm1118, -1e+20, %v3391
    %v3410 = vmul.f32 %v3394, 0.5
    %v3411 = vmul.f32 %v3395, 0.5
    %v3412 = vmul.f32 %v3396, 0.5
    %v3413 = vmul.f32 %v3397, 0.5
    %v3414 = vmul.f32 %v3398, 0.5
    %v3415 = vmul.f32 %v3399, 0.5
    %v3416 = vmul.f32 %v3400, 0.5
    %v3417 = vmul.f32 %v3401, 0.5
    %v3418 = vmul.f32 %v3402, 0.5
    %v3419 = vmul.f32 %v3403, 0.5
    %v3420 = vmul.f32 %v3404, 0.5
    %v3421 = vmul.f32 %v3405, 0.5
    %v3422 = vmul.f32 %v3406, 0.5
    %v3423 = vmul.f32 %v3407, 0.5
    %v3424 = vmul.f32 %v3408, 0.5
    %v3425 = vmul.f32 %v3409, 0.5
    %v3426 = vsel %vm1151, %v3410, -inf
    %3427 = vmax.xlane.f32.xlu0 %v3426
    %v3428 = vpop.xlane.xlu0 %3427
    %v3429 = vsel %vm1151, %v3411, -inf
    %3430 = vmax.xlane.f32.xlu0 %v3429
    %v3431 = vpop.xlane.xlu0 %3430
    %v3432 = vsel %vm1151, %v3412, -inf
    %3433 = vmax.xlane.f32.xlu0 %v3432
    %v3434 = vpop.xlane.xlu0 %3433
    %v3435 = vsel %vm1151, %v3413, -inf
    %3436 = vmax.xlane.f32.xlu0 %v3435
    %v3437 = vpop.xlane.xlu0 %3436
    %v3438 = vsel %vm1151, %v3414, -inf
    %3439 = vmax.xlane.f32.xlu0 %v3438
    %v3440 = vpop.xlane.xlu0 %3439
    %v3441 = vsel %vm1151, %v3415, -inf
    %3442 = vmax.xlane.f32.xlu0 %v3441
    %v3443 = vpop.xlane.xlu0 %3442
    %v3444 = vsel %vm1151, %v3416, -inf
    %3445 = vmax.xlane.f32.xlu0 %v3444
    %v3446 = vpop.xlane.xlu0 %3445
    %v3447 = vsel %vm1151, %v3417, -inf
    %3448 = vmax.xlane.f32.xlu0 %v3447
    %v3449 = vpop.xlane.xlu0 %3448
    %v3450 = vsel %vm1151, %v3418, -inf
    %3451 = vmax.xlane.f32.xlu0 %v3450
    %v3452 = vpop.xlane.xlu0 %3451
    %v3453 = vsel %vm1151, %v3419, -inf
    %3454 = vmax.xlane.f32.xlu0 %v3453
    %v3455 = vpop.xlane.xlu0 %3454
    %v3456 = vsel %vm1151, %v3420, -inf
    %3457 = vmax.xlane.f32.xlu0 %v3456
    %v3458 = vpop.xlane.xlu0 %3457
    %v3459 = vsel %vm1151, %v3421, -inf
    %3460 = vmax.xlane.f32.xlu0 %v3459
    %v3461 = vpop.xlane.xlu0 %3460
    %v3462 = vsel %vm1151, %v3422, -inf
    %3463 = vmax.xlane.f32.xlu0 %v3462
    %v3464 = vpop.xlane.xlu0 %3463
    %v3465 = vsel %vm1151, %v3423, -inf
    %3466 = vmax.xlane.f32.xlu0 %v3465
    %v3467 = vpop.xlane.xlu0 %3466
    %v3468 = vsel %vm1151, %v3424, -inf
    %3469 = vmax.xlane.f32.xlu0 %v3468
    %v3470 = vpop.xlane.xlu0 %3469
    %v3471 = vsel %vm1151, %v3425, -inf
    %3472 = vmax.xlane.f32.xlu0 %v3471
    %v3473 = vpop.xlane.xlu0 %3472
    %v3474 = vsub.f32 %v3410, %v3428
    %v3475 = vsub.f32 %v3411, %v3431
    %v3476 = vsub.f32 %v3412, %v3434
    %v3477 = vsub.f32 %v3413, %v3437
    %v3478 = vsub.f32 %v3414, %v3440
    %v3479 = vsub.f32 %v3415, %v3443
    %v3480 = vsub.f32 %v3416, %v3446
    %v3481 = vsub.f32 %v3417, %v3449
    %v3482 = vsub.f32 %v3418, %v3452
    %v3483 = vsub.f32 %v3419, %v3455
    %v3484 = vsub.f32 %v3420, %v3458
    %v3485 = vsub.f32 %v3421, %v3461
    %v3486 = vsub.f32 %v3422, %v3464
    %v3487 = vsub.f32 %v3423, %v3467
    %v3488 = vsub.f32 %v3424, %v3470
    %v3489 = vsub.f32 %v3425, %v3473
    %v3490 = vmul.f32 %v3474, 1.442695
    %v3491 = vpow.pop %v3490
    %v3492 = vmul.f32 %v3475, 1.442695
    %v3493 = vpow.pop %v3492
    %v3494 = vmul.f32 %v3476, 1.442695
    %v3495 = vpow.pop %v3494
    %v3496 = vmul.f32 %v3477, 1.442695
    %v3497 = vpow.pop %v3496
    %v3498 = vmul.f32 %v3478, 1.442695
    %v3499 = vpow.pop %v3498
    %v3500 = vmul.f32 %v3479, 1.442695
    %v3501 = vpow.pop %v3500
    %v3502 = vmul.f32 %v3480, 1.442695
    %v3503 = vpow.pop %v3502
    %v3504 = vmul.f32 %v3481, 1.442695
    %v3505 = vpow.pop %v3504
    %v3506 = vmul.f32 %v3482, 1.442695
    %v3507 = vpow.pop %v3506
    %v3508 = vmul.f32 %v3483, 1.442695
    %v3509 = vpow.pop %v3508
    %v3510 = vmul.f32 %v3484, 1.442695
    %v3511 = vpow.pop %v3510
    %v3512 = vmul.f32 %v3485, 1.442695
    %v3513 = vpow.pop %v3512
    %v3514 = vmul.f32 %v3486, 1.442695
    %v3515 = vpow.pop %v3514
    %v3516 = vmul.f32 %v3487, 1.442695
    %v3517 = vpow.pop %v3516
    %v3518 = vmul.f32 %v3488, 1.442695
    %v3519 = vpow.pop %v3518
    %v3520 = vmul.f32 %v3489, 1.442695
    %v3521 = vpow.pop %v3520
    %v3522 = vsel %vm1151, %v3491, 0.0
    %3523 = vadd.xlane.f32.xlu0 %v3522
    %v3524 = vpop.xlane.xlu0 %3523
    %v3525 = vsel %vm1151, %v3493, 0.0
    %3526 = vadd.xlane.f32.xlu0 %v3525
    %v3527 = vpop.xlane.xlu0 %3526
    %v3528 = vsel %vm1151, %v3495, 0.0
    %3529 = vadd.xlane.f32.xlu0 %v3528
    %v3530 = vpop.xlane.xlu0 %3529
    %v3531 = vsel %vm1151, %v3497, 0.0
    %3532 = vadd.xlane.f32.xlu0 %v3531
    %v3533 = vpop.xlane.xlu0 %3532
    %v3534 = vsel %vm1151, %v3499, 0.0
    %3535 = vadd.xlane.f32.xlu0 %v3534
    %v3536 = vpop.xlane.xlu0 %3535
    %v3537 = vsel %vm1151, %v3501, 0.0
    %3538 = vadd.xlane.f32.xlu0 %v3537
    %v3539 = vpop.xlane.xlu0 %3538
    %v3540 = vsel %vm1151, %v3503, 0.0
    %3541 = vadd.xlane.f32.xlu0 %v3540
    %v3542 = vpop.xlane.xlu0 %3541
    %v3543 = vsel %vm1151, %v3505, 0.0
    %3544 = vadd.xlane.f32.xlu0 %v3543
    %v3545 = vpop.xlane.xlu0 %3544
    %v3546 = vsel %vm1151, %v3507, 0.0
    %3547 = vadd.xlane.f32.xlu0 %v3546
    %v3548 = vpop.xlane.xlu0 %3547
    %v3549 = vsel %vm1151, %v3509, 0.0
    %3550 = vadd.xlane.f32.xlu0 %v3549
    %v3551 = vpop.xlane.xlu0 %3550
    %v3552 = vsel %vm1151, %v3511, 0.0
    %3553 = vadd.xlane.f32.xlu0 %v3552
    %v3554 = vpop.xlane.xlu0 %3553
    %v3555 = vsel %vm1151, %v3513, 0.0
    %3556 = vadd.xlane.f32.xlu0 %v3555
    %v3557 = vpop.xlane.xlu0 %3556
    %v3558 = vsel %vm1151, %v3515, 0.0
    %3559 = vadd.xlane.f32.xlu0 %v3558
    %v3560 = vpop.xlane.xlu0 %3559
    %v3561 = vsel %vm1151, %v3517, 0.0
    %3562 = vadd.xlane.f32.xlu0 %v3561
    %v3563 = vpop.xlane.xlu0 %3562
    %v3564 = vsel %vm1151, %v3519, 0.0
    %3565 = vadd.xlane.f32.xlu0 %v3564
    %v3566 = vpop.xlane.xlu0 %3565
    %v3567 = vsel %vm1151, %v3521, 0.0
    %3568 = vadd.xlane.f32.xlu0 %v3567
    %v3569 = vpop.xlane.xlu0 %3568
    %v3570 = vrcp.pop %v3524
    %v3571 = vrcp.pop %v3527
    %v3572 = vrcp.pop %v3530
    %v3573 = vrcp.pop %v3533
    %v3574 = vrcp.pop %v3536
    %v3575 = vrcp.pop %v3539
    %v3576 = vrcp.pop %v3542
    %v3577 = vrcp.pop %v3545
    %v3578 = vrcp.pop %v3548
    %v3579 = vrcp.pop %v3551
    %v3580 = vrcp.pop %v3554
    %v3581 = vrcp.pop %v3557
    %v3582 = vrcp.pop %v3560
    %v3583 = vrcp.pop %v3563
    %v3584 = vrcp.pop %v3566
    %v3585 = vrcp.pop %v3569
    %v3586 = vmul.f32 %v3491, %v3570
    %v3587 = vmul.f32 %v3493, %v3571
    %v3588 = vmul.f32 %v3495, %v3572
    %v3589 = vmul.f32 %v3497, %v3573
    %v3590 = vmul.f32 %v3499, %v3574
    %v3591 = vmul.f32 %v3501, %v3575
    %v3592 = vmul.f32 %v3503, %v3576
    %v3593 = vmul.f32 %v3505, %v3577
    %v3594 = vmul.f32 %v3507, %v3578
    %v3595 = vmul.f32 %v3509, %v3579
    %v3596 = vmul.f32 %v3511, %v3580
    %v3597 = vmul.f32 %v3513, %v3581
    %v3598 = vmul.f32 %v3515, %v3582
    %v3599 = vmul.f32 %v3517, %v3583
    %v3600 = vmul.f32 %v3519, %v3584
    %v3601 = vmul.f32 %v3521, %v3585
    %v3603 = vsel %vm1151, %v3586, 0
    %v3606 = vsel %vm1151, %v3587, 0
    %v3609 = vsel %vm1151, %v3588, 0
    %v3612 = vsel %vm1151, %v3589, 0
    %v3615 = vsel %vm1151, %v3590, 0
    %v3618 = vsel %vm1151, %v3591, 0
    %v3621 = vsel %vm1151, %v3592, 0
    %v3624 = vsel %vm1151, %v3593, 0
    %3626 = vmatprep.subr.mxu0 0.0
    %3627 = vmatpush1.msra.mxu0 0.0
    %3628 = vmatprep.subr.mxu0 0.0
    %3629 = vmatpush1.msra.mxu0 0.0
    %3630 = vmatprep.subr.mxu0 0.0
    %3631 = vmatpush1.msra.mxu0 0.0
    %3632 = vmatprep.subr.mxu0 0.0
    %3633 = vmatpush1.msra.mxu0 0.0
    %3634 = vmatprep.subr.mxu0 0.0
    %3635 = vmatpush1.msra.mxu0 0.0
    %3636 = vmatprep.subr.mxu0 0.0
    %3637 = vmatpush1.msra.mxu0 0.0
    %3638 = vmatprep.subr.mxu0 0.0
    %3639 = vmatpush1.msra.mxu0 0.0
    %3640 = vmatprep.subr.mxu0 0.0
    %3641 = vmatpush1.msra.mxu0 0.0
    %3642 = vmatprep.subr.mxu0 0.0
    %3643 = vmatpush1.msra.mxu0 0.0
    %3644 = vmatprep.subr.mxu0 0.0
    %3645 = vmatpush1.msra.mxu0 0.0
    %3646 = vmatprep.subr.mxu0 0.0
    %3647 = vmatpush1.msra.mxu0 0.0
    %3648 = vmatprep.subr.mxu0 0.0
    %3649 = vmatpush1.msra.mxu0 0.0
    %3650 = vmatprep.subr.mxu0 0.0
    %3651 = vmatpush1.msra.mxu0 0.0
    %3652 = vmatprep.subr.mxu0 0.0
    %3653 = vmatpush1.msra.mxu0 0.0
    %3654 = vmatprep.subr.mxu0 0.0
    %3655 = vmatpush1.msra.mxu0 0.0
    %3656 = vmatprep.subr.mxu0 0.0
    %3657 = vmatpush1.msra.mxu0 %v3106
    %3658 = vmatprep.subr.mxu0 0.0
    %3659 = vmatpush2.msra.mxu0 0.0
    %3660 = vmatprep.subr.mxu0 0.0
    %3661 = vmatpush2.msra.mxu0 0.0
    %3662 = vmatprep.subr.mxu0 0.0
    %3663 = vmatpush2.msra.mxu0 0.0
    %3664 = vmatprep.subr.mxu0 0.0
    %3665 = vmatpush2.msra.mxu0 0.0
    %3666 = vmatprep.subr.mxu0 0.0
    %3667 = vmatpush2.msra.mxu0 0.0
    %3668 = vmatprep.subr.mxu0 0.0
    %3669 = vmatpush2.msra.mxu0 0.0
    %3670 = vmatprep.subr.mxu0 0.0
    %3671 = vmatpush2.msra.mxu0 0.0
    %3672 = vmatprep.subr.mxu0 0.0
    %3673 = vmatpush2.msra.mxu0 0.0
    %3674 = vmatprep.subr.mxu0 0.0
    %3675 = vmatpush2.msra.mxu0 0.0
    %3676 = vmatprep.subr.mxu0 0.0
    %3677 = vmatpush2.msra.mxu0 0.0
    %3678 = vmatprep.subr.mxu0 0.0
    %3679 = vmatpush2.msra.mxu0 0.0
    %3680 = vmatprep.subr.mxu0 0.0
    %3681 = vmatpush2.msra.mxu0 0.0
    %3682 = vmatprep.subr.mxu0 0.0
    %3683 = vmatpush2.msra.mxu0 0.0
    %3684 = vmatprep.subr.mxu0 0.0
    %3685 = vmatpush2.msra.mxu0 0.0
    %3686 = vmatprep.subr.mxu0 0.0
    %3687 = vmatpush2.msra.mxu0 0.0
    %3688 = vmatprep.subr.mxu0 0.0
    %3689 = vmatpush2.msra.mxu0 0.0
    %3690 = vmatprep.mubr.f32.mxu0 0.0
    %3691 = vmatmul.mubr.f32.gmra.mxu0 %v3603
    %v3692 = vpop.f32.mrf.mxu0
    %v3693 = vadd.f32 0.0, %v3692
    %v3694 = vpop.f32.mrf.mxu0
    %3695 = vmatprep.mubr.f32.mxu0 0.0
    %3696 = vmatmul.mubr.f32.gmra.mxu0 %v3606
    %v3697 = vpop.f32.mrf.mxu0
    %v3698 = vadd.f32 0.0, %v3697
    %v3699 = vpop.f32.mrf.mxu0
    %3700 = vmatprep.mubr.f32.mxu0 0.0
    %3701 = vmatmul.mubr.f32.gmra.mxu0 %v3609
    %v3702 = vpop.f32.mrf.mxu0
    %v3703 = vadd.f32 0.0, %v3702
    %v3704 = vpop.f32.mrf.mxu0
    %3705 = vmatprep.mubr.f32.mxu0 0.0
    %3706 = vmatmul.mubr.f32.gmra.mxu0 %v3612
    %v3707 = vpop.f32.mrf.mxu0
    %v3708 = vadd.f32 0.0, %v3707
    %v3709 = vpop.f32.mrf.mxu0
    %3710 = vmatprep.mubr.f32.mxu0 0.0
    %3711 = vmatmul.mubr.f32.gmra.mxu0 %v3615
    %v3712 = vpop.f32.mrf.mxu0
    %v3713 = vadd.f32 0.0, %v3712
    %v3714 = vpop.f32.mrf.mxu0
    %3715 = vmatprep.mubr.f32.mxu0 0.0
    %3716 = vmatmul.mubr.f32.gmra.mxu0 %v3618
    %v3717 = vpop.f32.mrf.mxu0
    %v3718 = vadd.f32 0.0, %v3717
    %v3719 = vpop.f32.mrf.mxu0
    %3720 = vmatprep.mubr.f32.mxu0 0.0
    %3721 = vmatmul.mubr.f32.gmra.mxu0 %v3621
    %v3722 = vpop.f32.mrf.mxu0
    %v3723 = vadd.f32 0.0, %v3722
    %v3724 = vpop.f32.mrf.mxu0
    %3725 = vmatprep.mubr.f32.mxu0 0.0
    %3726 = vmatmul.mubr.f32.gmra.mxu0 %v3624
    %v3727 = vpop.f32.mrf.mxu0
    %v3728 = vadd.f32 0.0, %v3727
    %v3729 = vpop.f32.mrf.mxu0
    %3730 = vdwg.mxu0
    %v3732 = vsel %vm1151, %v3594, 0
    %v3735 = vsel %vm1151, %v3595, 0
    %v3738 = vsel %vm1151, %v3596, 0
    %v3741 = vsel %vm1151, %v3597, 0
    %v3744 = vsel %vm1151, %v3598, 0
    %v3747 = vsel %vm1151, %v3599, 0
    %v3750 = vsel %vm1151, %v3600, 0
    %v3753 = vsel %vm1151, %v3601, 0
    %3755 = vmatprep.subr.mxu0 0.0
    %3756 = vmatpush1.msra.mxu0 0.0
    %3757 = vmatprep.subr.mxu0 0.0
    %3758 = vmatpush1.msra.mxu0 0.0
    %3759 = vmatprep.subr.mxu0 0.0
    %3760 = vmatpush1.msra.mxu0 0.0
    %3761 = vmatprep.subr.mxu0 0.0
    %3762 = vmatpush1.msra.mxu0 0.0
    %3763 = vmatprep.subr.mxu0 0.0
    %3764 = vmatpush1.msra.mxu0 0.0
    %3765 = vmatprep.subr.mxu0 0.0
    %3766 = vmatpush1.msra.mxu0 0.0
    %3767 = vmatprep.subr.mxu0 0.0
    %3768 = vmatpush1.msra.mxu0 0.0
    %3769 = vmatprep.subr.mxu0 0.0
    %3770 = vmatpush1.msra.mxu0 0.0
    %3771 = vmatprep.subr.mxu0 0.0
    %3772 = vmatpush1.msra.mxu0 0.0
    %3773 = vmatprep.subr.mxu0 0.0
    %3774 = vmatpush1.msra.mxu0 0.0
    %3775 = vmatprep.subr.mxu0 0.0
    %3776 = vmatpush1.msra.mxu0 0.0
    %3777 = vmatprep.subr.mxu0 0.0
    %3778 = vmatpush1.msra.mxu0 0.0
    %3779 = vmatprep.subr.mxu0 0.0
    %3780 = vmatpush1.msra.mxu0 0.0
    %3781 = vmatprep.subr.mxu0 0.0
    %3782 = vmatpush1.msra.mxu0 0.0
    %3783 = vmatprep.subr.mxu0 0.0
    %3784 = vmatpush1.msra.mxu0 0.0
    %3785 = vmatprep.subr.mxu0 0.0
    %3786 = vmatpush1.msra.mxu0 %v3111
    %3787 = vmatprep.subr.mxu0 0.0
    %3788 = vmatpush2.msra.mxu0 0.0
    %3789 = vmatprep.subr.mxu0 0.0
    %3790 = vmatpush2.msra.mxu0 0.0
    %3791 = vmatprep.subr.mxu0 0.0
    %3792 = vmatpush2.msra.mxu0 0.0
    %3793 = vmatprep.subr.mxu0 0.0
    %3794 = vmatpush2.msra.mxu0 0.0
    %3795 = vmatprep.subr.mxu0 0.0
    %3796 = vmatpush2.msra.mxu0 0.0
    %3797 = vmatprep.subr.mxu0 0.0
    %3798 = vmatpush2.msra.mxu0 0.0
    %3799 = vmatprep.subr.mxu0 0.0
    %3800 = vmatpush2.msra.mxu0 0.0
    %3801 = vmatprep.subr.mxu0 0.0
    %3802 = vmatpush2.msra.mxu0 0.0
    %3803 = vmatprep.subr.mxu0 0.0
    %3804 = vmatpush2.msra.mxu0 0.0
    %3805 = vmatprep.subr.mxu0 0.0
    %3806 = vmatpush2.msra.mxu0 0.0
    %3807 = vmatprep.subr.mxu0 0.0
    %3808 = vmatpush2.msra.mxu0 0.0
    %3809 = vmatprep.subr.mxu0 0.0
    %3810 = vmatpush2.msra.mxu0 0.0
    %3811 = vmatprep.subr.mxu0 0.0
    %3812 = vmatpush2.msra.mxu0 0.0
    %3813 = vmatprep.subr.mxu0 0.0
    %3814 = vmatpush2.msra.mxu0 0.0
    %3815 = vmatprep.subr.mxu0 0.0
    %3816 = vmatpush2.msra.mxu0 0.0
    %3817 = vmatprep.subr.mxu0 0.0
    %3818 = vmatpush2.msra.mxu0 0.0
    %3819 = vmatprep.mubr.f32.mxu0 0.0
    %3820 = vmatmul.mubr.f32.gmra.mxu0 %v3732
    %v3821 = vpop.f32.mrf.mxu0
    %v3822 = vadd.f32 0.0, %v3821
    %v3823 = vpop.f32.mrf.mxu0
    %3824 = vmatprep.mubr.f32.mxu0 0.0
    %3825 = vmatmul.mubr.f32.gmra.mxu0 %v3735
    %v3826 = vpop.f32.mrf.mxu0
    %v3827 = vadd.f32 0.0, %v3826
    %v3828 = vpop.f32.mrf.mxu0
    %3829 = vmatprep.mubr.f32.mxu0 0.0
    %3830 = vmatmul.mubr.f32.gmra.mxu0 %v3738
    %v3831 = vpop.f32.mrf.mxu0
    %v3832 = vadd.f32 0.0, %v3831
    %v3833 = vpop.f32.mrf.mxu0
    %3834 = vmatprep.mubr.f32.mxu0 0.0
    %3835 = vmatmul.mubr.f32.gmra.mxu0 %v3741
    %v3836 = vpop.f32.mrf.mxu0
    %v3837 = vadd.f32 0.0, %v3836
    %v3838 = vpop.f32.mrf.mxu0
    %3839 = vmatprep.mubr.f32.mxu0 0.0
    %3840 = vmatmul.mubr.f32.gmra.mxu0 %v3744
    %v3841 = vpop.f32.mrf.mxu0
    %v3842 = vadd.f32 0.0, %v3841
    %v3843 = vpop.f32.mrf.mxu0
    %3844 = vmatprep.mubr.f32.mxu0 0.0
    %3845 = vmatmul.mubr.f32.gmra.mxu0 %v3747
    %v3846 = vpop.f32.mrf.mxu0
    %v3847 = vadd.f32 0.0, %v3846
    %v3848 = vpop.f32.mrf.mxu0
    %3849 = vmatprep.mubr.f32.mxu0 0.0
    %3850 = vmatmul.mubr.f32.gmra.mxu0 %v3750
    %v3851 = vpop.f32.mrf.mxu0
    %v3852 = vadd.f32 0.0, %v3851
    %v3853 = vpop.f32.mrf.mxu0
    %3854 = vmatprep.mubr.f32.mxu0 0.0
    %3855 = vmatmul.mubr.f32.gmra.mxu0 %v3753
    %v3856 = vpop.f32.mrf.mxu0
    %v3857 = vadd.f32 0.0, %v3856
    %v3858 = vpop.f32.mrf.mxu0
    %3859 = vdwg.mxu0
    %v3860 = vmul.f32 %v3693, %v505
    %v3861 = vmul.f32 %v3698, %v506
    %v3862 = vmul.f32 %v3703, %v507
    %v3863 = vmul.f32 %v3708, %v508
    %v3864 = vmul.f32 %v3713, %v509
    %v3865 = vmul.f32 %v3718, %v510
    %v3866 = vmul.f32 %v3723, %v511
    %v3867 = vmul.f32 %v3728, %v512
    %v3868 = vmul.f32 %v3822, %v505
    %v3869 = vmul.f32 %v3827, %v506
    %v3870 = vmul.f32 %v3832, %v507
    %v3871 = vmul.f32 %v3837, %v508
    %v3872 = vmul.f32 %v3842, %v509
    %v3873 = vmul.f32 %v3847, %v510
    %v3874 = vmul.f32 %v3852, %v511
    %v3875 = vmul.f32 %v3857, %v512
    %v3876 = vadd.f32 %v3860, %v3861
    %v3877 = vadd.f32 %v3868, %v3869
    %v3878 = vadd.f32 %v3876, %v3862
    %v3879 = vadd.f32 %v3877, %v3870
    %v3880 = vadd.f32 %v3878, %v3863
    %v3881 = vadd.f32 %v3879, %v3871
    %v3882 = vadd.f32 %v3880, %v3864
    %v3883 = vadd.f32 %v3881, %v3872
    %v3884 = vadd.f32 %v3882, %v3865
    %v3885 = vadd.f32 %v3883, %v3873
    %v3886 = vadd.f32 %v3884, %v3866
    %v3887 = vadd.f32 %v3885, %v3874
    %v3888 = vadd.f32 %v3886, %v3867
    %v3889 = vadd.f32 %v3887, %v3875
    %v3891 = vlaneseq
    %v3892 = vshrl.u32 %v3891, 7
    %v3893 = vsub.s32 0, %v3892
    %v3894 = vrot.slane %v2853, %v3893
    %v3897 = vsel %vm605, %v3888, 0
    %v3900 = vsel %vm605, %v3889, 0
    %3902 = vmatprep.subr.mxu0 0.0
    %3903 = vmatpush1.msra.mxu0 0.0
    %3904 = vmatprep.subr.mxu0 0.0
    %3905 = vmatpush1.msra.mxu0 0.0
    %3906 = vmatprep.subr.mxu0 0.0
    %3907 = vmatpush1.msra.mxu0 0.0
    %3908 = vmatprep.subr.mxu0 0.0
    %3909 = vmatpush1.msra.mxu0 0.0
    %3910 = vmatprep.subr.mxu0 0.0
    %3911 = vmatpush1.msra.mxu0 0.0
    %3912 = vmatprep.subr.mxu0 0.0
    %3913 = vmatpush1.msra.mxu0 0.0
    %3914 = vmatprep.subr.mxu0 0.0
    %3915 = vmatpush1.msra.mxu0 0.0
    %3916 = vmatprep.subr.mxu0 0.0
    %3917 = vmatpush1.msra.mxu0 0.0
    %3918 = vmatprep.subr.mxu0 0.0
    %3919 = vmatpush1.msra.mxu0 0.0
    %3920 = vmatprep.subr.mxu0 0.0
    %3921 = vmatpush1.msra.mxu0 0.0
    %3922 = vmatprep.subr.mxu0 0.0
    %3923 = vmatpush1.msra.mxu0 0.0
    %3924 = vmatprep.subr.mxu0 0.0
    %3925 = vmatpush1.msra.mxu0 0.0
    %3926 = vmatprep.subr.mxu0 0.0
    %3927 = vmatpush1.msra.mxu0 %v2852
    %3928 = vmatprep.subr.mxu0 0.0
    %3929 = vmatpush1.msra.mxu0 %v2851
    %3930 = vmatprep.subr.mxu0 0.0
    %3931 = vmatpush1.msra.mxu0 %v2850
    %3932 = vmatprep.subr.mxu0 0.0
    %3933 = vmatpush1.msra.mxu0 %v2849
    %3934 = vmatprep.subr.mxu0 0.0
    %3935 = vmatpush2.msra.mxu0 0.0
    %3936 = vmatprep.subr.mxu0 0.0
    %3937 = vmatpush2.msra.mxu0 0.0
    %3938 = vmatprep.subr.mxu0 0.0
    %3939 = vmatpush2.msra.mxu0 0.0
    %3940 = vmatprep.subr.mxu0 0.0
    %3941 = vmatpush2.msra.mxu0 0.0
    %3942 = vmatprep.subr.mxu0 0.0
    %3943 = vmatpush2.msra.mxu0 0.0
    %3944 = vmatprep.subr.mxu0 0.0
    %3945 = vmatpush2.msra.mxu0 0.0
    %3946 = vmatprep.subr.mxu0 0.0
    %3947 = vmatpush2.msra.mxu0 0.0
    %3948 = vmatprep.subr.mxu0 0.0
    %3949 = vmatpush2.msra.mxu0 0.0
    %3950 = vmatprep.subr.mxu0 0.0
    %3951 = vmatpush2.msra.mxu0 0.0
    %3952 = vmatprep.subr.mxu0 0.0
    %3953 = vmatpush2.msra.mxu0 0.0
    %3954 = vmatprep.subr.mxu0 0.0
    %3955 = vmatpush2.msra.mxu0 0.0
    %3956 = vmatprep.subr.mxu0 0.0
    %3957 = vmatpush2.msra.mxu0 0.0
    %3958 = vmatprep.subr.mxu0 0.0
    %3959 = vmatpush2.msra.mxu0 0.0
    %3960 = vmatprep.subr.mxu0 0.0
    %3961 = vmatpush2.msra.mxu0 0.0
    %3962 = vmatprep.subr.mxu0 0.0
    %3963 = vmatpush2.msra.mxu0 0.0
    %3964 = vmatprep.subr.mxu0 0.0
    %3965 = vmatpush2.msra.mxu0 0.0
    %3966 = vmatprep.mubr.f32.mxu0 0.0
    %3967 = vmatmul.mubr.f32.gmra.mxu0 %v3897
    %v3968 = vpop.f32.mrf.mxu0
    %v3969 = vadd.f32 %v3894, %v3968
    %v3970 = vpop.f32.mrf.mxu0
    %3971 = vmatprep.mubr.f32.mxu0 0.0
    %3972 = vmatmul.mubr.f32.gmra.mxu0 %v3900
    %v3973 = vpop.f32.mrf.mxu0
    %v3974 = vadd.f32 %v3894, %v3973
    %v3975 = vpop.f32.mrf.mxu0
    %3976 = vdwg.mxu0
    %v3977 = vadd.f32 %v3969, %v503
    %v3978 = vadd.f32 %v3974, %v504
    %v3979 = vsel %vm605, %v3977, 0.0
    %3980 = vadd.xlane.f32.xlu0 %v3979
    %v3981 = vpop.xlane.xlu0 %3980
    %v3982 = vsel %vm605, %v3978, 0.0
    %3983 = vadd.xlane.f32.xlu0 %v3982
    %v3984 = vpop.xlane.xlu0 %3983
    %v3985 = vmul.f32 %v3981, %v1711
    %v3986 = vmul.f32 %v3984, %v1711
    %v3987 = vsub.f32 %v3977, %v3985
    %v3988 = vsub.f32 %v3978, %v3986
    %v3989 = vmul.f32 %v3987, %v3987
    %v3990 = vmul.f32 %v3988, %v3988
    %v3991 = vsel %vm605, %v3989, 0.0
    %3992 = vadd.xlane.f32.xlu0 %v3991
    %v3993 = vpop.xlane.xlu0 %3992
    %v3994 = vsel %vm605, %v3990, 0.0
    %3995 = vadd.xlane.f32.xlu0 %v3994
    %v3996 = vpop.xlane.xlu0 %3995
    %v3997 = vmul.f32 %v3993, %v1711
    %v3998 = vmul.f32 %v3996, %v1711
    %v3999 = vadd.f32 %v3997, 1e-05
    %v4000 = vadd.f32 %v3998, 1e-05
    %v4001 = vrsqrt.pop %v3999
    %v4002 = vrsqrt.pop %v4000
    %v4003 = vmul.f32 %v3987, %v4001
    %v4004 = vmul.f32 %v3988, %v4002
    %v4006 = vlaneseq
    %v4007 = vshrl.u32 %v4006, 7
    %v4008 = vsub.s32 0, %v4007
    %v4009 = vrot.slane %v2854, %v4008
    %v4011 = vmul.f32 %v4003, %v4009
    %v4012 = vmul.f32 %v4004, %v4009
    %v4014 = vlaneseq
    %v4015 = vshrl.u32 %v4014, 7
    %v4016 = vsub.s32 0, %v4015
    %v4017 = vrot.slane %v2855, %v4016
    %v4019 = vadd.f32 %v4011, %v4017
    %v4020 = vadd.f32 %v4012, %v4017
    %v4022 = vsel %vm605, %v2835, 0
    %v4025 = vsel %vm605, %v2836, 0
    %4027 = vmatprep.subr.mxu0 0.0
    %4028 = vmatpush1.msra.mxu0 0.0
    %4029 = vmatprep.subr.mxu0 0.0
    %4030 = vmatpush1.msra.mxu0 0.0
    %4031 = vmatprep.subr.mxu0 0.0
    %4032 = vmatpush1.msra.mxu0 0.0
    %4033 = vmatprep.subr.mxu0 0.0
    %4034 = vmatpush1.msra.mxu0 0.0
    %4035 = vmatprep.subr.mxu0 0.0
    %4036 = vmatpush1.msra.mxu0 0.0
    %4037 = vmatprep.subr.mxu0 0.0
    %4038 = vmatpush1.msra.mxu0 0.0
    %4039 = vmatprep.subr.mxu0 0.0
    %4040 = vmatpush1.msra.mxu0 0.0
    %4041 = vmatprep.subr.mxu0 0.0
    %4042 = vmatpush1.msra.mxu0 0.0
    %4043 = vmatprep.subr.mxu0 0.0
    %4044 = vmatpush1.msra.mxu0 0.0
    %4045 = vmatprep.subr.mxu0 0.0
    %4046 = vmatpush1.msra.mxu0 0.0
    %4047 = vmatprep.subr.mxu0 0.0
    %4048 = vmatpush1.msra.mxu0 0.0
    %4049 = vmatprep.subr.mxu0 0.0
    %4050 = vmatpush1.msra.mxu0 0.0
    %4051 = vmatprep.subr.mxu0 0.0
    %4052 = vmatpush1.msra.mxu0 %v2859
    %4053 = vmatprep.subr.mxu0 0.0
    %4054 = vmatpush1.msra.mxu0 %v2858
    %4055 = vmatprep.subr.mxu0 0.0
    %4056 = vmatpush1.msra.mxu0 %v2857
    %4057 = vmatprep.subr.mxu0 0.0
    %4058 = vmatpush1.msra.mxu0 %v2856
    %4059 = vmatprep.subr.mxu0 0.0
    %4060 = vmatpush2.msra.mxu0 0.0
    %4061 = vmatprep.subr.mxu0 0.0
    %4062 = vmatpush2.msra.mxu0 0.0
    %4063 = vmatprep.subr.mxu0 0.0
    %4064 = vmatpush2.msra.mxu0 0.0
    %4065 = vmatprep.subr.mxu0 0.0
    %4066 = vmatpush2.msra.mxu0 0.0
    %4067 = vmatprep.subr.mxu0 0.0
    %4068 = vmatpush2.msra.mxu0 0.0
    %4069 = vmatprep.subr.mxu0 0.0
    %4070 = vmatpush2.msra.mxu0 0.0
    %4071 = vmatprep.subr.mxu0 0.0
    %4072 = vmatpush2.msra.mxu0 0.0
    %4073 = vmatprep.subr.mxu0 0.0
    %4074 = vmatpush2.msra.mxu0 0.0
    %4075 = vmatprep.subr.mxu0 0.0
    %4076 = vmatpush2.msra.mxu0 0.0
    %4077 = vmatprep.subr.mxu0 0.0
    %4078 = vmatpush2.msra.mxu0 0.0
    %4079 = vmatprep.subr.mxu0 0.0
    %4080 = vmatpush2.msra.mxu0 0.0
    %4081 = vmatprep.subr.mxu0 0.0
    %4082 = vmatpush2.msra.mxu0 0.0
    %4083 = vmatprep.subr.mxu0 0.0
    %4084 = vmatpush2.msra.mxu0 0.0
    %4085 = vmatprep.subr.mxu0 0.0
    %4086 = vmatpush2.msra.mxu0 0.0
    %4087 = vmatprep.subr.mxu0 0.0
    %4088 = vmatpush2.msra.mxu0 0.0
    %4089 = vmatprep.subr.mxu0 0.0
    %4090 = vmatpush2.msra.mxu0 0.0
    %4091 = vmatprep.mubr.f32.mxu0 0.0
    %4092 = vmatmul.mubr.f32.gmra.mxu0 %v4022
    %v4093 = vpop.f32.mrf.mxu0
    %v4094 = vadd.f32 0.0, %v4093
    %v4095 = vpop.f32.mrf.mxu0
    %4096 = vmatprep.mubr.f32.mxu0 0.0
    %4097 = vmatmul.mubr.f32.gmra.mxu0 %v4025
    %v4098 = vpop.f32.mrf.mxu0
    %v4099 = vadd.f32 0.0, %v4098
    %v4100 = vpop.f32.mrf.mxu0
    %4101 = vdwg.mxu0
    %4102 = vmatprep.subr.mxu0 0.0
    %4103 = vmatpush1.msra.mxu0 0.0
    %4104 = vmatprep.subr.mxu0 0.0
    %4105 = vmatpush1.msra.mxu0 0.0
    %4106 = vmatprep.subr.mxu0 0.0
    %4107 = vmatpush1.msra.mxu0 0.0
    %4108 = vmatprep.subr.mxu0 0.0
    %4109 = vmatpush1.msra.mxu0 0.0
    %4110 = vmatprep.subr.mxu0 0.0
    %4111 = vmatpush1.msra.mxu0 0.0
    %4112 = vmatprep.subr.mxu0 0.0
    %4113 = vmatpush1.msra.mxu0 0.0
    %4114 = vmatprep.subr.mxu0 0.0
    %4115 = vmatpush1.msra.mxu0 0.0
    %4116 = vmatprep.subr.mxu0 0.0
    %4117 = vmatpush1.msra.mxu0 0.0
    %4118 = vmatprep.subr.mxu0 0.0
    %4119 = vmatpush1.msra.mxu0 0.0
    %4120 = vmatprep.subr.mxu0 0.0
    %4121 = vmatpush1.msra.mxu0 0.0
    %4122 = vmatprep.subr.mxu0 0.0
    %4123 = vmatpush1.msra.mxu0 0.0
    %4124 = vmatprep.subr.mxu0 0.0
    %4125 = vmatpush1.msra.mxu0 0.0
    %4126 = vmatprep.subr.mxu0 0.0
    %4127 = vmatpush1.msra.mxu0 %v2863
    %4128 = vmatprep.subr.mxu0 0.0
    %4129 = vmatpush1.msra.mxu0 %v2862
    %4130 = vmatprep.subr.mxu0 0.0
    %4131 = vmatpush1.msra.mxu0 %v2861
    %4132 = vmatprep.subr.mxu0 0.0
    %4133 = vmatpush1.msra.mxu0 %v2860
    %4134 = vmatprep.subr.mxu0 0.0
    %4135 = vmatpush2.msra.mxu0 0.0
    %4136 = vmatprep.subr.mxu0 0.0
    %4137 = vmatpush2.msra.mxu0 0.0
    %4138 = vmatprep.subr.mxu0 0.0
    %4139 = vmatpush2.msra.mxu0 0.0
    %4140 = vmatprep.subr.mxu0 0.0
    %4141 = vmatpush2.msra.mxu0 0.0
    %4142 = vmatprep.subr.mxu0 0.0
    %4143 = vmatpush2.msra.mxu0 0.0
    %4144 = vmatprep.subr.mxu0 0.0
    %4145 = vmatpush2.msra.mxu0 0.0
    %4146 = vmatprep.subr.mxu0 0.0
    %4147 = vmatpush2.msra.mxu0 0.0
    %4148 = vmatprep.subr.mxu0 0.0
    %4149 = vmatpush2.msra.mxu0 0.0
    %4150 = vmatprep.subr.mxu0 0.0
    %4151 = vmatpush2.msra.mxu0 0.0
    %4152 = vmatprep.subr.mxu0 0.0
    %4153 = vmatpush2.msra.mxu0 0.0
    %4154 = vmatprep.subr.mxu0 0.0
    %4155 = vmatpush2.msra.mxu0 0.0
    %4156 = vmatprep.subr.mxu0 0.0
    %4157 = vmatpush2.msra.mxu0 0.0
    %4158 = vmatprep.subr.mxu0 0.0
    %4159 = vmatpush2.msra.mxu0 0.0
    %4160 = vmatprep.subr.mxu0 0.0
    %4161 = vmatpush2.msra.mxu0 0.0
    %4162 = vmatprep.subr.mxu0 0.0
    %4163 = vmatpush2.msra.mxu0 0.0
    %4164 = vmatprep.subr.mxu0 0.0
    %4165 = vmatpush2.msra.mxu0 0.0
    %4166 = vmatprep.mubr.f32.mxu0 0.0
    %4167 = vmatmul.mubr.f32.gmra.mxu0 %v607
    %v4168 = vpop.f32.mrf.mxu0
    %v4169 = vadd.f32 0.0, %v4168
    %v4170 = vpop.f32.mrf.mxu0
    %4171 = vmatprep.mubr.f32.mxu0 0.0
    %4172 = vmatmul.mubr.f32.gmra.mxu0 %v610
    %v4173 = vpop.f32.mrf.mxu0
    %v4174 = vadd.f32 0.0, %v4173
    %v4175 = vpop.f32.mrf.mxu0
    %4176 = vdwg.mxu0
    %v4178 = vsel %vm605, %v4019, 0
    %v4181 = vsel %vm605, %v4020, 0
    %4183 = vmatprep.subr.mxu0 0.0
    %4184 = vmatpush1.msra.mxu0 0.0
    %4185 = vmatprep.subr.mxu0 0.0
    %4186 = vmatpush1.msra.mxu0 0.0
    %4187 = vmatprep.subr.mxu0 0.0
    %4188 = vmatpush1.msra.mxu0 0.0
    %4189 = vmatprep.subr.mxu0 0.0
    %4190 = vmatpush1.msra.mxu0 0.0
    %4191 = vmatprep.subr.mxu0 0.0
    %4192 = vmatpush1.msra.mxu0 0.0
    %4193 = vmatprep.subr.mxu0 0.0
    %4194 = vmatpush1.msra.mxu0 0.0
    %4195 = vmatprep.subr.mxu0 0.0
    %4196 = vmatpush1.msra.mxu0 0.0
    %4197 = vmatprep.subr.mxu0 0.0
    %4198 = vmatpush1.msra.mxu0 0.0
    %4199 = vmatprep.subr.mxu0 0.0
    %4200 = vmatpush1.msra.mxu0 0.0
    %4201 = vmatprep.subr.mxu0 0.0
    %4202 = vmatpush1.msra.mxu0 0.0
    %4203 = vmatprep.subr.mxu0 0.0
    %4204 = vmatpush1.msra.mxu0 0.0
    %4205 = vmatprep.subr.mxu0 0.0
    %4206 = vmatpush1.msra.mxu0 0.0
    %4207 = vmatprep.subr.mxu0 0.0
    %4208 = vmatpush1.msra.mxu0 %v2867
    %4209 = vmatprep.subr.mxu0 0.0
    %4210 = vmatpush1.msra.mxu0 %v2866
    %4211 = vmatprep.subr.mxu0 0.0
    %4212 = vmatpush1.msra.mxu0 %v2865
    %4213 = vmatprep.subr.mxu0 0.0
    %4214 = vmatpush1.msra.mxu0 %v2864
    %4215 = vmatprep.subr.mxu0 0.0
    %4216 = vmatpush2.msra.mxu0 0.0
    %4217 = vmatprep.subr.mxu0 0.0
    %4218 = vmatpush2.msra.mxu0 0.0
    %4219 = vmatprep.subr.mxu0 0.0
    %4220 = vmatpush2.msra.mxu0 0.0
    %4221 = vmatprep.subr.mxu0 0.0
    %4222 = vmatpush2.msra.mxu0 0.0
    %4223 = vmatprep.subr.mxu0 0.0
    %4224 = vmatpush2.msra.mxu0 0.0
    %4225 = vmatprep.subr.mxu0 0.0
    %4226 = vmatpush2.msra.mxu0 0.0
    %4227 = vmatprep.subr.mxu0 0.0
    %4228 = vmatpush2.msra.mxu0 0.0
    %4229 = vmatprep.subr.mxu0 0.0
    %4230 = vmatpush2.msra.mxu0 0.0
    %4231 = vmatprep.subr.mxu0 0.0
    %4232 = vmatpush2.msra.mxu0 0.0
    %4233 = vmatprep.subr.mxu0 0.0
    %4234 = vmatpush2.msra.mxu0 0.0
    %4235 = vmatprep.subr.mxu0 0.0
    %4236 = vmatpush2.msra.mxu0 0.0
    %4237 = vmatprep.subr.mxu0 0.0
    %4238 = vmatpush2.msra.mxu0 0.0
    %4239 = vmatprep.subr.mxu0 0.0
    %4240 = vmatpush2.msra.mxu0 0.0
    %4241 = vmatprep.subr.mxu0 0.0
    %4242 = vmatpush2.msra.mxu0 0.0
    %4243 = vmatprep.subr.mxu0 0.0
    %4244 = vmatpush2.msra.mxu0 0.0
    %4245 = vmatprep.subr.mxu0 0.0
    %4246 = vmatpush2.msra.mxu0 0.0
    %4247 = vmatprep.mubr.f32.mxu0 0.0
    %4248 = vmatmul.mubr.f32.gmra.mxu0 %v4178
    %v4249 = vpop.f32.mrf.mxu0
    %v4250 = vadd.f32 0.0, %v4249
    %v4251 = vpop.f32.mrf.mxu0
    %4252 = vmatprep.mubr.f32.mxu0 0.0
    %4253 = vmatmul.mubr.f32.gmra.mxu0 %v4181
    %v4254 = vpop.f32.mrf.mxu0
    %v4255 = vadd.f32 0.0, %v4254
    %v4256 = vpop.f32.mrf.mxu0
    %4257 = vdwg.mxu0
    %v4258 = vmul.f32 %v4094, %v513
    %v4259 = vmul.f32 %v4094, %v514
    %v4260 = vmul.f32 %v4094, %v515
    %v4261 = vmul.f32 %v4094, %v516
    %v4262 = vmul.f32 %v4099, %v513
    %v4263 = vmul.f32 %v4099, %v514
    %v4264 = vmul.f32 %v4099, %v515
    %v4265 = vmul.f32 %v4099, %v516
    %v4267 = vsel %vm605, %v4258, 0
    %v4270 = vsel %vm605, %v4259, 0
    %v4273 = vsel %vm605, %v4260, 0
    %v4276 = vsel %vm605, %v4261, 0
    %v4279 = vsel %vm605, %v4169, 0
    %4281 = vmatprep.subr.mxu0 0.0
    %4282 = vmatpush1.xpose.msra.mxu0 0.0
    %4283 = vmatprep.subr.mxu0 0.0
    %4284 = vmatpush1.xpose.msra.mxu0 0.0
    %4285 = vmatprep.subr.mxu0 0.0
    %4286 = vmatpush1.xpose.msra.mxu0 0.0
    %4287 = vmatprep.subr.mxu0 0.0
    %4288 = vmatpush1.xpose.msra.mxu0 0.0
    %4289 = vmatprep.subr.mxu0 0.0
    %4290 = vmatpush1.xpose.msra.mxu0 0.0
    %4291 = vmatprep.subr.mxu0 0.0
    %4292 = vmatpush1.xpose.msra.mxu0 0.0
    %4293 = vmatprep.subr.mxu0 0.0
    %4294 = vmatpush1.xpose.msra.mxu0 0.0
    %4295 = vmatprep.subr.mxu0 0.0
    %4296 = vmatpush1.xpose.msra.mxu0 0.0
    %4297 = vmatprep.subr.mxu0 0.0
    %4298 = vmatpush1.xpose.msra.mxu0 0.0
    %4299 = vmatprep.subr.mxu0 0.0
    %4300 = vmatpush1.xpose.msra.mxu0 0.0
    %4301 = vmatprep.subr.mxu0 0.0
    %4302 = vmatpush1.xpose.msra.mxu0 0.0
    %4303 = vmatprep.subr.mxu0 0.0
    %4304 = vmatpush1.xpose.msra.mxu0 0.0
    %4305 = vmatprep.subr.mxu0 0.0
    %4306 = vmatpush1.xpose.msra.mxu0 0.0
    %4307 = vmatprep.subr.mxu0 0.0
    %4308 = vmatpush1.xpose.msra.mxu0 0.0
    %4309 = vmatprep.subr.mxu0 0.0
    %4310 = vmatpush1.xpose.msra.mxu0 0.0
    %4311 = vmatprep.subr.mxu0 0.0
    %4312 = vmatpush1.xpose.msra.mxu0 %v4279
    %4313 = vmatprep.subr.mxu0 0.0
    %4314 = vmatpush2.xpose.msra.mxu0 0.0
    %4315 = vmatprep.subr.mxu0 0.0
    %4316 = vmatpush2.xpose.msra.mxu0 0.0
    %4317 = vmatprep.subr.mxu0 0.0
    %4318 = vmatpush2.xpose.msra.mxu0 0.0
    %4319 = vmatprep.subr.mxu0 0.0
    %4320 = vmatpush2.xpose.msra.mxu0 0.0
    %4321 = vmatprep.subr.mxu0 0.0
    %4322 = vmatpush2.xpose.msra.mxu0 0.0
    %4323 = vmatprep.subr.mxu0 0.0
    %4324 = vmatpush2.xpose.msra.mxu0 0.0
    %4325 = vmatprep.subr.mxu0 0.0
    %4326 = vmatpush2.xpose.msra.mxu0 0.0
    %4327 = vmatprep.subr.mxu0 0.0
    %4328 = vmatpush2.xpose.msra.mxu0 0.0
    %4329 = vmatprep.subr.mxu0 0.0
    %4330 = vmatpush2.xpose.msra.mxu0 0.0
    %4331 = vmatprep.subr.mxu0 0.0
    %4332 = vmatpush2.xpose.msra.mxu0 0.0
    %4333 = vmatprep.subr.mxu0 0.0
    %4334 = vmatpush2.xpose.msra.mxu0 0.0
    %4335 = vmatprep.subr.mxu0 0.0
    %4336 = vmatpush2.xpose.msra.mxu0 0.0
    %4337 = vmatprep.subr.mxu0 0.0
    %4338 = vmatpush2.xpose.msra.mxu0 0.0
    %4339 = vmatprep.subr.mxu0 0.0
    %4340 = vmatpush2.xpose.msra.mxu0 0.0
    %4341 = vmatprep.subr.mxu0 0.0
    %4342 = vmatpush2.xpose.msra.mxu0 0.0
    %4343 = vmatprep.subr.mxu0 0.0
    %4344 = vmatpush2.xpose.msra.mxu0 0.0
    %4345 = vmatprep.mubr.f32.mxu0 0.0
    %4346 = vmatmul.mubr.f32.gmra.mxu0 %v4267
    %v4347 = vpop.f32.mrf.mxu0
    %v4348 = vadd.f32 0.0, %v4347
    %v4349 = vpop.f32.mrf.mxu0
    %4350 = vmatprep.mubr.f32.mxu0 0.0
    %4351 = vmatmul.mubr.f32.gmra.mxu0 %v4270
    %v4352 = vpop.f32.mrf.mxu0
    %v4353 = vadd.f32 0.0, %v4352
    %v4354 = vpop.f32.mrf.mxu0
    %4355 = vmatprep.mubr.f32.mxu0 0.0
    %4356 = vmatmul.mubr.f32.gmra.mxu0 %v4273
    %v4357 = vpop.f32.mrf.mxu0
    %v4358 = vadd.f32 0.0, %v4357
    %v4359 = vpop.f32.mrf.mxu0
    %4360 = vmatprep.mubr.f32.mxu0 0.0
    %4361 = vmatmul.mubr.f32.gmra.mxu0 %v4276
    %v4362 = vpop.f32.mrf.mxu0
    %v4363 = vadd.f32 0.0, %v4362
    %v4364 = vpop.f32.mrf.mxu0
    %4365 = vdwg.mxu0
    %v4367 = vsel %vm605, %v4262, 0
    %v4370 = vsel %vm605, %v4263, 0
    %v4373 = vsel %vm605, %v4264, 0
    %v4376 = vsel %vm605, %v4265, 0
    %v4379 = vsel %vm605, %v4174, 0
    %4381 = vmatprep.subr.mxu0 0.0
    %4382 = vmatpush1.xpose.msra.mxu0 0.0
    %4383 = vmatprep.subr.mxu0 0.0
    %4384 = vmatpush1.xpose.msra.mxu0 0.0
    %4385 = vmatprep.subr.mxu0 0.0
    %4386 = vmatpush1.xpose.msra.mxu0 0.0
    %4387 = vmatprep.subr.mxu0 0.0
    %4388 = vmatpush1.xpose.msra.mxu0 0.0
    %4389 = vmatprep.subr.mxu0 0.0
    %4390 = vmatpush1.xpose.msra.mxu0 0.0
    %4391 = vmatprep.subr.mxu0 0.0
    %4392 = vmatpush1.xpose.msra.mxu0 0.0
    %4393 = vmatprep.subr.mxu0 0.0
    %4394 = vmatpush1.xpose.msra.mxu0 0.0
    %4395 = vmatprep.subr.mxu0 0.0
    %4396 = vmatpush1.xpose.msra.mxu0 0.0
    %4397 = vmatprep.subr.mxu0 0.0
    %4398 = vmatpush1.xpose.msra.mxu0 0.0
    %4399 = vmatprep.subr.mxu0 0.0
    %4400 = vmatpush1.xpose.msra.mxu0 0.0
    %4401 = vmatprep.subr.mxu0 0.0
    %4402 = vmatpush1.xpose.msra.mxu0 0.0
    %4403 = vmatprep.subr.mxu0 0.0
    %4404 = vmatpush1.xpose.msra.mxu0 0.0
    %4405 = vmatprep.subr.mxu0 0.0
    %4406 = vmatpush1.xpose.msra.mxu0 0.0
    %4407 = vmatprep.subr.mxu0 0.0
    %4408 = vmatpush1.xpose.msra.mxu0 0.0
    %4409 = vmatprep.subr.mxu0 0.0
    %4410 = vmatpush1.xpose.msra.mxu0 0.0
    %4411 = vmatprep.subr.mxu0 0.0
    %4412 = vmatpush1.xpose.msra.mxu0 %v4379
    %4413 = vmatprep.subr.mxu0 0.0
    %4414 = vmatpush2.xpose.msra.mxu0 0.0
    %4415 = vmatprep.subr.mxu0 0.0
    %4416 = vmatpush2.xpose.msra.mxu0 0.0
    %4417 = vmatprep.subr.mxu0 0.0
    %4418 = vmatpush2.xpose.msra.mxu0 0.0
    %4419 = vmatprep.subr.mxu0 0.0
    %4420 = vmatpush2.xpose.msra.mxu0 0.0
    %4421 = vmatprep.subr.mxu0 0.0
    %4422 = vmatpush2.xpose.msra.mxu0 0.0
    %4423 = vmatprep.subr.mxu0 0.0
    %4424 = vmatpush2.xpose.msra.mxu0 0.0
    %4425 = vmatprep.subr.mxu0 0.0
    %4426 = vmatpush2.xpose.msra.mxu0 0.0
    %4427 = vmatprep.subr.mxu0 0.0
    %4428 = vmatpush2.xpose.msra.mxu0 0.0
    %4429 = vmatprep.subr.mxu0 0.0
    %4430 = vmatpush2.xpose.msra.mxu0 0.0
    %4431 = vmatprep.subr.mxu0 0.0
    %4432 = vmatpush2.xpose.msra.mxu0 0.0
    %4433 = vmatprep.subr.mxu0 0.0
    %4434 = vmatpush2.xpose.msra.mxu0 0.0
    %4435 = vmatprep.subr.mxu0 0.0
    %4436 = vmatpush2.xpose.msra.mxu0 0.0
    %4437 = vmatprep.subr.mxu0 0.0
    %4438 = vmatpush2.xpose.msra.mxu0 0.0
    %4439 = vmatprep.subr.mxu0 0.0
    %4440 = vmatpush2.xpose.msra.mxu0 0.0
    %4441 = vmatprep.subr.mxu0 0.0
    %4442 = vmatpush2.xpose.msra.mxu0 0.0
    %4443 = vmatprep.subr.mxu0 0.0
    %4444 = vmatpush2.xpose.msra.mxu0 0.0
    %4445 = vmatprep.mubr.f32.mxu0 0.0
    %4446 = vmatmul.mubr.f32.gmra.mxu0 %v4367
    %v4447 = vpop.f32.mrf.mxu0
    %v4448 = vadd.f32 0.0, %v4447
    %v4449 = vpop.f32.mrf.mxu0
    %4450 = vmatprep.mubr.f32.mxu0 0.0
    %4451 = vmatmul.mubr.f32.gmra.mxu0 %v4370
    %v4452 = vpop.f32.mrf.mxu0
    %v4453 = vadd.f32 0.0, %v4452
    %v4454 = vpop.f32.mrf.mxu0
    %4455 = vmatprep.mubr.f32.mxu0 0.0
    %4456 = vmatmul.mubr.f32.gmra.mxu0 %v4373
    %v4457 = vpop.f32.mrf.mxu0
    %v4458 = vadd.f32 0.0, %v4457
    %v4459 = vpop.f32.mrf.mxu0
    %4460 = vmatprep.mubr.f32.mxu0 0.0
    %4461 = vmatmul.mubr.f32.gmra.mxu0 %v4376
    %v4462 = vpop.f32.mrf.mxu0
    %v4463 = vadd.f32 0.0, %v4462
    %v4464 = vpop.f32.mrf.mxu0
    %4465 = vdwg.mxu0
    %v4466 = vmul.f32 %v4348, 0.35355338
    %v4467 = vmul.f32 %v4353, 0.35355338
    %v4468 = vmul.f32 %v4358, 0.35355338
    %v4469 = vmul.f32 %v4363, 0.35355338
    %v4470 = vmul.f32 %v4448, 0.35355338
    %v4471 = vmul.f32 %v4453, 0.35355338
    %v4472 = vmul.f32 %v4458, 0.35355338
    %v4473 = vmul.f32 %v4463, 0.35355338
    %v4474 = vsel %vm1151, %v4466, -inf
    %4475 = vmax.xlane.f32.xlu0 %v4474
    %v4476 = vpop.xlane.xlu0 %4475
    %v4477 = vsel %vm1151, %v4467, -inf
    %4478 = vmax.xlane.f32.xlu0 %v4477
    %v4479 = vpop.xlane.xlu0 %4478
    %v4480 = vsel %vm1151, %v4468, -inf
    %4481 = vmax.xlane.f32.xlu0 %v4480
    %v4482 = vpop.xlane.xlu0 %4481
    %v4483 = vsel %vm1151, %v4469, -inf
    %4484 = vmax.xlane.f32.xlu0 %v4483
    %v4485 = vpop.xlane.xlu0 %4484
    %v4486 = vsel %vm1151, %v4470, -inf
    %4487 = vmax.xlane.f32.xlu0 %v4486
    %v4488 = vpop.xlane.xlu0 %4487
    %v4489 = vsel %vm1151, %v4471, -inf
    %4490 = vmax.xlane.f32.xlu0 %v4489
    %v4491 = vpop.xlane.xlu0 %4490
    %v4492 = vsel %vm1151, %v4472, -inf
    %4493 = vmax.xlane.f32.xlu0 %v4492
    %v4494 = vpop.xlane.xlu0 %4493
    %v4495 = vsel %vm1151, %v4473, -inf
    %4496 = vmax.xlane.f32.xlu0 %v4495
    %v4497 = vpop.xlane.xlu0 %4496
    %v4498 = vsub.f32 %v4466, %v4476
    %v4499 = vsub.f32 %v4467, %v4479
    %v4500 = vsub.f32 %v4468, %v4482
    %v4501 = vsub.f32 %v4469, %v4485
    %v4502 = vsub.f32 %v4470, %v4488
    %v4503 = vsub.f32 %v4471, %v4491
    %v4504 = vsub.f32 %v4472, %v4494
    %v4505 = vsub.f32 %v4473, %v4497
    %v4506 = vmul.f32 %v4498, 1.442695
    %v4507 = vpow.pop %v4506
    %v4508 = vmul.f32 %v4499, 1.442695
    %v4509 = vpow.pop %v4508
    %v4510 = vmul.f32 %v4500, 1.442695
    %v4511 = vpow.pop %v4510
    %v4512 = vmul.f32 %v4501, 1.442695
    %v4513 = vpow.pop %v4512
    %v4514 = vmul.f32 %v4502, 1.442695
    %v4515 = vpow.pop %v4514
    %v4516 = vmul.f32 %v4503, 1.442695
    %v4517 = vpow.pop %v4516
    %v4518 = vmul.f32 %v4504, 1.442695
    %v4519 = vpow.pop %v4518
    %v4520 = vmul.f32 %v4505, 1.442695
    %v4521 = vpow.pop %v4520
    %v4522 = vsel %vm1151, %v4507, 0.0
    %4523 = vadd.xlane.f32.xlu0 %v4522
    %v4524 = vpop.xlane.xlu0 %4523
    %v4525 = vsel %vm1151, %v4509, 0.0
    %4526 = vadd.xlane.f32.xlu0 %v4525
    %v4527 = vpop.xlane.xlu0 %4526
    %v4528 = vsel %vm1151, %v4511, 0.0
    %4529 = vadd.xlane.f32.xlu0 %v4528
    %v4530 = vpop.xlane.xlu0 %4529
    %v4531 = vsel %vm1151, %v4513, 0.0
    %4532 = vadd.xlane.f32.xlu0 %v4531
    %v4533 = vpop.xlane.xlu0 %4532
    %v4534 = vsel %vm1151, %v4515, 0.0
    %4535 = vadd.xlane.f32.xlu0 %v4534
    %v4536 = vpop.xlane.xlu0 %4535
    %v4537 = vsel %vm1151, %v4517, 0.0
    %4538 = vadd.xlane.f32.xlu0 %v4537
    %v4539 = vpop.xlane.xlu0 %4538
    %v4540 = vsel %vm1151, %v4519, 0.0
    %4541 = vadd.xlane.f32.xlu0 %v4540
    %v4542 = vpop.xlane.xlu0 %4541
    %v4543 = vsel %vm1151, %v4521, 0.0
    %4544 = vadd.xlane.f32.xlu0 %v4543
    %v4545 = vpop.xlane.xlu0 %4544
    %v4546 = vrcp.pop %v4524
    %v4547 = vrcp.pop %v4527
    %v4548 = vrcp.pop %v4530
    %v4549 = vrcp.pop %v4533
    %v4550 = vrcp.pop %v4536
    %v4551 = vrcp.pop %v4539
    %v4552 = vrcp.pop %v4542
    %v4553 = vrcp.pop %v4545
    %v4554 = vmul.f32 %v4507, %v4546
    %v4555 = vmul.f32 %v4509, %v4547
    %v4556 = vmul.f32 %v4511, %v4548
    %v4557 = vmul.f32 %v4513, %v4549
    %v4558 = vmul.f32 %v4515, %v4550
    %v4559 = vmul.f32 %v4517, %v4551
    %v4560 = vmul.f32 %v4519, %v4552
    %v4561 = vmul.f32 %v4521, %v4553
    %v4563 = vsel %vm1151, %v4554, 0
    %v4566 = vsel %vm1151, %v4555, 0
    %v4569 = vsel %vm1151, %v4556, 0
    %v4572 = vsel %vm1151, %v4557, 0
    %4574 = vmatprep.subr.mxu0 0.0
    %4575 = vmatpush1.msra.mxu0 0.0
    %4576 = vmatprep.subr.mxu0 0.0
    %4577 = vmatpush1.msra.mxu0 0.0
    %4578 = vmatprep.subr.mxu0 0.0
    %4579 = vmatpush1.msra.mxu0 0.0
    %4580 = vmatprep.subr.mxu0 0.0
    %4581 = vmatpush1.msra.mxu0 0.0
    %4582 = vmatprep.subr.mxu0 0.0
    %4583 = vmatpush1.msra.mxu0 0.0
    %4584 = vmatprep.subr.mxu0 0.0
    %4585 = vmatpush1.msra.mxu0 0.0
    %4586 = vmatprep.subr.mxu0 0.0
    %4587 = vmatpush1.msra.mxu0 0.0
    %4588 = vmatprep.subr.mxu0 0.0
    %4589 = vmatpush1.msra.mxu0 0.0
    %4590 = vmatprep.subr.mxu0 0.0
    %4591 = vmatpush1.msra.mxu0 0.0
    %4592 = vmatprep.subr.mxu0 0.0
    %4593 = vmatpush1.msra.mxu0 0.0
    %4594 = vmatprep.subr.mxu0 0.0
    %4595 = vmatpush1.msra.mxu0 0.0
    %4596 = vmatprep.subr.mxu0 0.0
    %4597 = vmatpush1.msra.mxu0 0.0
    %4598 = vmatprep.subr.mxu0 0.0
    %4599 = vmatpush1.msra.mxu0 0.0
    %4600 = vmatprep.subr.mxu0 0.0
    %4601 = vmatpush1.msra.mxu0 0.0
    %4602 = vmatprep.subr.mxu0 0.0
    %4603 = vmatpush1.msra.mxu0 0.0
    %4604 = vmatprep.subr.mxu0 0.0
    %4605 = vmatpush1.msra.mxu0 %v4250
    %4606 = vmatprep.subr.mxu0 0.0
    %4607 = vmatpush2.msra.mxu0 0.0
    %4608 = vmatprep.subr.mxu0 0.0
    %4609 = vmatpush2.msra.mxu0 0.0
    %4610 = vmatprep.subr.mxu0 0.0
    %4611 = vmatpush2.msra.mxu0 0.0
    %4612 = vmatprep.subr.mxu0 0.0
    %4613 = vmatpush2.msra.mxu0 0.0
    %4614 = vmatprep.subr.mxu0 0.0
    %4615 = vmatpush2.msra.mxu0 0.0
    %4616 = vmatprep.subr.mxu0 0.0
    %4617 = vmatpush2.msra.mxu0 0.0
    %4618 = vmatprep.subr.mxu0 0.0
    %4619 = vmatpush2.msra.mxu0 0.0
    %4620 = vmatprep.subr.mxu0 0.0
    %4621 = vmatpush2.msra.mxu0 0.0
    %4622 = vmatprep.subr.mxu0 0.0
    %4623 = vmatpush2.msra.mxu0 0.0
    %4624 = vmatprep.subr.mxu0 0.0
    %4625 = vmatpush2.msra.mxu0 0.0
    %4626 = vmatprep.subr.mxu0 0.0
    %4627 = vmatpush2.msra.mxu0 0.0
    %4628 = vmatprep.subr.mxu0 0.0
    %4629 = vmatpush2.msra.mxu0 0.0
    %4630 = vmatprep.subr.mxu0 0.0
    %4631 = vmatpush2.msra.mxu0 0.0
    %4632 = vmatprep.subr.mxu0 0.0
    %4633 = vmatpush2.msra.mxu0 0.0
    %4634 = vmatprep.subr.mxu0 0.0
    %4635 = vmatpush2.msra.mxu0 0.0
    %4636 = vmatprep.subr.mxu0 0.0
    %4637 = vmatpush2.msra.mxu0 0.0
    %4638 = vmatprep.mubr.f32.mxu0 0.0
    %4639 = vmatmul.mubr.f32.gmra.mxu0 %v4563
    %v4640 = vpop.f32.mrf.mxu0
    %v4641 = vadd.f32 0.0, %v4640
    %v4642 = vpop.f32.mrf.mxu0
    %4643 = vmatprep.mubr.f32.mxu0 0.0
    %4644 = vmatmul.mubr.f32.gmra.mxu0 %v4566
    %v4645 = vpop.f32.mrf.mxu0
    %v4646 = vadd.f32 0.0, %v4645
    %v4647 = vpop.f32.mrf.mxu0
    %4648 = vmatprep.mubr.f32.mxu0 0.0
    %4649 = vmatmul.mubr.f32.gmra.mxu0 %v4569
    %v4650 = vpop.f32.mrf.mxu0
    %v4651 = vadd.f32 0.0, %v4650
    %v4652 = vpop.f32.mrf.mxu0
    %4653 = vmatprep.mubr.f32.mxu0 0.0
    %4654 = vmatmul.mubr.f32.gmra.mxu0 %v4572
    %v4655 = vpop.f32.mrf.mxu0
    %v4656 = vadd.f32 0.0, %v4655
    %v4657 = vpop.f32.mrf.mxu0
    %4658 = vdwg.mxu0
    %v4660 = vsel %vm1151, %v4558, 0
    %v4663 = vsel %vm1151, %v4559, 0
    %v4666 = vsel %vm1151, %v4560, 0
    %v4669 = vsel %vm1151, %v4561, 0
    %4671 = vmatprep.subr.mxu0 0.0
    %4672 = vmatpush1.msra.mxu0 0.0
    %4673 = vmatprep.subr.mxu0 0.0
    %4674 = vmatpush1.msra.mxu0 0.0
    %4675 = vmatprep.subr.mxu0 0.0
    %4676 = vmatpush1.msra.mxu0 0.0
    %4677 = vmatprep.subr.mxu0 0.0
    %4678 = vmatpush1.msra.mxu0 0.0
    %4679 = vmatprep.subr.mxu0 0.0
    %4680 = vmatpush1.msra.mxu0 0.0
    %4681 = vmatprep.subr.mxu0 0.0
    %4682 = vmatpush1.msra.mxu0 0.0
    %4683 = vmatprep.subr.mxu0 0.0
    %4684 = vmatpush1.msra.mxu0 0.0
    %4685 = vmatprep.subr.mxu0 0.0
    %4686 = vmatpush1.msra.mxu0 0.0
    %4687 = vmatprep.subr.mxu0 0.0
    %4688 = vmatpush1.msra.mxu0 0.0
    %4689 = vmatprep.subr.mxu0 0.0
    %4690 = vmatpush1.msra.mxu0 0.0
    %4691 = vmatprep.subr.mxu0 0.0
    %4692 = vmatpush1.msra.mxu0 0.0
    %4693 = vmatprep.subr.mxu0 0.0
    %4694 = vmatpush1.msra.mxu0 0.0
    %4695 = vmatprep.subr.mxu0 0.0
    %4696 = vmatpush1.msra.mxu0 0.0
    %4697 = vmatprep.subr.mxu0 0.0
    %4698 = vmatpush1.msra.mxu0 0.0
    %4699 = vmatprep.subr.mxu0 0.0
    %4700 = vmatpush1.msra.mxu0 0.0
    %4701 = vmatprep.subr.mxu0 0.0
    %4702 = vmatpush1.msra.mxu0 %v4255
    %4703 = vmatprep.subr.mxu0 0.0
    %4704 = vmatpush2.msra.mxu0 0.0
    %4705 = vmatprep.subr.mxu0 0.0
    %4706 = vmatpush2.msra.mxu0 0.0
    %4707 = vmatprep.subr.mxu0 0.0
    %4708 = vmatpush2.msra.mxu0 0.0
    %4709 = vmatprep.subr.mxu0 0.0
    %4710 = vmatpush2.msra.mxu0 0.0
    %4711 = vmatprep.subr.mxu0 0.0
    %4712 = vmatpush2.msra.mxu0 0.0
    %4713 = vmatprep.subr.mxu0 0.0
    %4714 = vmatpush2.msra.mxu0 0.0
    %4715 = vmatprep.subr.mxu0 0.0
    %4716 = vmatpush2.msra.mxu0 0.0
    %4717 = vmatprep.subr.mxu0 0.0
    %4718 = vmatpush2.msra.mxu0 0.0
    %4719 = vmatprep.subr.mxu0 0.0
    %4720 = vmatpush2.msra.mxu0 0.0
    %4721 = vmatprep.subr.mxu0 0.0
    %4722 = vmatpush2.msra.mxu0 0.0
    %4723 = vmatprep.subr.mxu0 0.0
    %4724 = vmatpush2.msra.mxu0 0.0
    %4725 = vmatprep.subr.mxu0 0.0
    %4726 = vmatpush2.msra.mxu0 0.0
    %4727 = vmatprep.subr.mxu0 0.0
    %4728 = vmatpush2.msra.mxu0 0.0
    %4729 = vmatprep.subr.mxu0 0.0
    %4730 = vmatpush2.msra.mxu0 0.0
    %4731 = vmatprep.subr.mxu0 0.0
    %4732 = vmatpush2.msra.mxu0 0.0
    %4733 = vmatprep.subr.mxu0 0.0
    %4734 = vmatpush2.msra.mxu0 0.0
    %4735 = vmatprep.mubr.f32.mxu0 0.0
    %4736 = vmatmul.mubr.f32.gmra.mxu0 %v4660
    %v4737 = vpop.f32.mrf.mxu0
    %v4738 = vadd.f32 0.0, %v4737
    %v4739 = vpop.f32.mrf.mxu0
    %4740 = vmatprep.mubr.f32.mxu0 0.0
    %4741 = vmatmul.mubr.f32.gmra.mxu0 %v4663
    %v4742 = vpop.f32.mrf.mxu0
    %v4743 = vadd.f32 0.0, %v4742
    %v4744 = vpop.f32.mrf.mxu0
    %4745 = vmatprep.mubr.f32.mxu0 0.0
    %4746 = vmatmul.mubr.f32.gmra.mxu0 %v4666
    %v4747 = vpop.f32.mrf.mxu0
    %v4748 = vadd.f32 0.0, %v4747
    %v4749 = vpop.f32.mrf.mxu0
    %4750 = vmatprep.mubr.f32.mxu0 0.0
    %4751 = vmatmul.mubr.f32.gmra.mxu0 %v4669
    %v4752 = vpop.f32.mrf.mxu0
    %v4753 = vadd.f32 0.0, %v4752
    %v4754 = vpop.f32.mrf.mxu0
    %4755 = vdwg.mxu0
    %v4756 = vmul.f32 %v4641, %v513
    %v4757 = vmul.f32 %v4646, %v514
    %v4758 = vmul.f32 %v4651, %v515
    %v4759 = vmul.f32 %v4656, %v516
    %v4760 = vmul.f32 %v4738, %v513
    %v4761 = vmul.f32 %v4743, %v514
    %v4762 = vmul.f32 %v4748, %v515
    %v4763 = vmul.f32 %v4753, %v516
    %v4764 = vadd.f32 %v4756, %v4757
    %v4765 = vadd.f32 %v4760, %v4761
    %v4766 = vadd.f32 %v4764, %v4758
    %v4767 = vadd.f32 %v4765, %v4762
    %v4768 = vadd.f32 %v4766, %v4759
    %v4769 = vadd.f32 %v4767, %v4763
    %v4771 = vlaneseq
    %v4772 = vshrl.u32 %v4771, 7
    %v4773 = vsub.s32 0, %v4772
    %v4774 = vrot.slane %v2872, %v4773
    %v4777 = vsel %vm605, %v4768, 0
    %v4780 = vsel %vm605, %v4769, 0
    %4782 = vmatprep.subr.mxu0 0.0
    %4783 = vmatpush1.msra.mxu0 0.0
    %4784 = vmatprep.subr.mxu0 0.0
    %4785 = vmatpush1.msra.mxu0 0.0
    %4786 = vmatprep.subr.mxu0 0.0
    %4787 = vmatpush1.msra.mxu0 0.0
    %4788 = vmatprep.subr.mxu0 0.0
    %4789 = vmatpush1.msra.mxu0 0.0
    %4790 = vmatprep.subr.mxu0 0.0
    %4791 = vmatpush1.msra.mxu0 0.0
    %4792 = vmatprep.subr.mxu0 0.0
    %4793 = vmatpush1.msra.mxu0 0.0
    %4794 = vmatprep.subr.mxu0 0.0
    %4795 = vmatpush1.msra.mxu0 0.0
    %4796 = vmatprep.subr.mxu0 0.0
    %4797 = vmatpush1.msra.mxu0 0.0
    %4798 = vmatprep.subr.mxu0 0.0
    %4799 = vmatpush1.msra.mxu0 0.0
    %4800 = vmatprep.subr.mxu0 0.0
    %4801 = vmatpush1.msra.mxu0 0.0
    %4802 = vmatprep.subr.mxu0 0.0
    %4803 = vmatpush1.msra.mxu0 0.0
    %4804 = vmatprep.subr.mxu0 0.0
    %4805 = vmatpush1.msra.mxu0 0.0
    %4806 = vmatprep.subr.mxu0 0.0
    %4807 = vmatpush1.msra.mxu0 %v2871
    %4808 = vmatprep.subr.mxu0 0.0
    %4809 = vmatpush1.msra.mxu0 %v2870
    %4810 = vmatprep.subr.mxu0 0.0
    %4811 = vmatpush1.msra.mxu0 %v2869
    %4812 = vmatprep.subr.mxu0 0.0
    %4813 = vmatpush1.msra.mxu0 %v2868
    %4814 = vmatprep.subr.mxu0 0.0
    %4815 = vmatpush2.msra.mxu0 0.0
    %4816 = vmatprep.subr.mxu0 0.0
    %4817 = vmatpush2.msra.mxu0 0.0
    %4818 = vmatprep.subr.mxu0 0.0
    %4819 = vmatpush2.msra.mxu0 0.0
    %4820 = vmatprep.subr.mxu0 0.0
    %4821 = vmatpush2.msra.mxu0 0.0
    %4822 = vmatprep.subr.mxu0 0.0
    %4823 = vmatpush2.msra.mxu0 0.0
    %4824 = vmatprep.subr.mxu0 0.0
    %4825 = vmatpush2.msra.mxu0 0.0
    %4826 = vmatprep.subr.mxu0 0.0
    %4827 = vmatpush2.msra.mxu0 0.0
    %4828 = vmatprep.subr.mxu0 0.0
    %4829 = vmatpush2.msra.mxu0 0.0
    %4830 = vmatprep.subr.mxu0 0.0
    %4831 = vmatpush2.msra.mxu0 0.0
    %4832 = vmatprep.subr.mxu0 0.0
    %4833 = vmatpush2.msra.mxu0 0.0
    %4834 = vmatprep.subr.mxu0 0.0
    %4835 = vmatpush2.msra.mxu0 0.0
    %4836 = vmatprep.subr.mxu0 0.0
    %4837 = vmatpush2.msra.mxu0 0.0
    %4838 = vmatprep.subr.mxu0 0.0
    %4839 = vmatpush2.msra.mxu0 0.0
    %4840 = vmatprep.subr.mxu0 0.0
    %4841 = vmatpush2.msra.mxu0 0.0
    %4842 = vmatprep.subr.mxu0 0.0
    %4843 = vmatpush2.msra.mxu0 0.0
    %4844 = vmatprep.subr.mxu0 0.0
    %4845 = vmatpush2.msra.mxu0 0.0
    %4846 = vmatprep.mubr.f32.mxu0 0.0
    %4847 = vmatmul.mubr.f32.gmra.mxu0 %v4777
    %v4848 = vpop.f32.mrf.mxu0
    %v4849 = vadd.f32 %v4774, %v4848
    %v4850 = vpop.f32.mrf.mxu0
    %4851 = vmatprep.mubr.f32.mxu0 0.0
    %4852 = vmatmul.mubr.f32.gmra.mxu0 %v4780
    %v4853 = vpop.f32.mrf.mxu0
    %v4854 = vadd.f32 %v4774, %v4853
    %v4855 = vpop.f32.mrf.mxu0
    %4856 = vdwg.mxu0
    %v4857 = vadd.f32 %v4849, %v4019
    %v4858 = vadd.f32 %v4854, %v4020
    %v4859 = vsel %vm605, %v4857, 0.0
    %4860 = vadd.xlane.f32.xlu0 %v4859
    %v4861 = vpop.xlane.xlu0 %4860
    %v4862 = vsel %vm605, %v4858, 0.0
    %4863 = vadd.xlane.f32.xlu0 %v4862
    %v4864 = vpop.xlane.xlu0 %4863
    %v4865 = vmul.f32 %v4861, %v1711
    %v4866 = vmul.f32 %v4864, %v1711
    %v4867 = vsub.f32 %v4857, %v4865
    %v4868 = vsub.f32 %v4858, %v4866
    %v4869 = vmul.f32 %v4867, %v4867
    %v4870 = vmul.f32 %v4868, %v4868
    %v4871 = vsel %vm605, %v4869, 0.0
    %4872 = vadd.xlane.f32.xlu0 %v4871
    %v4873 = vpop.xlane.xlu0 %4872
    %v4874 = vsel %vm605, %v4870, 0.0
    %4875 = vadd.xlane.f32.xlu0 %v4874
    %v4876 = vpop.xlane.xlu0 %4875
    %v4877 = vmul.f32 %v4873, %v1711
    %v4878 = vmul.f32 %v4876, %v1711
    %v4879 = vadd.f32 %v4877, 1e-05
    %v4880 = vadd.f32 %v4878, 1e-05
    %v4881 = vrsqrt.pop %v4879
    %v4882 = vrsqrt.pop %v4880
    %v4883 = vmul.f32 %v4867, %v4881
    %v4884 = vmul.f32 %v4868, %v4882
    %v4886 = vlaneseq
    %v4887 = vshrl.u32 %v4886, 7
    %v4888 = vsub.s32 0, %v4887
    %v4889 = vrot.slane %v2873, %v4888
    %v4891 = vmul.f32 %v4883, %v4889
    %v4892 = vmul.f32 %v4884, %v4889
    %v4894 = vlaneseq
    %v4895 = vshrl.u32 %v4894, 7
    %v4896 = vsub.s32 0, %v4895
    %v4897 = vrot.slane %v2874, %v4896
    %v4899 = vadd.f32 %v4891, %v4897
    %v4900 = vadd.f32 %v4892, %v4897
    %v4902 = vlaneseq
    %v4903 = vshrl.u32 %v4902, 7
    %v4904 = vsub.s32 0, %v4903
    %v4905 = vrot.slane %v2879, %v4904
    %v4908 = vsel %vm605, %v4899, 0
    %v4911 = vsel %vm605, %v4900, 0
    %4913 = vmatprep.subr.mxu0 0.0
    %4914 = vmatpush1.msra.mxu0 0.0
    %4915 = vmatprep.subr.mxu0 0.0
    %4916 = vmatpush1.msra.mxu0 0.0
    %4917 = vmatprep.subr.mxu0 0.0
    %4918 = vmatpush1.msra.mxu0 0.0
    %4919 = vmatprep.subr.mxu0 0.0
    %4920 = vmatpush1.msra.mxu0 0.0
    %4921 = vmatprep.subr.mxu0 0.0
    %4922 = vmatpush1.msra.mxu0 0.0
    %4923 = vmatprep.subr.mxu0 0.0
    %4924 = vmatpush1.msra.mxu0 0.0
    %4925 = vmatprep.subr.mxu0 0.0
    %4926 = vmatpush1.msra.mxu0 0.0
    %4927 = vmatprep.subr.mxu0 0.0
    %4928 = vmatpush1.msra.mxu0 0.0
    %4929 = vmatprep.subr.mxu0 0.0
    %4930 = vmatpush1.msra.mxu0 0.0
    %4931 = vmatprep.subr.mxu0 0.0
    %4932 = vmatpush1.msra.mxu0 0.0
    %4933 = vmatprep.subr.mxu0 0.0
    %4934 = vmatpush1.msra.mxu0 0.0
    %4935 = vmatprep.subr.mxu0 0.0
    %4936 = vmatpush1.msra.mxu0 0.0
    %4937 = vmatprep.subr.mxu0 0.0
    %4938 = vmatpush1.msra.mxu0 %v2878
    %4939 = vmatprep.subr.mxu0 0.0
    %4940 = vmatpush1.msra.mxu0 %v2877
    %4941 = vmatprep.subr.mxu0 0.0
    %4942 = vmatpush1.msra.mxu0 %v2876
    %4943 = vmatprep.subr.mxu0 0.0
    %4944 = vmatpush1.msra.mxu0 %v2875
    %4945 = vmatprep.subr.mxu0 0.0
    %4946 = vmatpush2.msra.mxu0 0.0
    %4947 = vmatprep.subr.mxu0 0.0
    %4948 = vmatpush2.msra.mxu0 0.0
    %4949 = vmatprep.subr.mxu0 0.0
    %4950 = vmatpush2.msra.mxu0 0.0
    %4951 = vmatprep.subr.mxu0 0.0
    %4952 = vmatpush2.msra.mxu0 0.0
    %4953 = vmatprep.subr.mxu0 0.0
    %4954 = vmatpush2.msra.mxu0 0.0
    %4955 = vmatprep.subr.mxu0 0.0
    %4956 = vmatpush2.msra.mxu0 0.0
    %4957 = vmatprep.subr.mxu0 0.0
    %4958 = vmatpush2.msra.mxu0 0.0
    %4959 = vmatprep.subr.mxu0 0.0
    %4960 = vmatpush2.msra.mxu0 0.0
    %4961 = vmatprep.subr.mxu0 0.0
    %4962 = vmatpush2.msra.mxu0 0.0
    %4963 = vmatprep.subr.mxu0 0.0
    %4964 = vmatpush2.msra.mxu0 0.0
    %4965 = vmatprep.subr.mxu0 0.0
    %4966 = vmatpush2.msra.mxu0 0.0
    %4967 = vmatprep.subr.mxu0 0.0
    %4968 = vmatpush2.msra.mxu0 0.0
    %4969 = vmatprep.subr.mxu0 0.0
    %4970 = vmatpush2.msra.mxu0 0.0
    %4971 = vmatprep.subr.mxu0 0.0
    %4972 = vmatpush2.msra.mxu0 0.0
    %4973 = vmatprep.subr.mxu0 0.0
    %4974 = vmatpush2.msra.mxu0 0.0
    %4975 = vmatprep.subr.mxu0 0.0
    %4976 = vmatpush2.msra.mxu0 0.0
    %4977 = vmatprep.mubr.f32.mxu0 0.0
    %4978 = vmatmul.mubr.f32.gmra.mxu0 %v4908
    %v4979 = vpop.f32.mrf.mxu0
    %v4980 = vadd.f32 %v4905, %v4979
    %v4981 = vpop.f32.mrf.mxu0
    %4982 = vmatprep.mubr.f32.mxu0 0.0
    %4983 = vmatmul.mubr.f32.gmra.mxu0 %v4911
    %v4984 = vpop.f32.mrf.mxu0
    %v4985 = vadd.f32 %v4905, %v4984
    %v4986 = vpop.f32.mrf.mxu0
    %4987 = vdwg.mxu0
    %v4988 = vmax.f32 %v4980, 0.0
    %v4989 = vmax.f32 %v4985, 0.0
    %v4991 = vlaneseq
    %v4992 = vshrl.u32 %v4991, 7
    %v4993 = vsub.s32 0, %v4992
    %v4994 = vrot.slane %v2888, %v4993
    %v4997 = vsel %vm2723, %v4988, 0
    %v5000 = vsel %vm2723, %v4989, 0
    %5002 = vmatprep.subr.mxu0 0.0
    %5003 = vmatpush1.msra.mxu0 0.0
    %5004 = vmatprep.subr.mxu0 0.0
    %5005 = vmatpush1.msra.mxu0 0.0
    %5006 = vmatprep.subr.mxu0 0.0
    %5007 = vmatpush1.msra.mxu0 0.0
    %5008 = vmatprep.subr.mxu0 0.0
    %5009 = vmatpush1.msra.mxu0 0.0
    %5010 = vmatprep.subr.mxu0 0.0
    %5011 = vmatpush1.msra.mxu0 0.0
    %5012 = vmatprep.subr.mxu0 0.0
    %5013 = vmatpush1.msra.mxu0 0.0
    %5014 = vmatprep.subr.mxu0 0.0
    %5015 = vmatpush1.msra.mxu0 0.0
    %5016 = vmatprep.subr.mxu0 0.0
    %5017 = vmatpush1.msra.mxu0 0.0
    %5018 = vmatprep.subr.mxu0 0.0
    %5019 = vmatpush1.msra.mxu0 %v2887
    %5020 = vmatprep.subr.mxu0 0.0
    %5021 = vmatpush1.msra.mxu0 %v2886
    %5022 = vmatprep.subr.mxu0 0.0
    %5023 = vmatpush1.msra.mxu0 %v2885
    %5024 = vmatprep.subr.mxu0 0.0
    %5025 = vmatpush1.msra.mxu0 %v2884
    %5026 = vmatprep.subr.mxu0 0.0
    %5027 = vmatpush1.msra.mxu0 %v2883
    %5028 = vmatprep.subr.mxu0 0.0
    %5029 = vmatpush1.msra.mxu0 %v2882
    %5030 = vmatprep.subr.mxu0 0.0
    %5031 = vmatpush1.msra.mxu0 %v2881
    %5032 = vmatprep.subr.mxu0 0.0
    %5033 = vmatpush1.msra.mxu0 %v2880
    %5034 = vmatprep.subr.mxu0 0.0
    %5035 = vmatpush2.msra.mxu0 0.0
    %5036 = vmatprep.subr.mxu0 0.0
    %5037 = vmatpush2.msra.mxu0 0.0
    %5038 = vmatprep.subr.mxu0 0.0
    %5039 = vmatpush2.msra.mxu0 0.0
    %5040 = vmatprep.subr.mxu0 0.0
    %5041 = vmatpush2.msra.mxu0 0.0
    %5042 = vmatprep.subr.mxu0 0.0
    %5043 = vmatpush2.msra.mxu0 0.0
    %5044 = vmatprep.subr.mxu0 0.0
    %5045 = vmatpush2.msra.mxu0 0.0
    %5046 = vmatprep.subr.mxu0 0.0
    %5047 = vmatpush2.msra.mxu0 0.0
    %5048 = vmatprep.subr.mxu0 0.0
    %5049 = vmatpush2.msra.mxu0 0.0
    %5050 = vmatprep.subr.mxu0 0.0
    %5051 = vmatpush2.msra.mxu0 0.0
    %5052 = vmatprep.subr.mxu0 0.0
    %5053 = vmatpush2.msra.mxu0 0.0
    %5054 = vmatprep.subr.mxu0 0.0
    %5055 = vmatpush2.msra.mxu0 0.0
    %5056 = vmatprep.subr.mxu0 0.0
    %5057 = vmatpush2.msra.mxu0 0.0
    %5058 = vmatprep.subr.mxu0 0.0
    %5059 = vmatpush2.msra.mxu0 0.0
    %5060 = vmatprep.subr.mxu0 0.0
    %5061 = vmatpush2.msra.mxu0 0.0
    %5062 = vmatprep.subr.mxu0 0.0
    %5063 = vmatpush2.msra.mxu0 0.0
    %5064 = vmatprep.subr.mxu0 0.0
    %5065 = vmatpush2.msra.mxu0 0.0
    %5066 = vmatprep.mubr.f32.mxu0 0.0
    %5067 = vmatmul.mubr.f32.gmra.mxu0 %v4997
    %v5068 = vpop.f32.mrf.mxu0
    %v5069 = vadd.f32 %v4994, %v5068
    %v5070 = vpop.f32.mrf.mxu0
    %5071 = vmatprep.mubr.f32.mxu0 0.0
    %5072 = vmatmul.mubr.f32.gmra.mxu0 %v5000
    %v5073 = vpop.f32.mrf.mxu0
    %v5074 = vadd.f32 %v4994, %v5073
    %v5075 = vpop.f32.mrf.mxu0
    %5076 = vdwg.mxu0
    %v5077 = vadd.f32 %v5069, %v4899
    %v5078 = vadd.f32 %v5074, %v4900
    %v5079 = vsel %vm605, %v5077, 0.0
    %5080 = vadd.xlane.f32.xlu0 %v5079
    %v5081 = vpop.xlane.xlu0 %5080
    %v5082 = vsel %vm605, %v5078, 0.0
    %5083 = vadd.xlane.f32.xlu0 %v5082
    %v5084 = vpop.xlane.xlu0 %5083
    %v5085 = vmul.f32 %v5081, %v1711
    %v5086 = vmul.f32 %v5084, %v1711
    %v5087 = vsub.f32 %v5077, %v5085
    %v5088 = vsub.f32 %v5078, %v5086
    %v5089 = vmul.f32 %v5087, %v5087
    %v5090 = vmul.f32 %v5088, %v5088
    %v5091 = vsel %vm605, %v5089, 0.0
    %5092 = vadd.xlane.f32.xlu0 %v5091
    %v5093 = vpop.xlane.xlu0 %5092
    %v5094 = vsel %vm605, %v5090, 0.0
    %5095 = vadd.xlane.f32.xlu0 %v5094
    %v5096 = vpop.xlane.xlu0 %5095
    %v5097 = vmul.f32 %v5093, %v1711
    %v5098 = vmul.f32 %v5096, %v1711
    %v5099 = vadd.f32 %v5097, 1e-05
    %v5100 = vadd.f32 %v5098, 1e-05
    %v5101 = vrsqrt.pop %v5099
    %v5102 = vrsqrt.pop %v5100
    %v5103 = vmul.f32 %v5087, %v5101
    %v5104 = vmul.f32 %v5088, %v5102
    %v5105 = vmul.f32 %v5103, %v4889
    %v5106 = vmul.f32 %v5104, %v4889
    %v5107 = vadd.f32 %v5105, %v4897
    %v5108 = vadd.f32 %v5106, %v4897
    %v5109 = vld [vmem:[%s13] sm:$0xff]
    %v5110 = vld [vmem:[%s13 + $0x8] sm:$0xff]
    %v5111 = vld [vmem:[%s13 + $0x10] sm:$0xff]
    %v5112 = vld [vmem:[%s13 + $0x18] sm:$0xff]
    %v5113 = vld [vmem:[#allocation11] sm:$0x1]
    %v5115 = vlaneseq
    %v5116 = vshrl.u32 %v5115, 7
    %v5117 = vsub.s32 0, %v5116
    %v5118 = vrot.slane %v5113, %v5117
    %v5121 = vsel %vm605, %v5107, 0
    %v5124 = vsel %vm605, %v5108, 0
    %5126 = vmatprep.subr.mxu0 0.0
    %5127 = vmatpush1.msra.mxu0 0.0
    %5128 = vmatprep.subr.mxu0 0.0
    %5129 = vmatpush1.msra.mxu0 0.0
    %5130 = vmatprep.subr.mxu0 0.0
    %5131 = vmatpush1.msra.mxu0 0.0
    %5132 = vmatprep.subr.mxu0 0.0
    %5133 = vmatpush1.msra.mxu0 0.0
    %5134 = vmatprep.subr.mxu0 0.0
    %5135 = vmatpush1.msra.mxu0 0.0
    %5136 = vmatprep.subr.mxu0 0.0
    %5137 = vmatpush1.msra.mxu0 0.0
    %5138 = vmatprep.subr.mxu0 0.0
    %5139 = vmatpush1.msra.mxu0 0.0
    %5140 = vmatprep.subr.mxu0 0.0
    %5141 = vmatpush1.msra.mxu0 0.0
    %5142 = vmatprep.subr.mxu0 0.0
    %5143 = vmatpush1.msra.mxu0 0.0
    %5144 = vmatprep.subr.mxu0 0.0
    %5145 = vmatpush1.msra.mxu0 0.0
    %5146 = vmatprep.subr.mxu0 0.0
    %5147 = vmatpush1.msra.mxu0 0.0
    %5148 = vmatprep.subr.mxu0 0.0
    %5149 = vmatpush1.msra.mxu0 0.0
    %5150 = vmatprep.subr.mxu0 0.0
    %5151 = vmatpush1.msra.mxu0 %v5112
    %5152 = vmatprep.subr.mxu0 0.0
    %5153 = vmatpush1.msra.mxu0 %v5111
    %5154 = vmatprep.subr.mxu0 0.0
    %5155 = vmatpush1.msra.mxu0 %v5110
    %5156 = vmatprep.subr.mxu0 0.0
    %5157 = vmatpush1.msra.mxu0 %v5109
    %5158 = vmatprep.subr.mxu0 0.0
    %5159 = vmatpush2.msra.mxu0 0.0
    %5160 = vmatprep.subr.mxu0 0.0
    %5161 = vmatpush2.msra.mxu0 0.0
    %5162 = vmatprep.subr.mxu0 0.0
    %5163 = vmatpush2.msra.mxu0 0.0
    %5164 = vmatprep.subr.mxu0 0.0
    %5165 = vmatpush2.msra.mxu0 0.0
    %5166 = vmatprep.subr.mxu0 0.0
    %5167 = vmatpush2.msra.mxu0 0.0
    %5168 = vmatprep.subr.mxu0 0.0
    %5169 = vmatpush2.msra.mxu0 0.0
    %5170 = vmatprep.subr.mxu0 0.0
    %5171 = vmatpush2.msra.mxu0 0.0
    %5172 = vmatprep.subr.mxu0 0.0
    %5173 = vmatpush2.msra.mxu0 0.0
    %5174 = vmatprep.subr.mxu0 0.0
    %5175 = vmatpush2.msra.mxu0 0.0
    %5176 = vmatprep.subr.mxu0 0.0
    %5177 = vmatpush2.msra.mxu0 0.0
    %5178 = vmatprep.subr.mxu0 0.0
    %5179 = vmatpush2.msra.mxu0 0.0
    %5180 = vmatprep.subr.mxu0 0.0
    %5181 = vmatpush2.msra.mxu0 0.0
    %5182 = vmatprep.subr.mxu0 0.0
    %5183 = vmatpush2.msra.mxu0 0.0
    %5184 = vmatprep.subr.mxu0 0.0
    %5185 = vmatpush2.msra.mxu0 0.0
    %5186 = vmatprep.subr.mxu0 0.0
    %5187 = vmatpush2.msra.mxu0 0.0
    %5188 = vmatprep.subr.mxu0 0.0
    %5189 = vmatpush2.msra.mxu0 0.0
    %5190 = vmatprep.mubr.f32.mxu0 0.0
    %5191 = vmatmul.mubr.f32.gmra.mxu0 %v5121
    %v5192 = vpop.f32.mrf.mxu0
    %v5193 = vadd.f32 %v5118, %v5192
    %v5194 = vpop.f32.mrf.mxu0
    %5195 = vmatprep.mubr.f32.mxu0 0.0
    %5196 = vmatmul.mubr.f32.gmra.mxu0 %v5124
    %v5197 = vpop.f32.mrf.mxu0
    %v5198 = vadd.f32 %v5118, %v5197
    %v5199 = vpop.f32.mrf.mxu0
    %5200 = vdwg.mxu0
    %v5201 = vmax.f32 %v5193, %v5198
    %v5202 = vsub.f32 %v5193, %v5201
    %v5203 = vsub.f32 %v5198, %v5201
    %v5204 = vmul.f32 %v5202, 1.442695
    %v5205 = vpow.pop %v5204
    %v5206 = vmul.f32 %v5203, 1.442695
    %v5207 = vpow.pop %v5206
    %v5208 = vadd.f32 %v5205, %v5207
    %v5209 = vrcp.pop %v5208
    %v5210 = vmul.f32 %v5205, %v5209
    %v5211 = vmul.f32 %v5207, %v5209
    %5212 = vst [vmem:[#allocation41] sm:$0xff] %v5210
    %5213 = vst [vmem:[#allocation41 + $0x8] sm:$0xff] %v5211
    // Predicated region
    $region286: #{tpu_custom_call.1} parent=1 // pred_check
      _
    $region287: #{tpu_custom_call.1} parent=1 // pred_check_branch
      %5215 = sbr.rel (0) target = $region289
    $region288: #{tpu_custom_call.1} parent=1 // pred_region
      %s5217 = ssub.s32 256, 256
      %5218 = vsyncadd [#allocation4], %s5217
      %s5219 = sshll.u32 [#allocation41], 4
      %s5220 = int_to_ptr.vmem [resolvable:$true] %s5219
      %5225 = dma.vmem_to_hbm [thread:$0]  %s5220, 256, %s93, [#allocation4], 128, 128, 8
    $region289: #{tpu_custom_call.1} parent=1 // pred_fallthru
      _
    // Predicated region
    $region290: #{tpu_custom_call.1} parent=1 // pred_check
      _
    $region291: #{tpu_custom_call.1} parent=1 // pred_check_branch
      %5227 = sbr.rel (0) target = $region293
    $region292: #{tpu_custom_call.1} parent=1 // pred_region
      %5228 = dma.done [#allocation4], 256
    $region293: #{tpu_custom_call.1} parent=1 // pred_fallthru
      _
    %5229 = vsyncpa [#allocation3], 1
    %5230 = vsyncpa [#allocation6], 1
    %5231 = vsyncpa [#allocation9], 1
    %5232 = vsyncpa [#allocation12], 1
    %5233 = vsyncpa [#allocation15], 1
    %5234 = vsyncpa [#allocation18], 1
    %5235 = vsyncpa [#allocation21], 1
    %5236 = vsyncpa [#allocation24], 1
    %5237 = vsyncpa [#allocation27], 1
    %5238 = vsyncpa [#allocation30], 1
    %5239 = vsyncpa [#allocation33], 1
    %5240 = vsyncpa [#allocation36], 1
    %5241 = vsyncpa [#allocation39], 1
    %5242 = vsyncpa [#allocation4], 1

</llo_original>
